<compile_context>
chip_gen: v7x
topology: tpu7x:2x2x1
jax: 0.10.0
libtpu: 0.0.40
codegen_flags: <defaults>
</compile_context>

<pallas_src>
import functools

import jax
import jax.numpy as jnp
from jax.experimental import pallas as pl
from jax.experimental.pallas import tpu as pltpu

KSIZE = 7
PAD = (KSIZE - 1) // 2  # 3
BN_EPS = 1e-5


def _spatial_gate_kernel(x_ref, wm_ref, bias_ref, o_ref, fpad_ref, *, W, base):
    # x_ref:    (nb, C, H*W)  VMEM, lane-dense
    # wm_ref:   (49, 2, H*W)  VMEM, BN-folded tap weight * border-validity mask
    # bias_ref: (1,)          SMEM, BN-folded bias
    # o_ref:    (nb, C, H*W)
    # fpad_ref: (2, nb, base + H*W + base) VMEM scratch (flat pooled planes)
    nb, C, HW = x_ref.shape

    x = x_ref[...].astype(jnp.float32)                       # (nb, C, HW)

    # ---- ChannelPool: max / mean over C, lane-dense (nb, HW) tiles ----
    mx = jnp.max(x, axis=1)                                  # (nb, HW)
    mn = jnp.mean(x, axis=1)                                 # (nb, HW)

    # Zero the scratch so the lane slack on each side never injects NaN/Inf
    # (its contributions are masked to 0 by wm anyway).  Buffer is tiny.
    fpad_ref[...] = jnp.zeros(fpad_ref.shape, jnp.float32)
    fpad_ref[0, :, base:base + HW] = mx
    fpad_ref[1, :, base:base + HW] = mn

    # ---- 7x7 conv (2 -> 1 ch) as 49 flat-shifted, masked multiply-adds ----
    # A (dr, dc) shift of the HxW image is a flat shift of dr*W + dc; taps that
    # would read outside the image (incl. row wrap-around) are zeroed by the
    # mask pre-folded into wm, which reproduces zero-padding exactly.
    acc = jnp.zeros((2, nb, HW), jnp.float32)
    for kh in range(KSIZE):
        for kw in range(KSIZE):
            t = kh * KSIZE + kw
            s = (kh - PAD) * W + (kw - PAD)
            src = fpad_ref[:, :, base + s: base + s + HW]    # (2, nb, HW)
            acc = acc + wm_ref[t][:, None, :] * src

    conv = acc[0] + acc[1] + bias_ref[0]                     # (nb, HW), BN folded

    # ---- sigmoid gate, broadcast over channels; re-read x at the store ----
    scale = jax.nn.sigmoid(conv)                             # (nb, HW)
    o_ref[...] = (x_ref[...] * scale[:, None, :]).astype(o_ref.dtype)


def spatial_gate(x, conv_w, bn_params, *, block_n=None):
    """x: (N, C, H, W); conv_w: (1, 2, 7, 7); bn_params: [gamma, beta, mean, var]."""
    N, C, H, W = x.shape
    HW = H * W
    nb = N if block_n is None else block_n
    assert N % nb == 0, "batch block must divide N"

    # ---- Fold BatchNorm (eval, affine) into the conv taps and one bias ----
    gamma = bn_params[0].astype(jnp.float32)
    beta = bn_params[1].astype(jnp.float32)
    r_mean = bn_params[2].astype(jnp.float32)
    r_var = bn_params[3].astype(jnp.float32)
    bn_scale = gamma * jax.lax.rsqrt(r_var + BN_EPS)
    w_eff = conv_w.reshape(2, KSIZE * KSIZE).astype(jnp.float32) * bn_scale  # (2,49)
    bias_eff = (beta - r_mean * bn_scale).reshape(1)

    # ---- Per-tap border-validity masks over flat H*W positions ----
    rows = jnp.arange(HW, dtype=jnp.int32) // W
    cols = jnp.arange(HW, dtype=jnp.int32) % W
    dr = jnp.arange(KSIZE, dtype=jnp.int32) - PAD
    dc = jnp.arange(KSIZE, dtype=jnp.int32) - PAD
    valid = ((rows[None, None, :] + dr[:, None, None] >= 0) &
             (rows[None, None, :] + dr[:, None, None] < H) &
             (cols[None, None, :] + dc[None, :, None] >= 0) &
             (cols[None, None, :] + dc[None, :, None] < W))
    valid = valid.reshape(KSIZE * KSIZE, HW).astype(jnp.float32)          # (49, HW)
    wm = w_eff.T[:, :, None] * valid[:, None, :]                          # (49, 2, HW)

    # Flat slack on each side so every shifted tap read stays in bounds,
    # rounded up to 128 so the interior starts lane-tile aligned.
    base = -(-(PAD * W + PAD) // 128) * 128
    hwp = HW + 2 * base

    x2 = x.reshape(N, C, HW)  # lane-dense layout (last dim = H*W)

    kernel = functools.partial(_spatial_gate_kernel, W=W, base=base)
    out = pl.pallas_call(
        kernel,
        out_shape=jax.ShapeDtypeStruct((N, C, HW), x.dtype),
        grid=(N // nb,),
        in_specs=[
            pl.BlockSpec((nb, C, HW), lambda i: (i, 0, 0)),
            pl.BlockSpec((KSIZE * KSIZE, 2, HW), lambda i: (0, 0, 0)),
            pl.BlockSpec(memory_space=pltpu.MemorySpace.SMEM),
        ],
        out_specs=pl.BlockSpec((nb, C, HW), lambda i: (i, 0, 0)),
        scratch_shapes=[pltpu.VMEM((2, nb, hwp), jnp.float32)],
        compiler_params=pltpu.CompilerParams(
            dimension_semantics=("parallel",),       # shard batch over TCs on v7x
            vmem_limit_bytes=32 * 1024 * 1024,       # explicit, v7x-safe budget
        ),
    )(x2, wm, bias_eff)
    return out.reshape(N, C, H, W)


def _reference(x, conv_w, bn_params):
    # Pure-JAX reference for a sanity check.
    mx = jnp.max(x, axis=1, keepdims=True)
    mn = jnp.mean(x, axis=1, keepdims=True)
    pooled = jnp.concatenate([mx, mn], axis=1)                # (N, 2, H, W)
    conv = jax.lax.conv_general_dilated(
        pooled, conv_w, window_strides=(1, 1),
        padding=[(PAD, PAD), (PAD, PAD)],
        dimension_numbers=("NCHW", "OIHW", "NCHW"),
        precision=jax.lax.Precision.HIGHEST)
    gamma, beta, r_mean, r_var = bn_params
    y = (conv - r_mean) / jnp.sqrt(r_var + BN_EPS) * gamma + beta
    return x * jax.nn.sigmoid(y)


if __name__ == "__main__":
    key = jax.random.PRNGKey(0)
    kx, kw = jax.random.split(key)

    N, C, H, W = 2, 4, 16, 16
    x = jax.random.normal(kx, (N, C, H, W), dtype=jnp.float32)

    # Conv2d(2, 1, 7, padding=3, bias=False) weight, deterministic init.
    conv_w = (jax.random.normal(kw, (1, 2, KSIZE, KSIZE), dtype=jnp.float32)
              * (1.0 / (2 * KSIZE * KSIZE) ** 0.5))
    # BatchNorm2d(1) eval-mode params: [gamma, beta, running_mean, running_var]
    # (non-trivial values to exercise the BN folding).
    bn_params = jnp.array([1.1, 0.05, -0.02, 0.9], dtype=jnp.float32)

    out = spatial_gate(x, conv_w, bn_params)
    out = jax.block_until_ready(out)

    ref = _reference(x, conv_w, bn_params)
    assert out.shape == x.shape and out.dtype == x.dtype
    assert jnp.allclose(out, ref, atol=1e-3, rtol=1e-3), "mismatch vs JAX reference"

    print("KERNEL_OK")
</pallas_src>

<mosaic_0001>
module attributes {stable_mosaic.version = 11 : i64} {
  func.func @_spatial_gate_kernel(%arg0: i32, %arg1: memref<2x4x256xf32, #tpu.memory_space<vmem>>, %arg2: memref<49x2x256xf32, #tpu.memory_space<vmem>>, %arg3: memref<1xf32, #tpu.memory_space<smem>>, %arg4: memref<2x4x256xf32, #tpu.memory_space<vmem>>, %arg5: memref<2x2x512xf32, #tpu.memory_space<vmem>>) attributes {dimension_semantics = [#tpu.dimension_semantics<parallel>], iteration_bounds = array<i64: 1>, scalar_prefetch = 0 : i64, scratch_operands = 1 : i64, tpu.core_type = #tpu.core_type<tc>, window_params = [{transform_indices = @transform_0, window_bounds = array<i64: 2, 4, 256>}, {pipeline_mode = #tpu.pipeline_mode<synchronous>, transform_indices = @transform_1, window_bounds = array<i64: 49, 2, 256>}, {transform_indices = @transform_2, window_bounds = array<i64: 1>}, {transform_indices = @transform_3, window_bounds = array<i64: 2, 4, 256>}]} {
    %c0 = arith.constant 0 : index
    %c0_0 = arith.constant 0 : index
    %c0_1 = arith.constant 0 : index
    %0 = vector.load %arg1[%c0, %c0_0, %c0_1] : memref<2x4x256xf32, #tpu.memory_space<vmem>>, vector<2x4x256xf32>
    %cst = arith.constant dense<0xFF800000> : vector<2x256xf32>
    %1 = vector.multi_reduction <maximumf>, %0, %cst [1] : vector<2x4x256xf32> to vector<2x256xf32>
    %cst_2 = arith.constant dense<0.000000e+00> : vector<2x256xf32>
    %2 = vector.multi_reduction <add>, %0, %cst_2 [1] : vector<2x4x256xf32> to vector<2x256xf32>
    %cst_3 = arith.constant 4.000000e+00 : f32
    %3 = vector.broadcast %cst_3 : f32 to vector<2x256xf32>
    %4 = arith.divf %2, %3 : vector<2x256xf32>
    %cst_4 = arith.constant 0.000000e+00 : f32
    %5 = vector.broadcast %cst_4 : f32 to vector<2x2x512xf32>
    %c0_5 = arith.constant 0 : index
    %c0_6 = arith.constant 0 : index
    %c0_7 = arith.constant 0 : index
    %6 = vector.load %arg5[%c0_5, %c0_6, %c0_7] : memref<2x2x512xf32, #tpu.memory_space<vmem>>, vector<2x2x512xf32>
    tpu.vector_store %arg5[%c0_5, %c0_6, %c0_7], %5 {strides = array<i32>} : memref<2x2x512xf32, #tpu.memory_space<vmem>>, vector<2x2x512xf32>,
    %c0_8 = arith.constant 0 : index
    %c0_9 = arith.constant 0 : index
    %c128 = arith.constant 128 : index
    %7 = vector.load %arg5[%c0_8, %c0_9, %c128] : memref<2x2x512xf32, #tpu.memory_space<vmem>>, vector<1x2x256xf32>
    %8 = vector.shape_cast %7 : vector<1x2x256xf32> to vector<2x256xf32>
    %9 = vector.shape_cast %1 : vector<2x256xf32> to vector<1x2x256xf32>
    tpu.vector_store %arg5[%c0_8, %c0_9, %c128], %9 {strides = array<i32>} : memref<2x2x512xf32, #tpu.memory_space<vmem>>, vector<1x2x256xf32>,
    %c1 = arith.constant 1 : index
    %c0_10 = arith.constant 0 : index
    %c128_11 = arith.constant 128 : index
    %10 = vector.load %arg5[%c1, %c0_10, %c128_11] : memref<2x2x512xf32, #tpu.memory_space<vmem>>, vector<1x2x256xf32>
    %11 = vector.shape_cast %10 : vector<1x2x256xf32> to vector<2x256xf32>
    %12 = vector.shape_cast %4 : vector<2x256xf32> to vector<1x2x256xf32>
    tpu.vector_store %arg5[%c1, %c0_10, %c128_11], %12 {strides = array<i32>} : memref<2x2x512xf32, #tpu.memory_space<vmem>>, vector<1x2x256xf32>,
    %cst_12 = arith.constant 0.000000e+00 : f32
    %13 = vector.broadcast %cst_12 : f32 to vector<2x2x256xf32>
    %c0_13 = arith.constant 0 : index
    %c0_14 = arith.constant 0 : index
    %c77 = arith.constant 77 : index
    %14 = vector.load %arg5[%c0_13, %c0_14, %c77] : memref<2x2x512xf32, #tpu.memory_space<vmem>>, vector<2x2x256xf32>
    %c0_15 = arith.constant 0 : index
    %c0_16 = arith.constant 0 : index
    %c0_17 = arith.constant 0 : index
    %15 = vector.load %arg2[%c0_15, %c0_16, %c0_17] : memref<49x2x256xf32, #tpu.memory_space<vmem>>, vector<1x2x256xf32>
    %16 = vector.shape_cast %15 : vector<1x2x256xf32> to vector<2x256xf32>
    %17 = vector.shape_cast %16 : vector<2x256xf32> to vector<2x1x256xf32>
    %18 = vector.broadcast %17 : vector<2x1x256xf32> to vector<2x2x256xf32>
    %19 = arith.mulf %18, %14 : vector<2x2x256xf32>
    %20 = arith.addf %13, %19 : vector<2x2x256xf32>
    %c0_18 = arith.constant 0 : index
    %c0_19 = arith.constant 0 : index
    %c78 = arith.constant 78 : index
    %21 = vector.load %arg5[%c0_18, %c0_19, %c78] : memref<2x2x512xf32, #tpu.memory_space<vmem>>, vector<2x2x256xf32>
    %c1_20 = arith.constant 1 : index
    %c0_21 = arith.constant 0 : index
    %c0_22 = arith.constant 0 : index
    %22 = vector.load %arg2[%c1_20, %c0_21, %c0_22] : memref<49x2x256xf32, #tpu.memory_space<vmem>>, vector<1x2x256xf32>
    %23 = vector.shape_cast %22 : vector<1x2x256xf32> to vector<2x256xf32>
    %24 = vector.shape_cast %23 : vector<2x256xf32> to vector<2x1x256xf32>
    %25 = vector.broadcast %24 : vector<2x1x256xf32> to vector<2x2x256xf32>
    %26 = arith.mulf %25, %21 : vector<2x2x256xf32>
    %27 = arith.addf %20, %26 : vector<2x2x256xf32>
    %c0_23 = arith.constant 0 : index
    %c0_24 = arith.constant 0 : index
    %c79 = arith.constant 79 : index
    %28 = vector.load %arg5[%c0_23, %c0_24, %c79] : memref<2x2x512xf32, #tpu.memory_space<vmem>>, vector<2x2x256xf32>
    %c2 = arith.constant 2 : index
    %c0_25 = arith.constant 0 : index
    %c0_26 = arith.constant 0 : index
    %29 = vector.load %arg2[%c2, %c0_25, %c0_26] : memref<49x2x256xf32, #tpu.memory_space<vmem>>, vector<1x2x256xf32>
    %30 = vector.shape_cast %29 : vector<1x2x256xf32> to vector<2x256xf32>
    %31 = vector.shape_cast %30 : vector<2x256xf32> to vector<2x1x256xf32>
    %32 = vector.broadcast %31 : vector<2x1x256xf32> to vector<2x2x256xf32>
    %33 = arith.mulf %32, %28 : vector<2x2x256xf32>
    %34 = arith.addf %27, %33 : vector<2x2x256xf32>
    %c0_27 = arith.constant 0 : index
    %c0_28 = arith.constant 0 : index
    %c80 = arith.constant 80 : index
    %35 = vector.load %arg5[%c0_27, %c0_28, %c80] : memref<2x2x512xf32, #tpu.memory_space<vmem>>, vector<2x2x256xf32>
    %c3 = arith.constant 3 : index
    %c0_29 = arith.constant 0 : index
    %c0_30 = arith.constant 0 : index
    %36 = vector.load %arg2[%c3, %c0_29, %c0_30] : memref<49x2x256xf32, #tpu.memory_space<vmem>>, vector<1x2x256xf32>
    %37 = vector.shape_cast %36 : vector<1x2x256xf32> to vector<2x256xf32>
    %38 = vector.shape_cast %37 : vector<2x256xf32> to vector<2x1x256xf32>
    %39 = vector.broadcast %38 : vector<2x1x256xf32> to vector<2x2x256xf32>
    %40 = arith.mulf %39, %35 : vector<2x2x256xf32>
    %41 = arith.addf %34, %40 : vector<2x2x256xf32>
    %c0_31 = arith.constant 0 : index
    %c0_32 = arith.constant 0 : index
    %c81 = arith.constant 81 : index
    %42 = vector.load %arg5[%c0_31, %c0_32, %c81] : memref<2x2x512xf32, #tpu.memory_space<vmem>>, vector<2x2x256xf32>
    %c4 = arith.constant 4 : index
    %c0_33 = arith.constant 0 : index
    %c0_34 = arith.constant 0 : index
    %43 = vector.load %arg2[%c4, %c0_33, %c0_34] : memref<49x2x256xf32, #tpu.memory_space<vmem>>, vector<1x2x256xf32>
    %44 = vector.shape_cast %43 : vector<1x2x256xf32> to vector<2x256xf32>
    %45 = vector.shape_cast %44 : vector<2x256xf32> to vector<2x1x256xf32>
    %46 = vector.broadcast %45 : vector<2x1x256xf32> to vector<2x2x256xf32>
    %47 = arith.mulf %46, %42 : vector<2x2x256xf32>
    %48 = arith.addf %41, %47 : vector<2x2x256xf32>
    %c0_35 = arith.constant 0 : index
    %c0_36 = arith.constant 0 : index
    %c82 = arith.constant 82 : index
    %49 = vector.load %arg5[%c0_35, %c0_36, %c82] : memref<2x2x512xf32, #tpu.memory_space<vmem>>, vector<2x2x256xf32>
    %c5 = arith.constant 5 : index
    %c0_37 = arith.constant 0 : index
    %c0_38 = arith.constant 0 : index
    %50 = vector.load %arg2[%c5, %c0_37, %c0_38] : memref<49x2x256xf32, #tpu.memory_space<vmem>>, vector<1x2x256xf32>
    %51 = vector.shape_cast %50 : vector<1x2x256xf32> to vector<2x256xf32>
    %52 = vector.shape_cast %51 : vector<2x256xf32> to vector<2x1x256xf32>
    %53 = vector.broadcast %52 : vector<2x1x256xf32> to vector<2x2x256xf32>
    %54 = arith.mulf %53, %49 : vector<2x2x256xf32>
    %55 = arith.addf %48, %54 : vector<2x2x256xf32>
    %c0_39 = arith.constant 0 : index
    %c0_40 = arith.constant 0 : index
    %c83 = arith.constant 83 : index
    %56 = vector.load %arg5[%c0_39, %c0_40, %c83] : memref<2x2x512xf32, #tpu.memory_space<vmem>>, vector<2x2x256xf32>
    %c6 = arith.constant 6 : index
    %c0_41 = arith.constant 0 : index
    %c0_42 = arith.constant 0 : index
    %57 = vector.load %arg2[%c6, %c0_41, %c0_42] : memref<49x2x256xf32, #tpu.memory_space<vmem>>, vector<1x2x256xf32>
    %58 = vector.shape_cast %57 : vector<1x2x256xf32> to vector<2x256xf32>
    %59 = vector.shape_cast %58 : vector<2x256xf32> to vector<2x1x256xf32>
    %60 = vector.broadcast %59 : vector<2x1x256xf32> to vector<2x2x256xf32>
    %61 = arith.mulf %60, %56 : vector<2x2x256xf32>
    %62 = arith.addf %55, %61 : vector<2x2x256xf32>
    %c0_43 = arith.constant 0 : index
    %c0_44 = arith.constant 0 : index
    %c93 = arith.constant 93 : index
    %63 = vector.load %arg5[%c0_43, %c0_44, %c93] : memref<2x2x512xf32, #tpu.memory_space<vmem>>, vector<2x2x256xf32>
    %c7 = arith.constant 7 : index
    %c0_45 = arith.constant 0 : index
    %c0_46 = arith.constant 0 : index
    %64 = vector.load %arg2[%c7, %c0_45, %c0_46] : memref<49x2x256xf32, #tpu.memory_space<vmem>>, vector<1x2x256xf32>
    %65 = vector.shape_cast %64 : vector<1x2x256xf32> to vector<2x256xf32>
    %66 = vector.shape_cast %65 : vector<2x256xf32> to vector<2x1x256xf32>
    %67 = vector.broadcast %66 : vector<2x1x256xf32> to vector<2x2x256xf32>
    %68 = arith.mulf %67, %63 : vector<2x2x256xf32>
    %69 = arith.addf %62, %68 : vector<2x2x256xf32>
    %c0_47 = arith.constant 0 : index
    %c0_48 = arith.constant 0 : index
    %c94 = arith.constant 94 : index
    %70 = vector.load %arg5[%c0_47, %c0_48, %c94] : memref<2x2x512xf32, #tpu.memory_space<vmem>>, vector<2x2x256xf32>
    %c8 = arith.constant 8 : index
    %c0_49 = arith.constant 0 : index
    %c0_50 = arith.constant 0 : index
    %71 = vector.load %arg2[%c8, %c0_49, %c0_50] : memref<49x2x256xf32, #tpu.memory_space<vmem>>, vector<1x2x256xf32>
    %72 = vector.shape_cast %71 : vector<1x2x256xf32> to vector<2x256xf32>
    %73 = vector.shape_cast %72 : vector<2x256xf32> to vector<2x1x256xf32>
    %74 = vector.broadcast %73 : vector<2x1x256xf32> to vector<2x2x256xf32>
    %75 = arith.mulf %74, %70 : vector<2x2x256xf32>
    %76 = arith.addf %69, %75 : vector<2x2x256xf32>
    %c0_51 = arith.constant 0 : index
    %c0_52 = arith.constant 0 : index
    %c95 = arith.constant 95 : index
    %77 = vector.load %arg5[%c0_51, %c0_52, %c95] : memref<2x2x512xf32, #tpu.memory_space<vmem>>, vector<2x2x256xf32>
    %c9 = arith.constant 9 : index
    %c0_53 = arith.constant 0 : index
    %c0_54 = arith.constant 0 : index
    %78 = vector.load %arg2[%c9, %c0_53, %c0_54] : memref<49x2x256xf32, #tpu.memory_space<vmem>>, vector<1x2x256xf32>
    %79 = vector.shape_cast %78 : vector<1x2x256xf32> to vector<2x256xf32>
    %80 = vector.shape_cast %79 : vector<2x256xf32> to vector<2x1x256xf32>
    %81 = vector.broadcast %80 : vector<2x1x256xf32> to vector<2x2x256xf32>
    %82 = arith.mulf %81, %77 : vector<2x2x256xf32>
    %83 = arith.addf %76, %82 : vector<2x2x256xf32>
    %c0_55 = arith.constant 0 : index
    %c0_56 = arith.constant 0 : index
    %c96 = arith.constant 96 : index
    %84 = vector.load %arg5[%c0_55, %c0_56, %c96] : memref<2x2x512xf32, #tpu.memory_space<vmem>>, vector<2x2x256xf32>
    %c10 = arith.constant 10 : index
    %c0_57 = arith.constant 0 : index
    %c0_58 = arith.constant 0 : index
    %85 = vector.load %arg2[%c10, %c0_57, %c0_58] : memref<49x2x256xf32, #tpu.memory_space<vmem>>, vector<1x2x256xf32>
    %86 = vector.shape_cast %85 : vector<1x2x256xf32> to vector<2x256xf32>
    %87 = vector.shape_cast %86 : vector<2x256xf32> to vector<2x1x256xf32>
    %88 = vector.broadcast %87 : vector<2x1x256xf32> to vector<2x2x256xf32>
    %89 = arith.mulf %88, %84 : vector<2x2x256xf32>
    %90 = arith.addf %83, %89 : vector<2x2x256xf32>
    %c0_59 = arith.constant 0 : index
    %c0_60 = arith.constant 0 : index
    %c97 = arith.constant 97 : index
    %91 = vector.load %arg5[%c0_59, %c0_60, %c97] : memref<2x2x512xf32, #tpu.memory_space<vmem>>, vector<2x2x256xf32>
    %c11 = arith.constant 11 : index
    %c0_61 = arith.constant 0 : index
    %c0_62 = arith.constant 0 : index
    %92 = vector.load %arg2[%c11, %c0_61, %c0_62] : memref<49x2x256xf32, #tpu.memory_space<vmem>>, vector<1x2x256xf32>
    %93 = vector.shape_cast %92 : vector<1x2x256xf32> to vector<2x256xf32>
    %94 = vector.shape_cast %93 : vector<2x256xf32> to vector<2x1x256xf32>
    %95 = vector.broadcast %94 : vector<2x1x256xf32> to vector<2x2x256xf32>
    %96 = arith.mulf %95, %91 : vector<2x2x256xf32>
    %97 = arith.addf %90, %96 : vector<2x2x256xf32>
    %c0_63 = arith.constant 0 : index
    %c0_64 = arith.constant 0 : index
    %c98 = arith.constant 98 : index
    %98 = vector.load %arg5[%c0_63, %c0_64, %c98] : memref<2x2x512xf32, #tpu.memory_space<vmem>>, vector<2x2x256xf32>
    %c12 = arith.constant 12 : index
    %c0_65 = arith.constant 0 : index
    %c0_66 = arith.constant 0 : index
    %99 = vector.load %arg2[%c12, %c0_65, %c0_66] : memref<49x2x256xf32, #tpu.memory_space<vmem>>, vector<1x2x256xf32>
    %100 = vector.shape_cast %99 : vector<1x2x256xf32> to vector<2x256xf32>
    %101 = vector.shape_cast %100 : vector<2x256xf32> to vector<2x1x256xf32>
    %102 = vector.broadcast %101 : vector<2x1x256xf32> to vector<2x2x256xf32>
    %103 = arith.mulf %102, %98 : vector<2x2x256xf32>
    %104 = arith.addf %97, %103 : vector<2x2x256xf32>
    %c0_67 = arith.constant 0 : index
    %c0_68 = arith.constant 0 : index
    %c99 = arith.constant 99 : index
    %105 = vector.load %arg5[%c0_67, %c0_68, %c99] : memref<2x2x512xf32, #tpu.memory_space<vmem>>, vector<2x2x256xf32>
    %c13 = arith.constant 13 : index
    %c0_69 = arith.constant 0 : index
    %c0_70 = arith.constant 0 : index
    %106 = vector.load %arg2[%c13, %c0_69, %c0_70] : memref<49x2x256xf32, #tpu.memory_space<vmem>>, vector<1x2x256xf32>
    %107 = vector.shape_cast %106 : vector<1x2x256xf32> to vector<2x256xf32>
    %108 = vector.shape_cast %107 : vector<2x256xf32> to vector<2x1x256xf32>
    %109 = vector.broadcast %108 : vector<2x1x256xf32> to vector<2x2x256xf32>
    %110 = arith.mulf %109, %105 : vector<2x2x256xf32>
    %111 = arith.addf %104, %110 : vector<2x2x256xf32>
    %c0_71 = arith.constant 0 : index
    %c0_72 = arith.constant 0 : index
    %c109 = arith.constant 109 : index
    %112 = vector.load %arg5[%c0_71, %c0_72, %c109] : memref<2x2x512xf32, #tpu.memory_space<vmem>>, vector<2x2x256xf32>
    %c14 = arith.constant 14 : index
    %c0_73 = arith.constant 0 : index
    %c0_74 = arith.constant 0 : index
    %113 = vector.load %arg2[%c14, %c0_73, %c0_74] : memref<49x2x256xf32, #tpu.memory_space<vmem>>, vector<1x2x256xf32>
    %114 = vector.shape_cast %113 : vector<1x2x256xf32> to vector<2x256xf32>
    %115 = vector.shape_cast %114 : vector<2x256xf32> to vector<2x1x256xf32>
    %116 = vector.broadcast %115 : vector<2x1x256xf32> to vector<2x2x256xf32>
    %117 = arith.mulf %116, %112 : vector<2x2x256xf32>
    %118 = arith.addf %111, %117 : vector<2x2x256xf32>
    %c0_75 = arith.constant 0 : index
    %c0_76 = arith.constant 0 : index
    %c110 = arith.constant 110 : index
    %119 = vector.load %arg5[%c0_75, %c0_76, %c110] : memref<2x2x512xf32, #tpu.memory_space<vmem>>, vector<2x2x256xf32>
    %c15 = arith.constant 15 : index
    %c0_77 = arith.constant 0 : index
    %c0_78 = arith.constant 0 : index
    %120 = vector.load %arg2[%c15, %c0_77, %c0_78] : memref<49x2x256xf32, #tpu.memory_space<vmem>>, vector<1x2x256xf32>
    %121 = vector.shape_cast %120 : vector<1x2x256xf32> to vector<2x256xf32>
    %122 = vector.shape_cast %121 : vector<2x256xf32> to vector<2x1x256xf32>
    %123 = vector.broadcast %122 : vector<2x1x256xf32> to vector<2x2x256xf32>
    %124 = arith.mulf %123, %119 : vector<2x2x256xf32>
    %125 = arith.addf %118, %124 : vector<2x2x256xf32>
    %c0_79 = arith.constant 0 : index
    %c0_80 = arith.constant 0 : index
    %c111 = arith.constant 111 : index
    %126 = vector.load %arg5[%c0_79, %c0_80, %c111] : memref<2x2x512xf32, #tpu.memory_space<vmem>>, vector<2x2x256xf32>
    %c16 = arith.constant 16 : index
    %c0_81 = arith.constant 0 : index
    %c0_82 = arith.constant 0 : index
    %127 = vector.load %arg2[%c16, %c0_81, %c0_82] : memref<49x2x256xf32, #tpu.memory_space<vmem>>, vector<1x2x256xf32>
    %128 = vector.shape_cast %127 : vector<1x2x256xf32> to vector<2x256xf32>
    %129 = vector.shape_cast %128 : vector<2x256xf32> to vector<2x1x256xf32>
    %130 = vector.broadcast %129 : vector<2x1x256xf32> to vector<2x2x256xf32>
    %131 = arith.mulf %130, %126 : vector<2x2x256xf32>
    %132 = arith.addf %125, %131 : vector<2x2x256xf32>
    %c0_83 = arith.constant 0 : index
    %c0_84 = arith.constant 0 : index
    %c112 = arith.constant 112 : index
    %133 = vector.load %arg5[%c0_83, %c0_84, %c112] : memref<2x2x512xf32, #tpu.memory_space<vmem>>, vector<2x2x256xf32>
    %c17 = arith.constant 17 : index
    %c0_85 = arith.constant 0 : index
    %c0_86 = arith.constant 0 : index
    %134 = vector.load %arg2[%c17, %c0_85, %c0_86] : memref<49x2x256xf32, #tpu.memory_space<vmem>>, vector<1x2x256xf32>
    %135 = vector.shape_cast %134 : vector<1x2x256xf32> to vector<2x256xf32>
    %136 = vector.shape_cast %135 : vector<2x256xf32> to vector<2x1x256xf32>
    %137 = vector.broadcast %136 : vector<2x1x256xf32> to vector<2x2x256xf32>
    %138 = arith.mulf %137, %133 : vector<2x2x256xf32>
    %139 = arith.addf %132, %138 : vector<2x2x256xf32>
    %c0_87 = arith.constant 0 : index
    %c0_88 = arith.constant 0 : index
    %c113 = arith.constant 113 : index
    %140 = vector.load %arg5[%c0_87, %c0_88, %c113] : memref<2x2x512xf32, #tpu.memory_space<vmem>>, vector<2x2x256xf32>
    %c18 = arith.constant 18 : index
    %c0_89 = arith.constant 0 : index
    %c0_90 = arith.constant 0 : index
    %141 = vector.load %arg2[%c18, %c0_89, %c0_90] : memref<49x2x256xf32, #tpu.memory_space<vmem>>, vector<1x2x256xf32>
    %142 = vector.shape_cast %141 : vector<1x2x256xf32> to vector<2x256xf32>
    %143 = vector.shape_cast %142 : vector<2x256xf32> to vector<2x1x256xf32>
    %144 = vector.broadcast %143 : vector<2x1x256xf32> to vector<2x2x256xf32>
    %145 = arith.mulf %144, %140 : vector<2x2x256xf32>
    %146 = arith.addf %139, %145 : vector<2x2x256xf32>
    %c0_91 = arith.constant 0 : index
    %c0_92 = arith.constant 0 : index
    %c114 = arith.constant 114 : index
    %147 = vector.load %arg5[%c0_91, %c0_92, %c114] : memref<2x2x512xf32, #tpu.memory_space<vmem>>, vector<2x2x256xf32>
    %c19 = arith.constant 19 : index
    %c0_93 = arith.constant 0 : index
    %c0_94 = arith.constant 0 : index
    %148 = vector.load %arg2[%c19, %c0_93, %c0_94] : memref<49x2x256xf32, #tpu.memory_space<vmem>>, vector<1x2x256xf32>
    %149 = vector.shape_cast %148 : vector<1x2x256xf32> to vector<2x256xf32>
    %150 = vector.shape_cast %149 : vector<2x256xf32> to vector<2x1x256xf32>
    %151 = vector.broadcast %150 : vector<2x1x256xf32> to vector<2x2x256xf32>
    %152 = arith.mulf %151, %147 : vector<2x2x256xf32>
    %153 = arith.addf %146, %152 : vector<2x2x256xf32>
    %c0_95 = arith.constant 0 : index
    %c0_96 = arith.constant 0 : index
    %c115 = arith.constant 115 : index
    %154 = vector.load %arg5[%c0_95, %c0_96, %c115] : memref<2x2x512xf32, #tpu.memory_space<vmem>>, vector<2x2x256xf32>
    %c20 = arith.constant 20 : index
    %c0_97 = arith.constant 0 : index
    %c0_98 = arith.constant 0 : index
    %155 = vector.load %arg2[%c20, %c0_97, %c0_98] : memref<49x2x256xf32, #tpu.memory_space<vmem>>, vector<1x2x256xf32>
    %156 = vector.shape_cast %155 : vector<1x2x256xf32> to vector<2x256xf32>
    %157 = vector.shape_cast %156 : vector<2x256xf32> to vector<2x1x256xf32>
    %158 = vector.broadcast %157 : vector<2x1x256xf32> to vector<2x2x256xf32>
    %159 = arith.mulf %158, %154 : vector<2x2x256xf32>
    %160 = arith.addf %153, %159 : vector<2x2x256xf32>
    %c0_99 = arith.constant 0 : index
    %c0_100 = arith.constant 0 : index
    %c125 = arith.constant 125 : index
    %161 = vector.load %arg5[%c0_99, %c0_100, %c125] : memref<2x2x512xf32, #tpu.memory_space<vmem>>, vector<2x2x256xf32>
    %c21 = arith.constant 21 : index
    %c0_101 = arith.constant 0 : index
    %c0_102 = arith.constant 0 : index
    %162 = vector.load %arg2[%c21, %c0_101, %c0_102] : memref<49x2x256xf32, #tpu.memory_space<vmem>>, vector<1x2x256xf32>
    %163 = vector.shape_cast %162 : vector<1x2x256xf32> to vector<2x256xf32>
    %164 = vector.shape_cast %163 : vector<2x256xf32> to vector<2x1x256xf32>
    %165 = vector.broadcast %164 : vector<2x1x256xf32> to vector<2x2x256xf32>
    %166 = arith.mulf %165, %161 : vector<2x2x256xf32>
    %167 = arith.addf %160, %166 : vector<2x2x256xf32>
    %c0_103 = arith.constant 0 : index
    %c0_104 = arith.constant 0 : index
    %c126 = arith.constant 126 : index
    %168 = vector.load %arg5[%c0_103, %c0_104, %c126] : memref<2x2x512xf32, #tpu.memory_space<vmem>>, vector<2x2x256xf32>
    %c22 = arith.constant 22 : index
    %c0_105 = arith.constant 0 : index
    %c0_106 = arith.constant 0 : index
    %169 = vector.load %arg2[%c22, %c0_105, %c0_106] : memref<49x2x256xf32, #tpu.memory_space<vmem>>, vector<1x2x256xf32>
    %170 = vector.shape_cast %169 : vector<1x2x256xf32> to vector<2x256xf32>
    %171 = vector.shape_cast %170 : vector<2x256xf32> to vector<2x1x256xf32>
    %172 = vector.broadcast %171 : vector<2x1x256xf32> to vector<2x2x256xf32>
    %173 = arith.mulf %172, %168 : vector<2x2x256xf32>
    %174 = arith.addf %167, %173 : vector<2x2x256xf32>
    %c0_107 = arith.constant 0 : index
    %c0_108 = arith.constant 0 : index
    %c127 = arith.constant 127 : index
    %175 = vector.load %arg5[%c0_107, %c0_108, %c127] : memref<2x2x512xf32, #tpu.memory_space<vmem>>, vector<2x2x256xf32>
    %c23 = arith.constant 23 : index
    %c0_109 = arith.constant 0 : index
    %c0_110 = arith.constant 0 : index
    %176 = vector.load %arg2[%c23, %c0_109, %c0_110] : memref<49x2x256xf32, #tpu.memory_space<vmem>>, vector<1x2x256xf32>
    %177 = vector.shape_cast %176 : vector<1x2x256xf32> to vector<2x256xf32>
    %178 = vector.shape_cast %177 : vector<2x256xf32> to vector<2x1x256xf32>
    %179 = vector.broadcast %178 : vector<2x1x256xf32> to vector<2x2x256xf32>
    %180 = arith.mulf %179, %175 : vector<2x2x256xf32>
    %181 = arith.addf %174, %180 : vector<2x2x256xf32>
    %c0_111 = arith.constant 0 : index
    %c0_112 = arith.constant 0 : index
    %c128_113 = arith.constant 128 : index
    %182 = vector.load %arg5[%c0_111, %c0_112, %c128_113] : memref<2x2x512xf32, #tpu.memory_space<vmem>>, vector<2x2x256xf32>
    %c24 = arith.constant 24 : index
    %c0_114 = arith.constant 0 : index
    %c0_115 = arith.constant 0 : index
    %183 = vector.load %arg2[%c24, %c0_114, %c0_115] : memref<49x2x256xf32, #tpu.memory_space<vmem>>, vector<1x2x256xf32>
    %184 = vector.shape_cast %183 : vector<1x2x256xf32> to vector<2x256xf32>
    %185 = vector.shape_cast %184 : vector<2x256xf32> to vector<2x1x256xf32>
    %186 = vector.broadcast %185 : vector<2x1x256xf32> to vector<2x2x256xf32>
    %187 = arith.mulf %186, %182 : vector<2x2x256xf32>
    %188 = arith.addf %181, %187 : vector<2x2x256xf32>
    %c0_116 = arith.constant 0 : index
    %c0_117 = arith.constant 0 : index
    %c129 = arith.constant 129 : index
    %189 = vector.load %arg5[%c0_116, %c0_117, %c129] : memref<2x2x512xf32, #tpu.memory_space<vmem>>, vector<2x2x256xf32>
    %c25 = arith.constant 25 : index
    %c0_118 = arith.constant 0 : index
    %c0_119 = arith.constant 0 : index
    %190 = vector.load %arg2[%c25, %c0_118, %c0_119] : memref<49x2x256xf32, #tpu.memory_space<vmem>>, vector<1x2x256xf32>
    %191 = vector.shape_cast %190 : vector<1x2x256xf32> to vector<2x256xf32>
    %192 = vector.shape_cast %191 : vector<2x256xf32> to vector<2x1x256xf32>
    %193 = vector.broadcast %192 : vector<2x1x256xf32> to vector<2x2x256xf32>
    %194 = arith.mulf %193, %189 : vector<2x2x256xf32>
    %195 = arith.addf %188, %194 : vector<2x2x256xf32>
    %c0_120 = arith.constant 0 : index
    %c0_121 = arith.constant 0 : index
    %c130 = arith.constant 130 : index
    %196 = vector.load %arg5[%c0_120, %c0_121, %c130] : memref<2x2x512xf32, #tpu.memory_space<vmem>>, vector<2x2x256xf32>
    %c26 = arith.constant 26 : index
    %c0_122 = arith.constant 0 : index
    %c0_123 = arith.constant 0 : index
    %197 = vector.load %arg2[%c26, %c0_122, %c0_123] : memref<49x2x256xf32, #tpu.memory_space<vmem>>, vector<1x2x256xf32>
    %198 = vector.shape_cast %197 : vector<1x2x256xf32> to vector<2x256xf32>
    %199 = vector.shape_cast %198 : vector<2x256xf32> to vector<2x1x256xf32>
    %200 = vector.broadcast %199 : vector<2x1x256xf32> to vector<2x2x256xf32>
    %201 = arith.mulf %200, %196 : vector<2x2x256xf32>
    %202 = arith.addf %195, %201 : vector<2x2x256xf32>
    %c0_124 = arith.constant 0 : index
    %c0_125 = arith.constant 0 : index
    %c131 = arith.constant 131 : index
    %203 = vector.load %arg5[%c0_124, %c0_125, %c131] : memref<2x2x512xf32, #tpu.memory_space<vmem>>, vector<2x2x256xf32>
    %c27 = arith.constant 27 : index
    %c0_126 = arith.constant 0 : index
    %c0_127 = arith.constant 0 : index
    %204 = vector.load %arg2[%c27, %c0_126, %c0_127] : memref<49x2x256xf32, #tpu.memory_space<vmem>>, vector<1x2x256xf32>
    %205 = vector.shape_cast %204 : vector<1x2x256xf32> to vector<2x256xf32>
    %206 = vector.shape_cast %205 : vector<2x256xf32> to vector<2x1x256xf32>
    %207 = vector.broadcast %206 : vector<2x1x256xf32> to vector<2x2x256xf32>
    %208 = arith.mulf %207, %203 : vector<2x2x256xf32>
    %209 = arith.addf %202, %208 : vector<2x2x256xf32>
    %c0_128 = arith.constant 0 : index
    %c0_129 = arith.constant 0 : index
    %c141 = arith.constant 141 : index
    %210 = vector.load %arg5[%c0_128, %c0_129, %c141] : memref<2x2x512xf32, #tpu.memory_space<vmem>>, vector<2x2x256xf32>
    %c28 = arith.constant 28 : index
    %c0_130 = arith.constant 0 : index
    %c0_131 = arith.constant 0 : index
    %211 = vector.load %arg2[%c28, %c0_130, %c0_131] : memref<49x2x256xf32, #tpu.memory_space<vmem>>, vector<1x2x256xf32>
    %212 = vector.shape_cast %211 : vector<1x2x256xf32> to vector<2x256xf32>
    %213 = vector.shape_cast %212 : vector<2x256xf32> to vector<2x1x256xf32>
    %214 = vector.broadcast %213 : vector<2x1x256xf32> to vector<2x2x256xf32>
    %215 = arith.mulf %214, %210 : vector<2x2x256xf32>
    %216 = arith.addf %209, %215 : vector<2x2x256xf32>
    %c0_132 = arith.constant 0 : index
    %c0_133 = arith.constant 0 : index
    %c142 = arith.constant 142 : index
    %217 = vector.load %arg5[%c0_132, %c0_133, %c142] : memref<2x2x512xf32, #tpu.memory_space<vmem>>, vector<2x2x256xf32>
    %c29 = arith.constant 29 : index
    %c0_134 = arith.constant 0 : index
    %c0_135 = arith.constant 0 : index
    %218 = vector.load %arg2[%c29, %c0_134, %c0_135] : memref<49x2x256xf32, #tpu.memory_space<vmem>>, vector<1x2x256xf32>
    %219 = vector.shape_cast %218 : vector<1x2x256xf32> to vector<2x256xf32>
    %220 = vector.shape_cast %219 : vector<2x256xf32> to vector<2x1x256xf32>
    %221 = vector.broadcast %220 : vector<2x1x256xf32> to vector<2x2x256xf32>
    %222 = arith.mulf %221, %217 : vector<2x2x256xf32>
    %223 = arith.addf %216, %222 : vector<2x2x256xf32>
    %c0_136 = arith.constant 0 : index
    %c0_137 = arith.constant 0 : index
    %c143 = arith.constant 143 : index
    %224 = vector.load %arg5[%c0_136, %c0_137, %c143] : memref<2x2x512xf32, #tpu.memory_space<vmem>>, vector<2x2x256xf32>
    %c30 = arith.constant 30 : index
    %c0_138 = arith.constant 0 : index
    %c0_139 = arith.constant 0 : index
    %225 = vector.load %arg2[%c30, %c0_138, %c0_139] : memref<49x2x256xf32, #tpu.memory_space<vmem>>, vector<1x2x256xf32>
    %226 = vector.shape_cast %225 : vector<1x2x256xf32> to vector<2x256xf32>
    %227 = vector.shape_cast %226 : vector<2x256xf32> to vector<2x1x256xf32>
    %228 = vector.broadcast %227 : vector<2x1x256xf32> to vector<2x2x256xf32>
    %229 = arith.mulf %228, %224 : vector<2x2x256xf32>
    %230 = arith.addf %223, %229 : vector<2x2x256xf32>
    %c0_140 = arith.constant 0 : index
    %c0_141 = arith.constant 0 : index
    %c144 = arith.constant 144 : index
    %231 = vector.load %arg5[%c0_140, %c0_141, %c144] : memref<2x2x512xf32, #tpu.memory_space<vmem>>, vector<2x2x256xf32>
    %c31 = arith.constant 31 : index
    %c0_142 = arith.constant 0 : index
    %c0_143 = arith.constant 0 : index
    %232 = vector.load %arg2[%c31, %c0_142, %c0_143] : memref<49x2x256xf32, #tpu.memory_space<vmem>>, vector<1x2x256xf32>
    %233 = vector.shape_cast %232 : vector<1x2x256xf32> to vector<2x256xf32>
    %234 = vector.shape_cast %233 : vector<2x256xf32> to vector<2x1x256xf32>
    %235 = vector.broadcast %234 : vector<2x1x256xf32> to vector<2x2x256xf32>
    %236 = arith.mulf %235, %231 : vector<2x2x256xf32>
    %237 = arith.addf %230, %236 : vector<2x2x256xf32>
    %c0_144 = arith.constant 0 : index
    %c0_145 = arith.constant 0 : index
    %c145 = arith.constant 145 : index
    %238 = vector.load %arg5[%c0_144, %c0_145, %c145] : memref<2x2x512xf32, #tpu.memory_space<vmem>>, vector<2x2x256xf32>
    %c32 = arith.constant 32 : index
    %c0_146 = arith.constant 0 : index
    %c0_147 = arith.constant 0 : index
    %239 = vector.load %arg2[%c32, %c0_146, %c0_147] : memref<49x2x256xf32, #tpu.memory_space<vmem>>, vector<1x2x256xf32>
    %240 = vector.shape_cast %239 : vector<1x2x256xf32> to vector<2x256xf32>
    %241 = vector.shape_cast %240 : vector<2x256xf32> to vector<2x1x256xf32>
    %242 = vector.broadcast %241 : vector<2x1x256xf32> to vector<2x2x256xf32>
    %243 = arith.mulf %242, %238 : vector<2x2x256xf32>
    %244 = arith.addf %237, %243 : vector<2x2x256xf32>
    %c0_148 = arith.constant 0 : index
    %c0_149 = arith.constant 0 : index
    %c146 = arith.constant 146 : index
    %245 = vector.load %arg5[%c0_148, %c0_149, %c146] : memref<2x2x512xf32, #tpu.memory_space<vmem>>, vector<2x2x256xf32>
    %c33 = arith.constant 33 : index
    %c0_150 = arith.constant 0 : index
    %c0_151 = arith.constant 0 : index
    %246 = vector.load %arg2[%c33, %c0_150, %c0_151] : memref<49x2x256xf32, #tpu.memory_space<vmem>>, vector<1x2x256xf32>
    %247 = vector.shape_cast %246 : vector<1x2x256xf32> to vector<2x256xf32>
    %248 = vector.shape_cast %247 : vector<2x256xf32> to vector<2x1x256xf32>
    %249 = vector.broadcast %248 : vector<2x1x256xf32> to vector<2x2x256xf32>
    %250 = arith.mulf %249, %245 : vector<2x2x256xf32>
    %251 = arith.addf %244, %250 : vector<2x2x256xf32>
    %c0_152 = arith.constant 0 : index
    %c0_153 = arith.constant 0 : index
    %c147 = arith.constant 147 : index
    %252 = vector.load %arg5[%c0_152, %c0_153, %c147] : memref<2x2x512xf32, #tpu.memory_space<vmem>>, vector<2x2x256xf32>
    %c34 = arith.constant 34 : index
    %c0_154 = arith.constant 0 : index
    %c0_155 = arith.constant 0 : index
    %253 = vector.load %arg2[%c34, %c0_154, %c0_155] : memref<49x2x256xf32, #tpu.memory_space<vmem>>, vector<1x2x256xf32>
    %254 = vector.shape_cast %253 : vector<1x2x256xf32> to vector<2x256xf32>
    %255 = vector.shape_cast %254 : vector<2x256xf32> to vector<2x1x256xf32>
    %256 = vector.broadcast %255 : vector<2x1x256xf32> to vector<2x2x256xf32>
    %257 = arith.mulf %256, %252 : vector<2x2x256xf32>
    %258 = arith.addf %251, %257 : vector<2x2x256xf32>
    %c0_156 = arith.constant 0 : index
    %c0_157 = arith.constant 0 : index
    %c157 = arith.constant 157 : index
    %259 = vector.load %arg5[%c0_156, %c0_157, %c157] : memref<2x2x512xf32, #tpu.memory_space<vmem>>, vector<2x2x256xf32>
    %c35 = arith.constant 35 : index
    %c0_158 = arith.constant 0 : index
    %c0_159 = arith.constant 0 : index
    %260 = vector.load %arg2[%c35, %c0_158, %c0_159] : memref<49x2x256xf32, #tpu.memory_space<vmem>>, vector<1x2x256xf32>
    %261 = vector.shape_cast %260 : vector<1x2x256xf32> to vector<2x256xf32>
    %262 = vector.shape_cast %261 : vector<2x256xf32> to vector<2x1x256xf32>
    %263 = vector.broadcast %262 : vector<2x1x256xf32> to vector<2x2x256xf32>
    %264 = arith.mulf %263, %259 : vector<2x2x256xf32>
    %265 = arith.addf %258, %264 : vector<2x2x256xf32>
    %c0_160 = arith.constant 0 : index
    %c0_161 = arith.constant 0 : index
    %c158 = arith.constant 158 : index
    %266 = vector.load %arg5[%c0_160, %c0_161, %c158] : memref<2x2x512xf32, #tpu.memory_space<vmem>>, vector<2x2x256xf32>
    %c36 = arith.constant 36 : index
    %c0_162 = arith.constant 0 : index
    %c0_163 = arith.constant 0 : index
    %267 = vector.load %arg2[%c36, %c0_162, %c0_163] : memref<49x2x256xf32, #tpu.memory_space<vmem>>, vector<1x2x256xf32>
    %268 = vector.shape_cast %267 : vector<1x2x256xf32> to vector<2x256xf32>
    %269 = vector.shape_cast %268 : vector<2x256xf32> to vector<2x1x256xf32>
    %270 = vector.broadcast %269 : vector<2x1x256xf32> to vector<2x2x256xf32>
    %271 = arith.mulf %270, %266 : vector<2x2x256xf32>
    %272 = arith.addf %265, %271 : vector<2x2x256xf32>
    %c0_164 = arith.constant 0 : index
    %c0_165 = arith.constant 0 : index
    %c159 = arith.constant 159 : index
    %273 = vector.load %arg5[%c0_164, %c0_165, %c159] : memref<2x2x512xf32, #tpu.memory_space<vmem>>, vector<2x2x256xf32>
    %c37 = arith.constant 37 : index
    %c0_166 = arith.constant 0 : index
    %c0_167 = arith.constant 0 : index
    %274 = vector.load %arg2[%c37, %c0_166, %c0_167] : memref<49x2x256xf32, #tpu.memory_space<vmem>>, vector<1x2x256xf32>
    %275 = vector.shape_cast %274 : vector<1x2x256xf32> to vector<2x256xf32>
    %276 = vector.shape_cast %275 : vector<2x256xf32> to vector<2x1x256xf32>
    %277 = vector.broadcast %276 : vector<2x1x256xf32> to vector<2x2x256xf32>
    %278 = arith.mulf %277, %273 : vector<2x2x256xf32>
    %279 = arith.addf %272, %278 : vector<2x2x256xf32>
    %c0_168 = arith.constant 0 : index
    %c0_169 = arith.constant 0 : index
    %c160 = arith.constant 160 : index
    %280 = vector.load %arg5[%c0_168, %c0_169, %c160] : memref<2x2x512xf32, #tpu.memory_space<vmem>>, vector<2x2x256xf32>
    %c38 = arith.constant 38 : index
    %c0_170 = arith.constant 0 : index
    %c0_171 = arith.constant 0 : index
    %281 = vector.load %arg2[%c38, %c0_170, %c0_171] : memref<49x2x256xf32, #tpu.memory_space<vmem>>, vector<1x2x256xf32>
    %282 = vector.shape_cast %281 : vector<1x2x256xf32> to vector<2x256xf32>
    %283 = vector.shape_cast %282 : vector<2x256xf32> to vector<2x1x256xf32>
    %284 = vector.broadcast %283 : vector<2x1x256xf32> to vector<2x2x256xf32>
    %285 = arith.mulf %284, %280 : vector<2x2x256xf32>
    %286 = arith.addf %279, %285 : vector<2x2x256xf32>
    %c0_172 = arith.constant 0 : index
    %c0_173 = arith.constant 0 : index
    %c161 = arith.constant 161 : index
    %287 = vector.load %arg5[%c0_172, %c0_173, %c161] : memref<2x2x512xf32, #tpu.memory_space<vmem>>, vector<2x2x256xf32>
    %c39 = arith.constant 39 : index
    %c0_174 = arith.constant 0 : index
    %c0_175 = arith.constant 0 : index
    %288 = vector.load %arg2[%c39, %c0_174, %c0_175] : memref<49x2x256xf32, #tpu.memory_space<vmem>>, vector<1x2x256xf32>
    %289 = vector.shape_cast %288 : vector<1x2x256xf32> to vector<2x256xf32>
    %290 = vector.shape_cast %289 : vector<2x256xf32> to vector<2x1x256xf32>
    %291 = vector.broadcast %290 : vector<2x1x256xf32> to vector<2x2x256xf32>
    %292 = arith.mulf %291, %287 : vector<2x2x256xf32>
    %293 = arith.addf %286, %292 : vector<2x2x256xf32>
    %c0_176 = arith.constant 0 : index
    %c0_177 = arith.constant 0 : index
    %c162 = arith.constant 162 : index
    %294 = vector.load %arg5[%c0_176, %c0_177, %c162] : memref<2x2x512xf32, #tpu.memory_space<vmem>>, vector<2x2x256xf32>
    %c40 = arith.constant 40 : index
    %c0_178 = arith.constant 0 : index
    %c0_179 = arith.constant 0 : index
    %295 = vector.load %arg2[%c40, %c0_178, %c0_179] : memref<49x2x256xf32, #tpu.memory_space<vmem>>, vector<1x2x256xf32>
    %296 = vector.shape_cast %295 : vector<1x2x256xf32> to vector<2x256xf32>
    %297 = vector.shape_cast %296 : vector<2x256xf32> to vector<2x1x256xf32>
    %298 = vector.broadcast %297 : vector<2x1x256xf32> to vector<2x2x256xf32>
    %299 = arith.mulf %298, %294 : vector<2x2x256xf32>
    %300 = arith.addf %293, %299 : vector<2x2x256xf32>
    %c0_180 = arith.constant 0 : index
    %c0_181 = arith.constant 0 : index
    %c163 = arith.constant 163 : index
    %301 = vector.load %arg5[%c0_180, %c0_181, %c163] : memref<2x2x512xf32, #tpu.memory_space<vmem>>, vector<2x2x256xf32>
    %c41 = arith.constant 41 : index
    %c0_182 = arith.constant 0 : index
    %c0_183 = arith.constant 0 : index
    %302 = vector.load %arg2[%c41, %c0_182, %c0_183] : memref<49x2x256xf32, #tpu.memory_space<vmem>>, vector<1x2x256xf32>
    %303 = vector.shape_cast %302 : vector<1x2x256xf32> to vector<2x256xf32>
    %304 = vector.shape_cast %303 : vector<2x256xf32> to vector<2x1x256xf32>
    %305 = vector.broadcast %304 : vector<2x1x256xf32> to vector<2x2x256xf32>
    %306 = arith.mulf %305, %301 : vector<2x2x256xf32>
    %307 = arith.addf %300, %306 : vector<2x2x256xf32>
    %c0_184 = arith.constant 0 : index
    %c0_185 = arith.constant 0 : index
    %c173 = arith.constant 173 : index
    %308 = vector.load %arg5[%c0_184, %c0_185, %c173] : memref<2x2x512xf32, #tpu.memory_space<vmem>>, vector<2x2x256xf32>
    %c42 = arith.constant 42 : index
    %c0_186 = arith.constant 0 : index
    %c0_187 = arith.constant 0 : index
    %309 = vector.load %arg2[%c42, %c0_186, %c0_187] : memref<49x2x256xf32, #tpu.memory_space<vmem>>, vector<1x2x256xf32>
    %310 = vector.shape_cast %309 : vector<1x2x256xf32> to vector<2x256xf32>
    %311 = vector.shape_cast %310 : vector<2x256xf32> to vector<2x1x256xf32>
    %312 = vector.broadcast %311 : vector<2x1x256xf32> to vector<2x2x256xf32>
    %313 = arith.mulf %312, %308 : vector<2x2x256xf32>
    %314 = arith.addf %307, %313 : vector<2x2x256xf32>
    %c0_188 = arith.constant 0 : index
    %c0_189 = arith.constant 0 : index
    %c174 = arith.constant 174 : index
    %315 = vector.load %arg5[%c0_188, %c0_189, %c174] : memref<2x2x512xf32, #tpu.memory_space<vmem>>, vector<2x2x256xf32>
    %c43 = arith.constant 43 : index
    %c0_190 = arith.constant 0 : index
    %c0_191 = arith.constant 0 : index
    %316 = vector.load %arg2[%c43, %c0_190, %c0_191] : memref<49x2x256xf32, #tpu.memory_space<vmem>>, vector<1x2x256xf32>
    %317 = vector.shape_cast %316 : vector<1x2x256xf32> to vector<2x256xf32>
    %318 = vector.shape_cast %317 : vector<2x256xf32> to vector<2x1x256xf32>
    %319 = vector.broadcast %318 : vector<2x1x256xf32> to vector<2x2x256xf32>
    %320 = arith.mulf %319, %315 : vector<2x2x256xf32>
    %321 = arith.addf %314, %320 : vector<2x2x256xf32>
    %c0_192 = arith.constant 0 : index
    %c0_193 = arith.constant 0 : index
    %c175 = arith.constant 175 : index
    %322 = vector.load %arg5[%c0_192, %c0_193, %c175] : memref<2x2x512xf32, #tpu.memory_space<vmem>>, vector<2x2x256xf32>
    %c44 = arith.constant 44 : index
    %c0_194 = arith.constant 0 : index
    %c0_195 = arith.constant 0 : index
    %323 = vector.load %arg2[%c44, %c0_194, %c0_195] : memref<49x2x256xf32, #tpu.memory_space<vmem>>, vector<1x2x256xf32>
    %324 = vector.shape_cast %323 : vector<1x2x256xf32> to vector<2x256xf32>
    %325 = vector.shape_cast %324 : vector<2x256xf32> to vector<2x1x256xf32>
    %326 = vector.broadcast %325 : vector<2x1x256xf32> to vector<2x2x256xf32>
    %327 = arith.mulf %326, %322 : vector<2x2x256xf32>
    %328 = arith.addf %321, %327 : vector<2x2x256xf32>
    %c0_196 = arith.constant 0 : index
    %c0_197 = arith.constant 0 : index
    %c176 = arith.constant 176 : index
    %329 = vector.load %arg5[%c0_196, %c0_197, %c176] : memref<2x2x512xf32, #tpu.memory_space<vmem>>, vector<2x2x256xf32>
    %c45 = arith.constant 45 : index
    %c0_198 = arith.constant 0 : index
    %c0_199 = arith.constant 0 : index
    %330 = vector.load %arg2[%c45, %c0_198, %c0_199] : memref<49x2x256xf32, #tpu.memory_space<vmem>>, vector<1x2x256xf32>
    %331 = vector.shape_cast %330 : vector<1x2x256xf32> to vector<2x256xf32>
    %332 = vector.shape_cast %331 : vector<2x256xf32> to vector<2x1x256xf32>
    %333 = vector.broadcast %332 : vector<2x1x256xf32> to vector<2x2x256xf32>
    %334 = arith.mulf %333, %329 : vector<2x2x256xf32>
    %335 = arith.addf %328, %334 : vector<2x2x256xf32>
    %c0_200 = arith.constant 0 : index
    %c0_201 = arith.constant 0 : index
    %c177 = arith.constant 177 : index
    %336 = vector.load %arg5[%c0_200, %c0_201, %c177] : memref<2x2x512xf32, #tpu.memory_space<vmem>>, vector<2x2x256xf32>
    %c46 = arith.constant 46 : index
    %c0_202 = arith.constant 0 : index
    %c0_203 = arith.constant 0 : index
    %337 = vector.load %arg2[%c46, %c0_202, %c0_203] : memref<49x2x256xf32, #tpu.memory_space<vmem>>, vector<1x2x256xf32>
    %338 = vector.shape_cast %337 : vector<1x2x256xf32> to vector<2x256xf32>
    %339 = vector.shape_cast %338 : vector<2x256xf32> to vector<2x1x256xf32>
    %340 = vector.broadcast %339 : vector<2x1x256xf32> to vector<2x2x256xf32>
    %341 = arith.mulf %340, %336 : vector<2x2x256xf32>
    %342 = arith.addf %335, %341 : vector<2x2x256xf32>
    %c0_204 = arith.constant 0 : index
    %c0_205 = arith.constant 0 : index
    %c178 = arith.constant 178 : index
    %343 = vector.load %arg5[%c0_204, %c0_205, %c178] : memref<2x2x512xf32, #tpu.memory_space<vmem>>, vector<2x2x256xf32>
    %c47 = arith.constant 47 : index
    %c0_206 = arith.constant 0 : index
    %c0_207 = arith.constant 0 : index
    %344 = vector.load %arg2[%c47, %c0_206, %c0_207] : memref<49x2x256xf32, #tpu.memory_space<vmem>>, vector<1x2x256xf32>
    %345 = vector.shape_cast %344 : vector<1x2x256xf32> to vector<2x256xf32>
    %346 = vector.shape_cast %345 : vector<2x256xf32> to vector<2x1x256xf32>
    %347 = vector.broadcast %346 : vector<2x1x256xf32> to vector<2x2x256xf32>
    %348 = arith.mulf %347, %343 : vector<2x2x256xf32>
    %349 = arith.addf %342, %348 : vector<2x2x256xf32>
    %c0_208 = arith.constant 0 : index
    %c0_209 = arith.constant 0 : index
    %c179 = arith.constant 179 : index
    %350 = vector.load %arg5[%c0_208, %c0_209, %c179] : memref<2x2x512xf32, #tpu.memory_space<vmem>>, vector<2x2x256xf32>
    %c48 = arith.constant 48 : index
    %c0_210 = arith.constant 0 : index
    %c0_211 = arith.constant 0 : index
    %351 = vector.load %arg2[%c48, %c0_210, %c0_211] : memref<49x2x256xf32, #tpu.memory_space<vmem>>, vector<1x2x256xf32>
    %352 = vector.shape_cast %351 : vector<1x2x256xf32> to vector<2x256xf32>
    %353 = vector.shape_cast %352 : vector<2x256xf32> to vector<2x1x256xf32>
    %354 = vector.broadcast %353 : vector<2x1x256xf32> to vector<2x2x256xf32>
    %355 = arith.mulf %354, %350 : vector<2x2x256xf32>
    %356 = arith.addf %349, %355 : vector<2x2x256xf32>
    %357 = vector.extract_strided_slice %356 {offsets = [0, 0, 0], sizes = [1, 2, 256], strides = [1, 1, 1]} : vector<2x2x256xf32> to vector<1x2x256xf32>
    %358 = vector.shape_cast %357 : vector<1x2x256xf32> to vector<2x256xf32>
    %359 = vector.extract_strided_slice %356 {offsets = [1, 0, 0], sizes = [1, 2, 256], strides = [1, 1, 1]} : vector<2x2x256xf32> to vector<1x2x256xf32>
    %360 = vector.shape_cast %359 : vector<1x2x256xf32> to vector<2x256xf32>
    %361 = arith.addf %358, %360 : vector<2x256xf32>
    %c0_212 = arith.constant 0 : index
    %362 = memref.load %arg3[%c0_212] : memref<1xf32, #tpu.memory_space<smem>>
    %363 = vector.broadcast %362 : f32 to vector<2x256xf32>
    %364 = arith.addf %361, %363 : vector<2x256xf32>
    %365 = arith.negf %364 : vector<2x256xf32>
    %366 = math.exp %365 : vector<2x256xf32>
    %cst_213 = arith.constant 1.000000e+00 : f32
    %367 = vector.broadcast %cst_213 : f32 to vector<2x256xf32>
    %368 = arith.addf %367, %366 : vector<2x256xf32>
    %369 = arith.divf %367, %368 : vector<2x256xf32>
    %c0_214 = arith.constant 0 : index
    %c0_215 = arith.constant 0 : index
    %c0_216 = arith.constant 0 : index
    %370 = vector.load %arg1[%c0_214, %c0_215, %c0_216] : memref<2x4x256xf32, #tpu.memory_space<vmem>>, vector<2x4x256xf32>
    %371 = vector.shape_cast %369 : vector<2x256xf32> to vector<2x1x256xf32>
    %372 = vector.broadcast %371 : vector<2x1x256xf32> to vector<2x4x256xf32>
    %373 = arith.mulf %370, %372 : vector<2x4x256xf32>
    %c0_217 = arith.constant 0 : index
    %c0_218 = arith.constant 0 : index
    %c0_219 = arith.constant 0 : index
    %374 = vector.load %arg4[%c0_217, %c0_218, %c0_219] : memref<2x4x256xf32, #tpu.memory_space<vmem>>, vector<2x4x256xf32>
    tpu.vector_store %arg4[%c0_217, %c0_218, %c0_219], %373 {strides = array<i32>} : memref<2x4x256xf32, #tpu.memory_space<vmem>>, vector<2x4x256xf32>,
    return
  }
  func.func @transform_0(%arg0: i32) -> (i32, i32, i32) {
    %c0_i32 = arith.constant 0 : i32
    %c0_i32_0 = arith.constant 0 : i32
    %c0_i32_1 = arith.constant 0 : i32
    return %arg0, %c0_i32, %c0_i32_0 : i32, i32, i32
  }
  func.func @transform_1(%arg0: i32) -> (i32, i32, i32) {
    %c0_i32 = arith.constant 0 : i32
    %c0_i32_0 = arith.constant 0 : i32
    %c0_i32_1 = arith.constant 0 : i32
    %c0_i32_2 = arith.constant 0 : i32
    return %c0_i32, %c0_i32_0, %c0_i32_1 : i32, i32, i32
  }
  func.func @transform_2(%arg0: i32) -> i32 {
    %c0_i32 = arith.constant 0 : i32
    %c0_i32_0 = arith.constant 0 : i32
    return %c0_i32 : i32
  }
  func.func @transform_3(%arg0: i32) -> (i32, i32, i32) {
    %c0_i32 = arith.constant 0 : i32
    %c0_i32_0 = arith.constant 0 : i32
    %c0_i32_1 = arith.constant 0 : i32
    return %arg0, %c0_i32, %c0_i32_0 : i32, i32, i32
  }
}

</mosaic_0001>

<llo_original>
// kernel: tpu_custom_call.1
$region0: #{tpu_custom_call.1}
  #allocation0 [shape = 'u32[]', space=smem, size = 0x4, offset = 0x4, fixed_abs, tag = 'smem constant byte address 0x4 - core index']
  #allocation1 [shape = 'u32[144,128]{1,0:T(1,128)}', space=vmem, size = 0x12000, scoped, tag = 'internal scratch']
  #allocation2 [shape = 'f32[2,2,512]{2,1,0:T(2,128)}', space=vmem, size = 0x2000, scoped, tag = 'scratch operand']
  #allocation3 [shape = 'f32[1]{0:T(128)S(6)}', space=smem, size = 0x200, scoped, tag = 'scoped memory for tpu_custom_call.1']
  %s0 = inlined_call_operand.hbm [shape: f32[2,4,256], index: 0, kind: input, shape index: {}]
  %s1 = inlined_call_operand.hbm [shape: f32[49,2,256], index: 1, kind: input, shape index: {}]
  %s2 = inlined_call_operand.<no memory space> [shape: f32[1], index: 2, kind: input, shape index: {}]
  %s3 = inlined_call_operand.hbm [shape: f32[2,4,256], index: 3, kind: output, shape index: {}]
  %s4 = sld [smem:[#allocation0]]
  $region30: #{tpu_custom_call.1} parent=0
    _
  %s6 = ssub.s32 1, %s4
  %s7 = scalar_select 0, %s6, %s4
  %8 = sst [smem:[#allocation3]] %s2
  $region1: #{tpu_custom_call.1} parent=0
    #allocation4 [shape = 'u8[8192]{0}', space=vmem, size = 0x2000, scoped, tag = 'input window, operand 0, single buffered']
    #allocation5 [shape = 's32[1]{0}', space=sflag, size = 0x4, scoped, tag = 'scoped memory for tpu_custom_call.1']
    #allocation6 [shape = 's32[1]{0}', space=sflag, size = 0x4, scoped, tag = 'scoped memory for tpu_custom_call.1']
    #allocation7 [shape = 'u8[100352]{0}', space=vmem, size = 0x18800, scoped, tag = 'input window, operand 1, single buffered']
    #allocation8 [shape = 's32[1]{0}', space=sflag, size = 0x4, scoped, tag = 'scoped memory for tpu_custom_call.1']
    #allocation9 [shape = 'u8[8192]{0}', space=vmem, size = 0x2000, scoped, tag = 'output window, operand 0, single buffered']
    %9 = vsyncpa [#allocation5], 0
    %10 = vsyncpa [#allocation8], 0
    %11 = vsyncpa [#allocation6], 0
    // Predicated region
    $region2: #{tpu_custom_call.1} parent=1 // pred_check
      _
    $region3: #{tpu_custom_call.1} parent=1 // pred_check_branch
      %13 = sbr.rel (0) target = $region5
    $region4: #{tpu_custom_call.1} parent=1 // pred_region
      %s15 = ssub.s32 256, 256
      %16 = vsyncadd [#allocation5], %s15
      %s17 = sshll.u32 [#allocation4], 4
      %s18 = int_to_ptr.vmem [resolvable:$true] %s17
      %23 = dma.hbm_to_vmem [thread:$0]  %s0, 256, %s18, [#allocation5], 128, 128, 8
    $region5: #{tpu_custom_call.1} parent=1 // pred_fallthru
      _
    // Predicated region
    $region6: #{tpu_custom_call.1} parent=1 // pred_check
      _
    $region7: #{tpu_custom_call.1} parent=1 // pred_check_branch
      %25 = sbr.rel (0) target = $region9
    $region8: #{tpu_custom_call.1} parent=1 // pred_region
      %s27 = ssub.s32 3136, 3136
      %28 = vsyncadd [#allocation8], %s27
      %s29 = sshll.u32 [#allocation7], 4
      %s30 = int_to_ptr.vmem [resolvable:$true] %s29
      %35 = dma.hbm_to_vmem [thread:$0]  %s1, 3136, %s30, [#allocation8], 64, 64, 4
    $region9: #{tpu_custom_call.1} parent=1 // pred_fallthru
      _
    // Predicated region
    $region10: #{tpu_custom_call.1} parent=1 // pred_check
      _
    $region11: #{tpu_custom_call.1} parent=1 // pred_check_branch
      %37 = sbr.rel (0) target = $region13
    $region12: #{tpu_custom_call.1} parent=1 // pred_region
      _
    $region13: #{tpu_custom_call.1} parent=1 // pred_fallthru
      _
    // Predicated region
    $region14: #{tpu_custom_call.1} parent=1 // pred_check
      _
    $region15: #{tpu_custom_call.1} parent=1 // pred_check_branch
      %39 = sbr.rel (0) target = $region17
    $region16: #{tpu_custom_call.1} parent=1 // pred_region
      %40 = dma.done [#allocation5], 256
    $region17: #{tpu_custom_call.1} parent=1 // pred_fallthru
      _
    // Predicated region
    $region18: #{tpu_custom_call.1} parent=1 // pred_check
      _
    $region19: #{tpu_custom_call.1} parent=1 // pred_check_branch
      %42 = sbr.rel (0) target = $region21
    $region20: #{tpu_custom_call.1} parent=1 // pred_region
      %43 = dma.done [#allocation8], 3136
    $region21: #{tpu_custom_call.1} parent=1 // pred_fallthru
      _
    %v44 = vld [vmem:[#allocation4] sm:$0xff]
    %v45 = vld [vmem:[#allocation4 + $0x8] sm:$0xff]
    %v48 = vcombine.high %v44, %v44
    %v49 = vcombine.high %v45, %v45
    %vm52 = vcmask 1043456
    %v53 = vsel %vm52, %v44, -inf
    %v54 = vrot.slane %v53, 4
    %v55 = vmax.f32 %v53, %v54
    %v56 = vrot.slane %v55, 2
    %v57 = vmax.f32 %v55, %v56
    %v58 = vrot.slane %v57, 1
    %v59 = vmax.f32 %v57, %v58
    %v60 = vsel %vm52, %v48, -inf
    %v61 = vrot.slane %v60, 4
    %v62 = vmax.f32 %v60, %v61
    %v63 = vrot.slane %v62, 2
    %v64 = vmax.f32 %v62, %v63
    %v65 = vrot.slane %v64, 1
    %v66 = vmax.f32 %v64, %v65
    %v67 = vsel %vm52, %v45, -inf
    %v68 = vrot.slane %v67, 4
    %v69 = vmax.f32 %v67, %v68
    %v70 = vrot.slane %v69, 2
    %v71 = vmax.f32 %v69, %v70
    %v72 = vrot.slane %v71, 1
    %v73 = vmax.f32 %v71, %v72
    %v74 = vsel %vm52, %v49, -inf
    %v75 = vrot.slane %v74, 4
    %v76 = vmax.f32 %v74, %v75
    %v77 = vrot.slane %v76, 2
    %v78 = vmax.f32 %v76, %v77
    %v79 = vrot.slane %v78, 1
    %v80 = vmax.f32 %v78, %v79
    %v81 = vsel %vm52, %v44, 0.0
    %v82 = vrot.slane %v81, 4
    %v83 = vadd.f32 %v81, %v82
    %v84 = vrot.slane %v83, 2
    %v85 = vadd.f32 %v83, %v84
    %v86 = vrot.slane %v85, 1
    %v87 = vadd.f32 %v85, %v86
    %v88 = vsel %vm52, %v48, 0.0
    %v89 = vrot.slane %v88, 4
    %v90 = vadd.f32 %v88, %v89
    %v91 = vrot.slane %v90, 2
    %v92 = vadd.f32 %v90, %v91
    %v93 = vrot.slane %v92, 1
    %v94 = vadd.f32 %v92, %v93
    %v95 = vsel %vm52, %v45, 0.0
    %v96 = vrot.slane %v95, 4
    %v97 = vadd.f32 %v95, %v96
    %v98 = vrot.slane %v97, 2
    %v99 = vadd.f32 %v97, %v98
    %v100 = vrot.slane %v99, 1
    %v101 = vadd.f32 %v99, %v100
    %v102 = vsel %vm52, %v49, 0.0
    %v103 = vrot.slane %v102, 4
    %v104 = vadd.f32 %v102, %v103
    %v105 = vrot.slane %v104, 2
    %v106 = vadd.f32 %v104, %v105
    %v107 = vrot.slane %v106, 1
    %v108 = vadd.f32 %v106, %v107
    %v109 = vrcp.pop 4.0
    %v110 = vmul.f32 %v87, %v109
    %v111 = vmul.f32 %v94, %v109
    %v112 = vmul.f32 %v101, %v109
    %v113 = vmul.f32 %v108, %v109
    %114 = vst [vmem:[#allocation2] sm:$0xff] 0.0
    %115 = vst [vmem:[#allocation2 + $0x8] sm:$0xff] 0.0
    %v120 = vcombine.low %v59, %v66
    %v122 = vunpack.c.l.s4 1983009808
    %v123 = vunpack.c.0.s8 %v122
    %v124 = vlaneseq
    %v125 = vshrl.u32 %v124, 7
    %v126 = vsub.s32 %v123, %v125
    %v127 = vrot.slane %v120, %v126
    %v128 = vcombine.low %v73, %v80
    %v130 = vunpack.c.l.s4 1983009808
    %v131 = vunpack.c.0.s8 %v130
    %v132 = vlaneseq
    %v133 = vshrl.u32 %v132, 7
    %v134 = vsub.s32 %v131, %v133
    %v135 = vrot.slane %v128, %v134
    %vm136 = vcmask 1044484
    %v137 = vsel %vm136, %v127, %v127
    %vm138 = vcmask 1046534
    %v139 = vsel %vm138, %v127, %v137
    %v140 = vrot.slane %v135, 7
    %vm141 = vcmask 1041409
    %v142 = vsel %vm141, %v140, %v139
    %vm143 = vcmask 1043459
    %v144 = vsel %vm143, %v140, %v142
    %vm145 = vcmask 1045509
    %v146 = vsel %vm145, %v140, %v144
    %vm147 = vcmask 1047559
    %v148 = vsel %vm147, %v140, %v146
    %150 = vst [vmem:[#allocation2 + $0x2] sm:$0xf] %v148
    %v155 = vcombine.low %v110, %v111
    %v157 = vunpack.c.l.s4 1983009808
    %v158 = vunpack.c.0.s8 %v157
    %v159 = vlaneseq
    %v160 = vshrl.u32 %v159, 7
    %v161 = vsub.s32 %v158, %v160
    %v162 = vrot.slane %v155, %v161
    %v163 = vcombine.low %v112, %v113
    %v165 = vunpack.c.l.s4 1983009808
    %v166 = vunpack.c.0.s8 %v165
    %v167 = vlaneseq
    %v168 = vshrl.u32 %v167, 7
    %v169 = vsub.s32 %v166, %v168
    %v170 = vrot.slane %v163, %v169
    %v171 = vsel %vm136, %v162, %v162
    %v172 = vsel %vm138, %v162, %v171
    %v173 = vrot.slane %v170, 7
    %v174 = vsel %vm141, %v173, %v172
    %v175 = vsel %vm143, %v173, %v174
    %v176 = vsel %vm145, %v173, %v175
    %v177 = vsel %vm147, %v173, %v176
    %s179 = scalar_lea.vmem [#allocation2], 8
    %180 = vst [vmem:[%s179 + $0x2] sm:$0xf] %v177
    %v181 = vld [vmem:[#allocation2] sm:$0x3f]
    %v182 = vld [vmem:[#allocation2 + $0x8] sm:$0x3f]
    %v183 = vld [vmem:[#allocation7] sm:$0xf]
    %v186 = vunpack.c.l.s4 1966171168
    %v187 = vunpack.c.0.s8 %v186
    %v188 = vlaneseq
    %v189 = vshrl.u32 %v188, 7
    %v190 = vsub.s32 %v187, %v189
    %v191 = vrot.slane %v183, %v190
    %v192 = vcombine.high %v191, %v191
    %v193 = vlaneseq
    %v194 = vshrl.u32 %v193, 7
    %v195 = vsub.s32 0, %v194
    %v196 = vrot.slane %v191, %v195
    %v197 = vlaneseq
    %v198 = vshrl.u32 %v197, 7
    %v199 = vsub.s32 1, %v198
    %v200 = vrot.slane %v191, %v199
    %v201 = vlaneseq
    %v202 = vshrl.u32 %v201, 7
    %v203 = vsub.s32 0, %v202
    %v204 = vrot.slane %v192, %v203
    %v205 = vlaneseq
    %v206 = vshrl.u32 %v205, 7
    %v207 = vsub.s32 1, %v206
    %v208 = vrot.slane %v192, %v207
    %v215 = vcombine.high %v181, %v181
    %v217 = vunpack.c.l.s4 1983009808
    %v218 = vunpack.c.0.s8 %v217
    %v219 = vlaneseq
    %v220 = vshrl.u32 %v219, 7
    %v221 = vsub.s32 %v218, %v220
    %v222 = vrot.slane %v181, %v221
    %v224 = vunpack.c.l.s4 1983009808
    %v225 = vunpack.c.0.s8 %v224
    %v226 = vlaneseq
    %v227 = vshrl.u32 %v226, 7
    %v228 = vsub.s32 %v225, %v227
    %v229 = vrot.slane %v215, %v228
    %v230 = vcombine.high %v222, %v222
    %v231 = vcombine.high %v182, %v182
    %v233 = vunpack.c.l.s4 1983009808
    %v234 = vunpack.c.0.s8 %v233
    %v235 = vlaneseq
    %v236 = vshrl.u32 %v235, 7
    %v237 = vsub.s32 %v234, %v236
    %v238 = vrot.slane %v182, %v237
    %v240 = vunpack.c.l.s4 1983009808
    %v241 = vunpack.c.0.s8 %v240
    %v242 = vlaneseq
    %v243 = vshrl.u32 %v242, 7
    %v244 = vsub.s32 %v241, %v243
    %v245 = vrot.slane %v231, %v244
    %v246 = vcombine.high %v238, %v238
    %247 = vrot.lane.b32.xlu0 %v222, 51
    %v248 = vpop.permute.xlu0 %247
    %249 = vrot.lane.b32.xlu0 %v230, 51
    %v250 = vpop.permute.xlu0 %249
    %251 = vrot.lane.b32.xlu0 %v229, 51
    %v252 = vpop.permute.xlu0 %251
    %253 = vrot.lane.b32.xlu0 %v238, 51
    %v254 = vpop.permute.xlu0 %253
    %255 = vrot.lane.b32.xlu0 %v246, 51
    %v256 = vpop.permute.xlu0 %255
    %257 = vrot.lane.b32.xlu0 %v245, 51
    %v258 = vpop.permute.xlu0 %257
    %vm259 = vcmask 416768
    %v260 = vsel %vm259, %v248, %v250
    %v261 = vsel %vm259, %v250, %v252
    %v262 = vsel %vm259, %v254, %v256
    %v263 = vsel %vm259, %v256, %v258
    %v268 = vmul.f32 %v196, %v260
    %v269 = vmul.f32 %v200, %v261
    %v270 = vmul.f32 %v204, %v262
    %v271 = vmul.f32 %v208, %v263
    %v272 = vadd.f32 %v268, 0.0
    %v273 = vadd.f32 %v269, 0.0
    %v274 = vadd.f32 %v270, 0.0
    %v275 = vadd.f32 %v271, 0.0
    %s276 = scalar_lea.vmem [#allocation7], 4
    %v277 = vld [vmem:[%s276] sm:$0xf]
    %v280 = vunpack.c.l.s4 1966171168
    %v281 = vunpack.c.0.s8 %v280
    %v282 = vlaneseq
    %v283 = vshrl.u32 %v282, 7
    %v284 = vsub.s32 %v281, %v283
    %v285 = vrot.slane %v277, %v284
    %v286 = vcombine.high %v285, %v285
    %v287 = vlaneseq
    %v288 = vshrl.u32 %v287, 7
    %v289 = vsub.s32 0, %v288
    %v290 = vrot.slane %v285, %v289
    %v291 = vlaneseq
    %v292 = vshrl.u32 %v291, 7
    %v293 = vsub.s32 1, %v292
    %v294 = vrot.slane %v285, %v293
    %v295 = vlaneseq
    %v296 = vshrl.u32 %v295, 7
    %v297 = vsub.s32 0, %v296
    %v298 = vrot.slane %v286, %v297
    %v299 = vlaneseq
    %v300 = vshrl.u32 %v299, 7
    %v301 = vsub.s32 1, %v300
    %v302 = vrot.slane %v286, %v301
    %307 = vrot.lane.b32.xlu0 %v222, 50
    %v308 = vpop.permute.xlu0 %307
    %309 = vrot.lane.b32.xlu0 %v230, 50
    %v310 = vpop.permute.xlu0 %309
    %311 = vrot.lane.b32.xlu0 %v229, 50
    %v312 = vpop.permute.xlu0 %311
    %313 = vrot.lane.b32.xlu0 %v238, 50
    %v314 = vpop.permute.xlu0 %313
    %315 = vrot.lane.b32.xlu0 %v246, 50
    %v316 = vpop.permute.xlu0 %315
    %317 = vrot.lane.b32.xlu0 %v245, 50
    %v318 = vpop.permute.xlu0 %317
    %vm319 = vcmask 408576
    %v320 = vsel %vm319, %v308, %v310
    %v321 = vsel %vm319, %v310, %v312
    %v322 = vsel %vm319, %v314, %v316
    %v323 = vsel %vm319, %v316, %v318
    %v328 = vmul.f32 %v290, %v320
    %v329 = vmul.f32 %v294, %v321
    %v330 = vmul.f32 %v298, %v322
    %v331 = vmul.f32 %v302, %v323
    %v332 = vadd.f32 %v272, %v328
    %v333 = vadd.f32 %v273, %v329
    %v334 = vadd.f32 %v274, %v330
    %v335 = vadd.f32 %v275, %v331
    %s336 = scalar_lea.vmem [#allocation7], 8
    %v337 = vld [vmem:[%s336] sm:$0xf]
    %v340 = vunpack.c.l.s4 1966171168
    %v341 = vunpack.c.0.s8 %v340
    %v342 = vlaneseq
    %v343 = vshrl.u32 %v342, 7
    %v344 = vsub.s32 %v341, %v343
    %v345 = vrot.slane %v337, %v344
    %v346 = vcombine.high %v345, %v345
    %v347 = vlaneseq
    %v348 = vshrl.u32 %v347, 7
    %v349 = vsub.s32 0, %v348
    %v350 = vrot.slane %v345, %v349
    %v351 = vlaneseq
    %v352 = vshrl.u32 %v351, 7
    %v353 = vsub.s32 1, %v352
    %v354 = vrot.slane %v345, %v353
    %v355 = vlaneseq
    %v356 = vshrl.u32 %v355, 7
    %v357 = vsub.s32 0, %v356
    %v358 = vrot.slane %v346, %v357
    %v359 = vlaneseq
    %v360 = vshrl.u32 %v359, 7
    %v361 = vsub.s32 1, %v360
    %v362 = vrot.slane %v346, %v361
    %367 = vrot.lane.b32.xlu0 %v222, 49
    %v368 = vpop.permute.xlu0 %367
    %369 = vrot.lane.b32.xlu0 %v230, 49
    %v370 = vpop.permute.xlu0 %369
    %371 = vrot.lane.b32.xlu0 %v229, 49
    %v372 = vpop.permute.xlu0 %371
    %373 = vrot.lane.b32.xlu0 %v238, 49
    %v374 = vpop.permute.xlu0 %373
    %375 = vrot.lane.b32.xlu0 %v246, 49
    %v376 = vpop.permute.xlu0 %375
    %377 = vrot.lane.b32.xlu0 %v245, 49
    %v378 = vpop.permute.xlu0 %377
    %vm379 = vcmask 400384
    %v380 = vsel %vm379, %v368, %v370
    %v381 = vsel %vm379, %v370, %v372
    %v382 = vsel %vm379, %v374, %v376
    %v383 = vsel %vm379, %v376, %v378
    %v388 = vmul.f32 %v350, %v380
    %v389 = vmul.f32 %v354, %v381
    %v390 = vmul.f32 %v358, %v382
    %v391 = vmul.f32 %v362, %v383
    %v392 = vadd.f32 %v332, %v388
    %v393 = vadd.f32 %v333, %v389
    %v394 = vadd.f32 %v334, %v390
    %v395 = vadd.f32 %v335, %v391
    %s396 = scalar_lea.vmem [#allocation7], 12
    %v397 = vld [vmem:[%s396] sm:$0xf]
    %v400 = vunpack.c.l.s4 1966171168
    %v401 = vunpack.c.0.s8 %v400
    %v402 = vlaneseq
    %v403 = vshrl.u32 %v402, 7
    %v404 = vsub.s32 %v401, %v403
    %v405 = vrot.slane %v397, %v404
    %v406 = vcombine.high %v405, %v405
    %v407 = vlaneseq
    %v408 = vshrl.u32 %v407, 7
    %v409 = vsub.s32 0, %v408
    %v410 = vrot.slane %v405, %v409
    %v411 = vlaneseq
    %v412 = vshrl.u32 %v411, 7
    %v413 = vsub.s32 1, %v412
    %v414 = vrot.slane %v405, %v413
    %v415 = vlaneseq
    %v416 = vshrl.u32 %v415, 7
    %v417 = vsub.s32 0, %v416
    %v418 = vrot.slane %v406, %v417
    %v419 = vlaneseq
    %v420 = vshrl.u32 %v419, 7
    %v421 = vsub.s32 1, %v420
    %v422 = vrot.slane %v406, %v421
    %427 = vrot.lane.b32.xlu0 %v222, 48
    %v428 = vpop.permute.xlu0 %427
    %429 = vrot.lane.b32.xlu0 %v230, 48
    %v430 = vpop.permute.xlu0 %429
    %431 = vrot.lane.b32.xlu0 %v229, 48
    %v432 = vpop.permute.xlu0 %431
    %433 = vrot.lane.b32.xlu0 %v238, 48
    %v434 = vpop.permute.xlu0 %433
    %435 = vrot.lane.b32.xlu0 %v246, 48
    %v436 = vpop.permute.xlu0 %435
    %437 = vrot.lane.b32.xlu0 %v245, 48
    %v438 = vpop.permute.xlu0 %437
    %vm439 = vcmask 392192
    %v440 = vsel %vm439, %v428, %v430
    %v441 = vsel %vm439, %v430, %v432
    %v442 = vsel %vm439, %v434, %v436
    %v443 = vsel %vm439, %v436, %v438
    %v448 = vmul.f32 %v410, %v440
    %v449 = vmul.f32 %v414, %v441
    %v450 = vmul.f32 %v418, %v442
    %v451 = vmul.f32 %v422, %v443
    %v452 = vadd.f32 %v392, %v448
    %v453 = vadd.f32 %v393, %v449
    %v454 = vadd.f32 %v394, %v450
    %v455 = vadd.f32 %v395, %v451
    %s456 = scalar_lea.vmem [#allocation7], 16
    %v457 = vld [vmem:[%s456] sm:$0xf]
    %v460 = vunpack.c.l.s4 1966171168
    %v461 = vunpack.c.0.s8 %v460
    %v462 = vlaneseq
    %v463 = vshrl.u32 %v462, 7
    %v464 = vsub.s32 %v461, %v463
    %v465 = vrot.slane %v457, %v464
    %v466 = vcombine.high %v465, %v465
    %v467 = vlaneseq
    %v468 = vshrl.u32 %v467, 7
    %v469 = vsub.s32 0, %v468
    %v470 = vrot.slane %v465, %v469
    %v471 = vlaneseq
    %v472 = vshrl.u32 %v471, 7
    %v473 = vsub.s32 1, %v472
    %v474 = vrot.slane %v465, %v473
    %v475 = vlaneseq
    %v476 = vshrl.u32 %v475, 7
    %v477 = vsub.s32 0, %v476
    %v478 = vrot.slane %v466, %v477
    %v479 = vlaneseq
    %v480 = vshrl.u32 %v479, 7
    %v481 = vsub.s32 1, %v480
    %v482 = vrot.slane %v466, %v481
    %487 = vrot.lane.b32.xlu0 %v222, 47
    %v488 = vpop.permute.xlu0 %487
    %489 = vrot.lane.b32.xlu0 %v230, 47
    %v490 = vpop.permute.xlu0 %489
    %491 = vrot.lane.b32.xlu0 %v229, 47
    %v492 = vpop.permute.xlu0 %491
    %493 = vrot.lane.b32.xlu0 %v238, 47
    %v494 = vpop.permute.xlu0 %493
    %495 = vrot.lane.b32.xlu0 %v246, 47
    %v496 = vpop.permute.xlu0 %495
    %497 = vrot.lane.b32.xlu0 %v245, 47
    %v498 = vpop.permute.xlu0 %497
    %vm499 = vcmask 384000
    %v500 = vsel %vm499, %v488, %v490
    %v501 = vsel %vm499, %v490, %v492
    %v502 = vsel %vm499, %v494, %v496
    %v503 = vsel %vm499, %v496, %v498
    %v508 = vmul.f32 %v470, %v500
    %v509 = vmul.f32 %v474, %v501
    %v510 = vmul.f32 %v478, %v502
    %v511 = vmul.f32 %v482, %v503
    %v512 = vadd.f32 %v452, %v508
    %v513 = vadd.f32 %v453, %v509
    %v514 = vadd.f32 %v454, %v510
    %v515 = vadd.f32 %v455, %v511
    %s516 = scalar_lea.vmem [#allocation7], 20
    %v517 = vld [vmem:[%s516] sm:$0xf]
    %v520 = vunpack.c.l.s4 1966171168
    %v521 = vunpack.c.0.s8 %v520
    %v522 = vlaneseq
    %v523 = vshrl.u32 %v522, 7
    %v524 = vsub.s32 %v521, %v523
    %v525 = vrot.slane %v517, %v524
    %v526 = vcombine.high %v525, %v525
    %v527 = vlaneseq
    %v528 = vshrl.u32 %v527, 7
    %v529 = vsub.s32 0, %v528
    %v530 = vrot.slane %v525, %v529
    %v531 = vlaneseq
    %v532 = vshrl.u32 %v531, 7
    %v533 = vsub.s32 1, %v532
    %v534 = vrot.slane %v525, %v533
    %v535 = vlaneseq
    %v536 = vshrl.u32 %v535, 7
    %v537 = vsub.s32 0, %v536
    %v538 = vrot.slane %v526, %v537
    %v539 = vlaneseq
    %v540 = vshrl.u32 %v539, 7
    %v541 = vsub.s32 1, %v540
    %v542 = vrot.slane %v526, %v541
    %547 = vrot.lane.b32.xlu0 %v222, 46
    %v548 = vpop.permute.xlu0 %547
    %549 = vrot.lane.b32.xlu0 %v230, 46
    %v550 = vpop.permute.xlu0 %549
    %551 = vrot.lane.b32.xlu0 %v229, 46
    %v552 = vpop.permute.xlu0 %551
    %553 = vrot.lane.b32.xlu0 %v238, 46
    %v554 = vpop.permute.xlu0 %553
    %555 = vrot.lane.b32.xlu0 %v246, 46
    %v556 = vpop.permute.xlu0 %555
    %557 = vrot.lane.b32.xlu0 %v245, 46
    %v558 = vpop.permute.xlu0 %557
    %vm559 = vcmask 375808
    %v560 = vsel %vm559, %v548, %v550
    %v561 = vsel %vm559, %v550, %v552
    %v562 = vsel %vm559, %v554, %v556
    %v563 = vsel %vm559, %v556, %v558
    %v568 = vmul.f32 %v530, %v560
    %v569 = vmul.f32 %v534, %v561
    %v570 = vmul.f32 %v538, %v562
    %v571 = vmul.f32 %v542, %v563
    %v572 = vadd.f32 %v512, %v568
    %v573 = vadd.f32 %v513, %v569
    %v574 = vadd.f32 %v514, %v570
    %v575 = vadd.f32 %v515, %v571
    %s576 = scalar_lea.vmem [#allocation7], 24
    %v577 = vld [vmem:[%s576] sm:$0xf]
    %v580 = vunpack.c.l.s4 1966171168
    %v581 = vunpack.c.0.s8 %v580
    %v582 = vlaneseq
    %v583 = vshrl.u32 %v582, 7
    %v584 = vsub.s32 %v581, %v583
    %v585 = vrot.slane %v577, %v584
    %v586 = vcombine.high %v585, %v585
    %v587 = vlaneseq
    %v588 = vshrl.u32 %v587, 7
    %v589 = vsub.s32 0, %v588
    %v590 = vrot.slane %v585, %v589
    %v591 = vlaneseq
    %v592 = vshrl.u32 %v591, 7
    %v593 = vsub.s32 1, %v592
    %v594 = vrot.slane %v585, %v593
    %v595 = vlaneseq
    %v596 = vshrl.u32 %v595, 7
    %v597 = vsub.s32 0, %v596
    %v598 = vrot.slane %v586, %v597
    %v599 = vlaneseq
    %v600 = vshrl.u32 %v599, 7
    %v601 = vsub.s32 1, %v600
    %v602 = vrot.slane %v586, %v601
    %607 = vrot.lane.b32.xlu0 %v222, 45
    %v608 = vpop.permute.xlu0 %607
    %609 = vrot.lane.b32.xlu0 %v230, 45
    %v610 = vpop.permute.xlu0 %609
    %611 = vrot.lane.b32.xlu0 %v229, 45
    %v612 = vpop.permute.xlu0 %611
    %613 = vrot.lane.b32.xlu0 %v238, 45
    %v614 = vpop.permute.xlu0 %613
    %615 = vrot.lane.b32.xlu0 %v246, 45
    %v616 = vpop.permute.xlu0 %615
    %617 = vrot.lane.b32.xlu0 %v245, 45
    %v618 = vpop.permute.xlu0 %617
    %vm619 = vcmask 367616
    %v620 = vsel %vm619, %v608, %v610
    %v621 = vsel %vm619, %v610, %v612
    %v622 = vsel %vm619, %v614, %v616
    %v623 = vsel %vm619, %v616, %v618
    %v628 = vmul.f32 %v590, %v620
    %v629 = vmul.f32 %v594, %v621
    %v630 = vmul.f32 %v598, %v622
    %v631 = vmul.f32 %v602, %v623
    %v632 = vadd.f32 %v572, %v628
    %v633 = vadd.f32 %v573, %v629
    %v634 = vadd.f32 %v574, %v630
    %v635 = vadd.f32 %v575, %v631
    %s636 = scalar_lea.vmem [#allocation7], 28
    %v637 = vld [vmem:[%s636] sm:$0xf]
    %v640 = vunpack.c.l.s4 1966171168
    %v641 = vunpack.c.0.s8 %v640
    %v642 = vlaneseq
    %v643 = vshrl.u32 %v642, 7
    %v644 = vsub.s32 %v641, %v643
    %v645 = vrot.slane %v637, %v644
    %v646 = vcombine.high %v645, %v645
    %v647 = vlaneseq
    %v648 = vshrl.u32 %v647, 7
    %v649 = vsub.s32 0, %v648
    %v650 = vrot.slane %v645, %v649
    %v651 = vlaneseq
    %v652 = vshrl.u32 %v651, 7
    %v653 = vsub.s32 1, %v652
    %v654 = vrot.slane %v645, %v653
    %v655 = vlaneseq
    %v656 = vshrl.u32 %v655, 7
    %v657 = vsub.s32 0, %v656
    %v658 = vrot.slane %v646, %v657
    %v659 = vlaneseq
    %v660 = vshrl.u32 %v659, 7
    %v661 = vsub.s32 1, %v660
    %v662 = vrot.slane %v646, %v661
    %667 = vrot.lane.b32.xlu0 %v222, 35
    %v668 = vpop.permute.xlu0 %667
    %669 = vrot.lane.b32.xlu0 %v230, 35
    %v670 = vpop.permute.xlu0 %669
    %671 = vrot.lane.b32.xlu0 %v229, 35
    %v672 = vpop.permute.xlu0 %671
    %673 = vrot.lane.b32.xlu0 %v238, 35
    %v674 = vpop.permute.xlu0 %673
    %675 = vrot.lane.b32.xlu0 %v246, 35
    %v676 = vpop.permute.xlu0 %675
    %677 = vrot.lane.b32.xlu0 %v245, 35
    %v678 = vpop.permute.xlu0 %677
    %vm679 = vcmask 285696
    %v680 = vsel %vm679, %v668, %v670
    %v681 = vsel %vm679, %v670, %v672
    %v682 = vsel %vm679, %v674, %v676
    %v683 = vsel %vm679, %v676, %v678
    %v688 = vmul.f32 %v650, %v680
    %v689 = vmul.f32 %v654, %v681
    %v690 = vmul.f32 %v658, %v682
    %v691 = vmul.f32 %v662, %v683
    %v692 = vadd.f32 %v632, %v688
    %v693 = vadd.f32 %v633, %v689
    %v694 = vadd.f32 %v634, %v690
    %v695 = vadd.f32 %v635, %v691
    %s696 = scalar_lea.vmem [#allocation7], 32
    %v697 = vld [vmem:[%s696] sm:$0xf]
    %v700 = vunpack.c.l.s4 1966171168
    %v701 = vunpack.c.0.s8 %v700
    %v702 = vlaneseq
    %v703 = vshrl.u32 %v702, 7
    %v704 = vsub.s32 %v701, %v703
    %v705 = vrot.slane %v697, %v704
    %v706 = vcombine.high %v705, %v705
    %v707 = vlaneseq
    %v708 = vshrl.u32 %v707, 7
    %v709 = vsub.s32 0, %v708
    %v710 = vrot.slane %v705, %v709
    %v711 = vlaneseq
    %v712 = vshrl.u32 %v711, 7
    %v713 = vsub.s32 1, %v712
    %v714 = vrot.slane %v705, %v713
    %v715 = vlaneseq
    %v716 = vshrl.u32 %v715, 7
    %v717 = vsub.s32 0, %v716
    %v718 = vrot.slane %v706, %v717
    %v719 = vlaneseq
    %v720 = vshrl.u32 %v719, 7
    %v721 = vsub.s32 1, %v720
    %v722 = vrot.slane %v706, %v721
    %727 = vrot.lane.b32.xlu0 %v222, 34
    %v728 = vpop.permute.xlu0 %727
    %729 = vrot.lane.b32.xlu0 %v230, 34
    %v730 = vpop.permute.xlu0 %729
    %731 = vrot.lane.b32.xlu0 %v229, 34
    %v732 = vpop.permute.xlu0 %731
    %733 = vrot.lane.b32.xlu0 %v238, 34
    %v734 = vpop.permute.xlu0 %733
    %735 = vrot.lane.b32.xlu0 %v246, 34
    %v736 = vpop.permute.xlu0 %735
    %737 = vrot.lane.b32.xlu0 %v245, 34
    %v738 = vpop.permute.xlu0 %737
    %vm739 = vcmask 277504
    %v740 = vsel %vm739, %v728, %v730
    %v741 = vsel %vm739, %v730, %v732
    %v742 = vsel %vm739, %v734, %v736
    %v743 = vsel %vm739, %v736, %v738
    %v748 = vmul.f32 %v710, %v740
    %v749 = vmul.f32 %v714, %v741
    %v750 = vmul.f32 %v718, %v742
    %v751 = vmul.f32 %v722, %v743
    %v752 = vadd.f32 %v692, %v748
    %v753 = vadd.f32 %v693, %v749
    %v754 = vadd.f32 %v694, %v750
    %v755 = vadd.f32 %v695, %v751
    %s756 = scalar_lea.vmem [#allocation7], 36
    %v757 = vld [vmem:[%s756] sm:$0xf]
    %v760 = vunpack.c.l.s4 1966171168
    %v761 = vunpack.c.0.s8 %v760
    %v762 = vlaneseq
    %v763 = vshrl.u32 %v762, 7
    %v764 = vsub.s32 %v761, %v763
    %v765 = vrot.slane %v757, %v764
    %v766 = vcombine.high %v765, %v765
    %v767 = vlaneseq
    %v768 = vshrl.u32 %v767, 7
    %v769 = vsub.s32 0, %v768
    %v770 = vrot.slane %v765, %v769
    %v771 = vlaneseq
    %v772 = vshrl.u32 %v771, 7
    %v773 = vsub.s32 1, %v772
    %v774 = vrot.slane %v765, %v773
    %v775 = vlaneseq
    %v776 = vshrl.u32 %v775, 7
    %v777 = vsub.s32 0, %v776
    %v778 = vrot.slane %v766, %v777
    %v779 = vlaneseq
    %v780 = vshrl.u32 %v779, 7
    %v781 = vsub.s32 1, %v780
    %v782 = vrot.slane %v766, %v781
    %787 = vrot.lane.b32.xlu0 %v222, 33
    %v788 = vpop.permute.xlu0 %787
    %789 = vrot.lane.b32.xlu0 %v230, 33
    %v790 = vpop.permute.xlu0 %789
    %791 = vrot.lane.b32.xlu0 %v229, 33
    %v792 = vpop.permute.xlu0 %791
    %793 = vrot.lane.b32.xlu0 %v238, 33
    %v794 = vpop.permute.xlu0 %793
    %795 = vrot.lane.b32.xlu0 %v246, 33
    %v796 = vpop.permute.xlu0 %795
    %797 = vrot.lane.b32.xlu0 %v245, 33
    %v798 = vpop.permute.xlu0 %797
    %vm799 = vcmask 269312
    %v800 = vsel %vm799, %v788, %v790
    %v801 = vsel %vm799, %v790, %v792
    %v802 = vsel %vm799, %v794, %v796
    %v803 = vsel %vm799, %v796, %v798
    %v808 = vmul.f32 %v770, %v800
    %v809 = vmul.f32 %v774, %v801
    %v810 = vmul.f32 %v778, %v802
    %v811 = vmul.f32 %v782, %v803
    %v812 = vadd.f32 %v752, %v808
    %v813 = vadd.f32 %v753, %v809
    %v814 = vadd.f32 %v754, %v810
    %v815 = vadd.f32 %v755, %v811
    %s816 = scalar_lea.vmem [#allocation7], 40
    %v817 = vld [vmem:[%s816] sm:$0xf]
    %v820 = vunpack.c.l.s4 1966171168
    %v821 = vunpack.c.0.s8 %v820
    %v822 = vlaneseq
    %v823 = vshrl.u32 %v822, 7
    %v824 = vsub.s32 %v821, %v823
    %v825 = vrot.slane %v817, %v824
    %v826 = vcombine.high %v825, %v825
    %v827 = vlaneseq
    %v828 = vshrl.u32 %v827, 7
    %v829 = vsub.s32 0, %v828
    %v830 = vrot.slane %v825, %v829
    %v831 = vlaneseq
    %v832 = vshrl.u32 %v831, 7
    %v833 = vsub.s32 1, %v832
    %v834 = vrot.slane %v825, %v833
    %v835 = vlaneseq
    %v836 = vshrl.u32 %v835, 7
    %v837 = vsub.s32 0, %v836
    %v838 = vrot.slane %v826, %v837
    %v839 = vlaneseq
    %v840 = vshrl.u32 %v839, 7
    %v841 = vsub.s32 1, %v840
    %v842 = vrot.slane %v826, %v841
    %847 = vrot.lane.b32.xlu0 %v222, 32
    %v848 = vpop.permute.xlu0 %847
    %849 = vrot.lane.b32.xlu0 %v230, 32
    %v850 = vpop.permute.xlu0 %849
    %851 = vrot.lane.b32.xlu0 %v229, 32
    %v852 = vpop.permute.xlu0 %851
    %853 = vrot.lane.b32.xlu0 %v238, 32
    %v854 = vpop.permute.xlu0 %853
    %855 = vrot.lane.b32.xlu0 %v246, 32
    %v856 = vpop.permute.xlu0 %855
    %857 = vrot.lane.b32.xlu0 %v245, 32
    %v858 = vpop.permute.xlu0 %857
    %vm859 = vcmask 261120
    %v860 = vsel %vm859, %v848, %v850
    %v861 = vsel %vm859, %v850, %v852
    %v862 = vsel %vm859, %v854, %v856
    %v863 = vsel %vm859, %v856, %v858
    %v868 = vmul.f32 %v830, %v860
    %v869 = vmul.f32 %v834, %v861
    %v870 = vmul.f32 %v838, %v862
    %v871 = vmul.f32 %v842, %v863
    %v872 = vadd.f32 %v812, %v868
    %v873 = vadd.f32 %v813, %v869
    %v874 = vadd.f32 %v814, %v870
    %v875 = vadd.f32 %v815, %v871
    %s876 = scalar_lea.vmem [#allocation7], 44
    %v877 = vld [vmem:[%s876] sm:$0xf]
    %v880 = vunpack.c.l.s4 1966171168
    %v881 = vunpack.c.0.s8 %v880
    %v882 = vlaneseq
    %v883 = vshrl.u32 %v882, 7
    %v884 = vsub.s32 %v881, %v883
    %v885 = vrot.slane %v877, %v884
    %v886 = vcombine.high %v885, %v885
    %v887 = vlaneseq
    %v888 = vshrl.u32 %v887, 7
    %v889 = vsub.s32 0, %v888
    %v890 = vrot.slane %v885, %v889
    %v891 = vlaneseq
    %v892 = vshrl.u32 %v891, 7
    %v893 = vsub.s32 1, %v892
    %v894 = vrot.slane %v885, %v893
    %v895 = vlaneseq
    %v896 = vshrl.u32 %v895, 7
    %v897 = vsub.s32 0, %v896
    %v898 = vrot.slane %v886, %v897
    %v899 = vlaneseq
    %v900 = vshrl.u32 %v899, 7
    %v901 = vsub.s32 1, %v900
    %v902 = vrot.slane %v886, %v901
    %907 = vrot.lane.b32.xlu0 %v222, 31
    %v908 = vpop.permute.xlu0 %907
    %909 = vrot.lane.b32.xlu0 %v230, 31
    %v910 = vpop.permute.xlu0 %909
    %911 = vrot.lane.b32.xlu0 %v229, 31
    %v912 = vpop.permute.xlu0 %911
    %913 = vrot.lane.b32.xlu0 %v238, 31
    %v914 = vpop.permute.xlu0 %913
    %915 = vrot.lane.b32.xlu0 %v246, 31
    %v916 = vpop.permute.xlu0 %915
    %917 = vrot.lane.b32.xlu0 %v245, 31
    %v918 = vpop.permute.xlu0 %917
    %vm919 = vcmask 252928
    %v920 = vsel %vm919, %v908, %v910
    %v921 = vsel %vm919, %v910, %v912
    %v922 = vsel %vm919, %v914, %v916
    %v923 = vsel %vm919, %v916, %v918
    %v928 = vmul.f32 %v890, %v920
    %v929 = vmul.f32 %v894, %v921
    %v930 = vmul.f32 %v898, %v922
    %v931 = vmul.f32 %v902, %v923
    %v932 = vadd.f32 %v872, %v928
    %v933 = vadd.f32 %v873, %v929
    %v934 = vadd.f32 %v874, %v930
    %v935 = vadd.f32 %v875, %v931
    %s936 = scalar_lea.vmem [#allocation7], 48
    %v937 = vld [vmem:[%s936] sm:$0xf]
    %v940 = vunpack.c.l.s4 1966171168
    %v941 = vunpack.c.0.s8 %v940
    %v942 = vlaneseq
    %v943 = vshrl.u32 %v942, 7
    %v944 = vsub.s32 %v941, %v943
    %v945 = vrot.slane %v937, %v944
    %v946 = vcombine.high %v945, %v945
    %v947 = vlaneseq
    %v948 = vshrl.u32 %v947, 7
    %v949 = vsub.s32 0, %v948
    %v950 = vrot.slane %v945, %v949
    %v951 = vlaneseq
    %v952 = vshrl.u32 %v951, 7
    %v953 = vsub.s32 1, %v952
    %v954 = vrot.slane %v945, %v953
    %v955 = vlaneseq
    %v956 = vshrl.u32 %v955, 7
    %v957 = vsub.s32 0, %v956
    %v958 = vrot.slane %v946, %v957
    %v959 = vlaneseq
    %v960 = vshrl.u32 %v959, 7
    %v961 = vsub.s32 1, %v960
    %v962 = vrot.slane %v946, %v961
    %967 = vrot.lane.b32.xlu0 %v222, 30
    %v968 = vpop.permute.xlu0 %967
    %969 = vrot.lane.b32.xlu0 %v230, 30
    %v970 = vpop.permute.xlu0 %969
    %971 = vrot.lane.b32.xlu0 %v229, 30
    %v972 = vpop.permute.xlu0 %971
    %973 = vrot.lane.b32.xlu0 %v238, 30
    %v974 = vpop.permute.xlu0 %973
    %975 = vrot.lane.b32.xlu0 %v246, 30
    %v976 = vpop.permute.xlu0 %975
    %977 = vrot.lane.b32.xlu0 %v245, 30
    %v978 = vpop.permute.xlu0 %977
    %vm979 = vcmask 244736
    %v980 = vsel %vm979, %v968, %v970
    %v981 = vsel %vm979, %v970, %v972
    %v982 = vsel %vm979, %v974, %v976
    %v983 = vsel %vm979, %v976, %v978
    %v988 = vmul.f32 %v950, %v980
    %v989 = vmul.f32 %v954, %v981
    %v990 = vmul.f32 %v958, %v982
    %v991 = vmul.f32 %v962, %v983
    %v992 = vadd.f32 %v932, %v988
    %v993 = vadd.f32 %v933, %v989
    %v994 = vadd.f32 %v934, %v990
    %v995 = vadd.f32 %v935, %v991
    %s996 = scalar_lea.vmem [#allocation7], 52
    %v997 = vld [vmem:[%s996] sm:$0xf]
    %v1000 = vunpack.c.l.s4 1966171168
    %v1001 = vunpack.c.0.s8 %v1000
    %v1002 = vlaneseq
    %v1003 = vshrl.u32 %v1002, 7
    %v1004 = vsub.s32 %v1001, %v1003
    %v1005 = vrot.slane %v997, %v1004
    %v1006 = vcombine.high %v1005, %v1005
    %v1007 = vlaneseq
    %v1008 = vshrl.u32 %v1007, 7
    %v1009 = vsub.s32 0, %v1008
    %v1010 = vrot.slane %v1005, %v1009
    %v1011 = vlaneseq
    %v1012 = vshrl.u32 %v1011, 7
    %v1013 = vsub.s32 1, %v1012
    %v1014 = vrot.slane %v1005, %v1013
    %v1015 = vlaneseq
    %v1016 = vshrl.u32 %v1015, 7
    %v1017 = vsub.s32 0, %v1016
    %v1018 = vrot.slane %v1006, %v1017
    %v1019 = vlaneseq
    %v1020 = vshrl.u32 %v1019, 7
    %v1021 = vsub.s32 1, %v1020
    %v1022 = vrot.slane %v1006, %v1021
    %1027 = vrot.lane.b32.xlu0 %v222, 29
    %v1028 = vpop.permute.xlu0 %1027
    %1029 = vrot.lane.b32.xlu0 %v230, 29
    %v1030 = vpop.permute.xlu0 %1029
    %1031 = vrot.lane.b32.xlu0 %v229, 29
    %v1032 = vpop.permute.xlu0 %1031
    %1033 = vrot.lane.b32.xlu0 %v238, 29
    %v1034 = vpop.permute.xlu0 %1033
    %1035 = vrot.lane.b32.xlu0 %v246, 29
    %v1036 = vpop.permute.xlu0 %1035
    %1037 = vrot.lane.b32.xlu0 %v245, 29
    %v1038 = vpop.permute.xlu0 %1037
    %vm1039 = vcmask 236544
    %v1040 = vsel %vm1039, %v1028, %v1030
    %v1041 = vsel %vm1039, %v1030, %v1032
    %v1042 = vsel %vm1039, %v1034, %v1036
    %v1043 = vsel %vm1039, %v1036, %v1038
    %v1048 = vmul.f32 %v1010, %v1040
    %v1049 = vmul.f32 %v1014, %v1041
    %v1050 = vmul.f32 %v1018, %v1042
    %v1051 = vmul.f32 %v1022, %v1043
    %v1052 = vadd.f32 %v992, %v1048
    %v1053 = vadd.f32 %v993, %v1049
    %v1054 = vadd.f32 %v994, %v1050
    %v1055 = vadd.f32 %v995, %v1051
    %s1056 = scalar_lea.vmem [#allocation7], 56
    %v1057 = vld [vmem:[%s1056] sm:$0xf]
    %v1060 = vunpack.c.l.s4 1966171168
    %v1061 = vunpack.c.0.s8 %v1060
    %v1062 = vlaneseq
    %v1063 = vshrl.u32 %v1062, 7
    %v1064 = vsub.s32 %v1061, %v1063
    %v1065 = vrot.slane %v1057, %v1064
    %v1066 = vcombine.high %v1065, %v1065
    %v1067 = vlaneseq
    %v1068 = vshrl.u32 %v1067, 7
    %v1069 = vsub.s32 0, %v1068
    %v1070 = vrot.slane %v1065, %v1069
    %v1071 = vlaneseq
    %v1072 = vshrl.u32 %v1071, 7
    %v1073 = vsub.s32 1, %v1072
    %v1074 = vrot.slane %v1065, %v1073
    %v1075 = vlaneseq
    %v1076 = vshrl.u32 %v1075, 7
    %v1077 = vsub.s32 0, %v1076
    %v1078 = vrot.slane %v1066, %v1077
    %v1079 = vlaneseq
    %v1080 = vshrl.u32 %v1079, 7
    %v1081 = vsub.s32 1, %v1080
    %v1082 = vrot.slane %v1066, %v1081
    %1087 = vrot.lane.b32.xlu0 %v222, 19
    %v1088 = vpop.permute.xlu0 %1087
    %1089 = vrot.lane.b32.xlu0 %v230, 19
    %v1090 = vpop.permute.xlu0 %1089
    %1091 = vrot.lane.b32.xlu0 %v229, 19
    %v1092 = vpop.permute.xlu0 %1091
    %1093 = vrot.lane.b32.xlu0 %v238, 19
    %v1094 = vpop.permute.xlu0 %1093
    %1095 = vrot.lane.b32.xlu0 %v246, 19
    %v1096 = vpop.permute.xlu0 %1095
    %1097 = vrot.lane.b32.xlu0 %v245, 19
    %v1098 = vpop.permute.xlu0 %1097
    %vm1099 = vcmask 154624
    %v1100 = vsel %vm1099, %v1088, %v1090
    %v1101 = vsel %vm1099, %v1090, %v1092
    %v1102 = vsel %vm1099, %v1094, %v1096
    %v1103 = vsel %vm1099, %v1096, %v1098
    %v1108 = vmul.f32 %v1070, %v1100
    %v1109 = vmul.f32 %v1074, %v1101
    %v1110 = vmul.f32 %v1078, %v1102
    %v1111 = vmul.f32 %v1082, %v1103
    %v1112 = vadd.f32 %v1052, %v1108
    %v1113 = vadd.f32 %v1053, %v1109
    %v1114 = vadd.f32 %v1054, %v1110
    %v1115 = vadd.f32 %v1055, %v1111
    %s1116 = scalar_lea.vmem [#allocation7], 60
    %v1117 = vld [vmem:[%s1116] sm:$0xf]
    %v1120 = vunpack.c.l.s4 1966171168
    %v1121 = vunpack.c.0.s8 %v1120
    %v1122 = vlaneseq
    %v1123 = vshrl.u32 %v1122, 7
    %v1124 = vsub.s32 %v1121, %v1123
    %v1125 = vrot.slane %v1117, %v1124
    %v1126 = vcombine.high %v1125, %v1125
    %v1127 = vlaneseq
    %v1128 = vshrl.u32 %v1127, 7
    %v1129 = vsub.s32 0, %v1128
    %v1130 = vrot.slane %v1125, %v1129
    %v1131 = vlaneseq
    %v1132 = vshrl.u32 %v1131, 7
    %v1133 = vsub.s32 1, %v1132
    %v1134 = vrot.slane %v1125, %v1133
    %v1135 = vlaneseq
    %v1136 = vshrl.u32 %v1135, 7
    %v1137 = vsub.s32 0, %v1136
    %v1138 = vrot.slane %v1126, %v1137
    %v1139 = vlaneseq
    %v1140 = vshrl.u32 %v1139, 7
    %v1141 = vsub.s32 1, %v1140
    %v1142 = vrot.slane %v1126, %v1141
    %1147 = vrot.lane.b32.xlu0 %v222, 18
    %v1148 = vpop.permute.xlu0 %1147
    %1149 = vrot.lane.b32.xlu0 %v230, 18
    %v1150 = vpop.permute.xlu0 %1149
    %1151 = vrot.lane.b32.xlu0 %v229, 18
    %v1152 = vpop.permute.xlu0 %1151
    %1153 = vrot.lane.b32.xlu0 %v238, 18
    %v1154 = vpop.permute.xlu0 %1153
    %1155 = vrot.lane.b32.xlu0 %v246, 18
    %v1156 = vpop.permute.xlu0 %1155
    %1157 = vrot.lane.b32.xlu0 %v245, 18
    %v1158 = vpop.permute.xlu0 %1157
    %vm1159 = vcmask 146432
    %v1160 = vsel %vm1159, %v1148, %v1150
    %v1161 = vsel %vm1159, %v1150, %v1152
    %v1162 = vsel %vm1159, %v1154, %v1156
    %v1163 = vsel %vm1159, %v1156, %v1158
    %v1168 = vmul.f32 %v1130, %v1160
    %v1169 = vmul.f32 %v1134, %v1161
    %v1170 = vmul.f32 %v1138, %v1162
    %v1171 = vmul.f32 %v1142, %v1163
    %v1172 = vadd.f32 %v1112, %v1168
    %v1173 = vadd.f32 %v1113, %v1169
    %v1174 = vadd.f32 %v1114, %v1170
    %v1175 = vadd.f32 %v1115, %v1171
    %s1176 = scalar_lea.vmem [#allocation7], 64
    %v1177 = vld [vmem:[%s1176] sm:$0xf]
    %v1180 = vunpack.c.l.s4 1966171168
    %v1181 = vunpack.c.0.s8 %v1180
    %v1182 = vlaneseq
    %v1183 = vshrl.u32 %v1182, 7
    %v1184 = vsub.s32 %v1181, %v1183
    %v1185 = vrot.slane %v1177, %v1184
    %v1186 = vcombine.high %v1185, %v1185
    %v1187 = vlaneseq
    %v1188 = vshrl.u32 %v1187, 7
    %v1189 = vsub.s32 0, %v1188
    %v1190 = vrot.slane %v1185, %v1189
    %v1191 = vlaneseq
    %v1192 = vshrl.u32 %v1191, 7
    %v1193 = vsub.s32 1, %v1192
    %v1194 = vrot.slane %v1185, %v1193
    %v1195 = vlaneseq
    %v1196 = vshrl.u32 %v1195, 7
    %v1197 = vsub.s32 0, %v1196
    %v1198 = vrot.slane %v1186, %v1197
    %v1199 = vlaneseq
    %v1200 = vshrl.u32 %v1199, 7
    %v1201 = vsub.s32 1, %v1200
    %v1202 = vrot.slane %v1186, %v1201
    %1207 = vrot.lane.b32.xlu0 %v222, 17
    %v1208 = vpop.permute.xlu0 %1207
    %1209 = vrot.lane.b32.xlu0 %v230, 17
    %v1210 = vpop.permute.xlu0 %1209
    %1211 = vrot.lane.b32.xlu0 %v229, 17
    %v1212 = vpop.permute.xlu0 %1211
    %1213 = vrot.lane.b32.xlu0 %v238, 17
    %v1214 = vpop.permute.xlu0 %1213
    %1215 = vrot.lane.b32.xlu0 %v246, 17
    %v1216 = vpop.permute.xlu0 %1215
    %1217 = vrot.lane.b32.xlu0 %v245, 17
    %v1218 = vpop.permute.xlu0 %1217
    %vm1219 = vcmask 138240
    %v1220 = vsel %vm1219, %v1208, %v1210
    %v1221 = vsel %vm1219, %v1210, %v1212
    %v1222 = vsel %vm1219, %v1214, %v1216
    %v1223 = vsel %vm1219, %v1216, %v1218
    %v1228 = vmul.f32 %v1190, %v1220
    %v1229 = vmul.f32 %v1194, %v1221
    %v1230 = vmul.f32 %v1198, %v1222
    %v1231 = vmul.f32 %v1202, %v1223
    %v1232 = vadd.f32 %v1172, %v1228
    %v1233 = vadd.f32 %v1173, %v1229
    %v1234 = vadd.f32 %v1174, %v1230
    %v1235 = vadd.f32 %v1175, %v1231
    %s1236 = scalar_lea.vmem [#allocation7], 68
    %v1237 = vld [vmem:[%s1236] sm:$0xf]
    %v1240 = vunpack.c.l.s4 1966171168
    %v1241 = vunpack.c.0.s8 %v1240
    %v1242 = vlaneseq
    %v1243 = vshrl.u32 %v1242, 7
    %v1244 = vsub.s32 %v1241, %v1243
    %v1245 = vrot.slane %v1237, %v1244
    %v1246 = vcombine.high %v1245, %v1245
    %v1247 = vlaneseq
    %v1248 = vshrl.u32 %v1247, 7
    %v1249 = vsub.s32 0, %v1248
    %v1250 = vrot.slane %v1245, %v1249
    %v1251 = vlaneseq
    %v1252 = vshrl.u32 %v1251, 7
    %v1253 = vsub.s32 1, %v1252
    %v1254 = vrot.slane %v1245, %v1253
    %v1255 = vlaneseq
    %v1256 = vshrl.u32 %v1255, 7
    %v1257 = vsub.s32 0, %v1256
    %v1258 = vrot.slane %v1246, %v1257
    %v1259 = vlaneseq
    %v1260 = vshrl.u32 %v1259, 7
    %v1261 = vsub.s32 1, %v1260
    %v1262 = vrot.slane %v1246, %v1261
    %1267 = vrot.lane.b32.xlu0 %v222, 16
    %v1268 = vpop.permute.xlu0 %1267
    %1269 = vrot.lane.b32.xlu0 %v230, 16
    %v1270 = vpop.permute.xlu0 %1269
    %1271 = vrot.lane.b32.xlu0 %v229, 16
    %v1272 = vpop.permute.xlu0 %1271
    %1273 = vrot.lane.b32.xlu0 %v238, 16
    %v1274 = vpop.permute.xlu0 %1273
    %1275 = vrot.lane.b32.xlu0 %v246, 16
    %v1276 = vpop.permute.xlu0 %1275
    %1277 = vrot.lane.b32.xlu0 %v245, 16
    %v1278 = vpop.permute.xlu0 %1277
    %vm1279 = vcmask 130048
    %v1280 = vsel %vm1279, %v1268, %v1270
    %v1281 = vsel %vm1279, %v1270, %v1272
    %v1282 = vsel %vm1279, %v1274, %v1276
    %v1283 = vsel %vm1279, %v1276, %v1278
    %v1288 = vmul.f32 %v1250, %v1280
    %v1289 = vmul.f32 %v1254, %v1281
    %v1290 = vmul.f32 %v1258, %v1282
    %v1291 = vmul.f32 %v1262, %v1283
    %v1292 = vadd.f32 %v1232, %v1288
    %v1293 = vadd.f32 %v1233, %v1289
    %v1294 = vadd.f32 %v1234, %v1290
    %v1295 = vadd.f32 %v1235, %v1291
    %s1296 = scalar_lea.vmem [#allocation7], 72
    %v1297 = vld [vmem:[%s1296] sm:$0xf]
    %v1300 = vunpack.c.l.s4 1966171168
    %v1301 = vunpack.c.0.s8 %v1300
    %v1302 = vlaneseq
    %v1303 = vshrl.u32 %v1302, 7
    %v1304 = vsub.s32 %v1301, %v1303
    %v1305 = vrot.slane %v1297, %v1304
    %v1306 = vcombine.high %v1305, %v1305
    %v1307 = vlaneseq
    %v1308 = vshrl.u32 %v1307, 7
    %v1309 = vsub.s32 0, %v1308
    %v1310 = vrot.slane %v1305, %v1309
    %v1311 = vlaneseq
    %v1312 = vshrl.u32 %v1311, 7
    %v1313 = vsub.s32 1, %v1312
    %v1314 = vrot.slane %v1305, %v1313
    %v1315 = vlaneseq
    %v1316 = vshrl.u32 %v1315, 7
    %v1317 = vsub.s32 0, %v1316
    %v1318 = vrot.slane %v1306, %v1317
    %v1319 = vlaneseq
    %v1320 = vshrl.u32 %v1319, 7
    %v1321 = vsub.s32 1, %v1320
    %v1322 = vrot.slane %v1306, %v1321
    %1327 = vrot.lane.b32.xlu0 %v222, 15
    %v1328 = vpop.permute.xlu0 %1327
    %1329 = vrot.lane.b32.xlu0 %v230, 15
    %v1330 = vpop.permute.xlu0 %1329
    %1331 = vrot.lane.b32.xlu0 %v229, 15
    %v1332 = vpop.permute.xlu0 %1331
    %1333 = vrot.lane.b32.xlu0 %v238, 15
    %v1334 = vpop.permute.xlu0 %1333
    %1335 = vrot.lane.b32.xlu0 %v246, 15
    %v1336 = vpop.permute.xlu0 %1335
    %1337 = vrot.lane.b32.xlu0 %v245, 15
    %v1338 = vpop.permute.xlu0 %1337
    %vm1339 = vcmask 121856
    %v1340 = vsel %vm1339, %v1328, %v1330
    %v1341 = vsel %vm1339, %v1330, %v1332
    %v1342 = vsel %vm1339, %v1334, %v1336
    %v1343 = vsel %vm1339, %v1336, %v1338
    %v1348 = vmul.f32 %v1310, %v1340
    %v1349 = vmul.f32 %v1314, %v1341
    %v1350 = vmul.f32 %v1318, %v1342
    %v1351 = vmul.f32 %v1322, %v1343
    %v1352 = vadd.f32 %v1292, %v1348
    %v1353 = vadd.f32 %v1293, %v1349
    %v1354 = vadd.f32 %v1294, %v1350
    %v1355 = vadd.f32 %v1295, %v1351
    %s1356 = scalar_lea.vmem [#allocation7], 76
    %v1357 = vld [vmem:[%s1356] sm:$0xf]
    %v1360 = vunpack.c.l.s4 1966171168
    %v1361 = vunpack.c.0.s8 %v1360
    %v1362 = vlaneseq
    %v1363 = vshrl.u32 %v1362, 7
    %v1364 = vsub.s32 %v1361, %v1363
    %v1365 = vrot.slane %v1357, %v1364
    %v1366 = vcombine.high %v1365, %v1365
    %v1367 = vlaneseq
    %v1368 = vshrl.u32 %v1367, 7
    %v1369 = vsub.s32 0, %v1368
    %v1370 = vrot.slane %v1365, %v1369
    %v1371 = vlaneseq
    %v1372 = vshrl.u32 %v1371, 7
    %v1373 = vsub.s32 1, %v1372
    %v1374 = vrot.slane %v1365, %v1373
    %v1375 = vlaneseq
    %v1376 = vshrl.u32 %v1375, 7
    %v1377 = vsub.s32 0, %v1376
    %v1378 = vrot.slane %v1366, %v1377
    %v1379 = vlaneseq
    %v1380 = vshrl.u32 %v1379, 7
    %v1381 = vsub.s32 1, %v1380
    %v1382 = vrot.slane %v1366, %v1381
    %1387 = vrot.lane.b32.xlu0 %v222, 14
    %v1388 = vpop.permute.xlu0 %1387
    %1389 = vrot.lane.b32.xlu0 %v230, 14
    %v1390 = vpop.permute.xlu0 %1389
    %1391 = vrot.lane.b32.xlu0 %v229, 14
    %v1392 = vpop.permute.xlu0 %1391
    %1393 = vrot.lane.b32.xlu0 %v238, 14
    %v1394 = vpop.permute.xlu0 %1393
    %1395 = vrot.lane.b32.xlu0 %v246, 14
    %v1396 = vpop.permute.xlu0 %1395
    %1397 = vrot.lane.b32.xlu0 %v245, 14
    %v1398 = vpop.permute.xlu0 %1397
    %vm1399 = vcmask 113664
    %v1400 = vsel %vm1399, %v1388, %v1390
    %v1401 = vsel %vm1399, %v1390, %v1392
    %v1402 = vsel %vm1399, %v1394, %v1396
    %v1403 = vsel %vm1399, %v1396, %v1398
    %v1408 = vmul.f32 %v1370, %v1400
    %v1409 = vmul.f32 %v1374, %v1401
    %v1410 = vmul.f32 %v1378, %v1402
    %v1411 = vmul.f32 %v1382, %v1403
    %v1412 = vadd.f32 %v1352, %v1408
    %v1413 = vadd.f32 %v1353, %v1409
    %v1414 = vadd.f32 %v1354, %v1410
    %v1415 = vadd.f32 %v1355, %v1411
    %s1416 = scalar_lea.vmem [#allocation7], 80
    %v1417 = vld [vmem:[%s1416] sm:$0xf]
    %v1420 = vunpack.c.l.s4 1966171168
    %v1421 = vunpack.c.0.s8 %v1420
    %v1422 = vlaneseq
    %v1423 = vshrl.u32 %v1422, 7
    %v1424 = vsub.s32 %v1421, %v1423
    %v1425 = vrot.slane %v1417, %v1424
    %v1426 = vcombine.high %v1425, %v1425
    %v1427 = vlaneseq
    %v1428 = vshrl.u32 %v1427, 7
    %v1429 = vsub.s32 0, %v1428
    %v1430 = vrot.slane %v1425, %v1429
    %v1431 = vlaneseq
    %v1432 = vshrl.u32 %v1431, 7
    %v1433 = vsub.s32 1, %v1432
    %v1434 = vrot.slane %v1425, %v1433
    %v1435 = vlaneseq
    %v1436 = vshrl.u32 %v1435, 7
    %v1437 = vsub.s32 0, %v1436
    %v1438 = vrot.slane %v1426, %v1437
    %v1439 = vlaneseq
    %v1440 = vshrl.u32 %v1439, 7
    %v1441 = vsub.s32 1, %v1440
    %v1442 = vrot.slane %v1426, %v1441
    %1447 = vrot.lane.b32.xlu0 %v222, 13
    %v1448 = vpop.permute.xlu0 %1447
    %1449 = vrot.lane.b32.xlu0 %v230, 13
    %v1450 = vpop.permute.xlu0 %1449
    %1451 = vrot.lane.b32.xlu0 %v229, 13
    %v1452 = vpop.permute.xlu0 %1451
    %1453 = vrot.lane.b32.xlu0 %v238, 13
    %v1454 = vpop.permute.xlu0 %1453
    %1455 = vrot.lane.b32.xlu0 %v246, 13
    %v1456 = vpop.permute.xlu0 %1455
    %1457 = vrot.lane.b32.xlu0 %v245, 13
    %v1458 = vpop.permute.xlu0 %1457
    %vm1459 = vcmask 105472
    %v1460 = vsel %vm1459, %v1448, %v1450
    %v1461 = vsel %vm1459, %v1450, %v1452
    %v1462 = vsel %vm1459, %v1454, %v1456
    %v1463 = vsel %vm1459, %v1456, %v1458
    %v1468 = vmul.f32 %v1430, %v1460
    %v1469 = vmul.f32 %v1434, %v1461
    %v1470 = vmul.f32 %v1438, %v1462
    %v1471 = vmul.f32 %v1442, %v1463
    %v1472 = vadd.f32 %v1412, %v1468
    %v1473 = vadd.f32 %v1413, %v1469
    %v1474 = vadd.f32 %v1414, %v1470
    %v1475 = vadd.f32 %v1415, %v1471
    %s1476 = scalar_lea.vmem [#allocation7], 84
    %v1477 = vld [vmem:[%s1476] sm:$0xf]
    %v1480 = vunpack.c.l.s4 1966171168
    %v1481 = vunpack.c.0.s8 %v1480
    %v1482 = vlaneseq
    %v1483 = vshrl.u32 %v1482, 7
    %v1484 = vsub.s32 %v1481, %v1483
    %v1485 = vrot.slane %v1477, %v1484
    %v1486 = vcombine.high %v1485, %v1485
    %v1487 = vlaneseq
    %v1488 = vshrl.u32 %v1487, 7
    %v1489 = vsub.s32 0, %v1488
    %v1490 = vrot.slane %v1485, %v1489
    %v1491 = vlaneseq
    %v1492 = vshrl.u32 %v1491, 7
    %v1493 = vsub.s32 1, %v1492
    %v1494 = vrot.slane %v1485, %v1493
    %v1495 = vlaneseq
    %v1496 = vshrl.u32 %v1495, 7
    %v1497 = vsub.s32 0, %v1496
    %v1498 = vrot.slane %v1486, %v1497
    %v1499 = vlaneseq
    %v1500 = vshrl.u32 %v1499, 7
    %v1501 = vsub.s32 1, %v1500
    %v1502 = vrot.slane %v1486, %v1501
    %1507 = vrot.lane.b32.xlu0 %v222, 3
    %v1508 = vpop.permute.xlu0 %1507
    %1509 = vrot.lane.b32.xlu0 %v230, 3
    %v1510 = vpop.permute.xlu0 %1509
    %1511 = vrot.lane.b32.xlu0 %v229, 3
    %v1512 = vpop.permute.xlu0 %1511
    %1513 = vrot.lane.b32.xlu0 %v238, 3
    %v1514 = vpop.permute.xlu0 %1513
    %1515 = vrot.lane.b32.xlu0 %v246, 3
    %v1516 = vpop.permute.xlu0 %1515
    %1517 = vrot.lane.b32.xlu0 %v245, 3
    %v1518 = vpop.permute.xlu0 %1517
    %vm1519 = vcmask 23552
    %v1520 = vsel %vm1519, %v1508, %v1510
    %v1521 = vsel %vm1519, %v1510, %v1512
    %v1522 = vsel %vm1519, %v1514, %v1516
    %v1523 = vsel %vm1519, %v1516, %v1518
    %v1528 = vmul.f32 %v1490, %v1520
    %v1529 = vmul.f32 %v1494, %v1521
    %v1530 = vmul.f32 %v1498, %v1522
    %v1531 = vmul.f32 %v1502, %v1523
    %v1532 = vadd.f32 %v1472, %v1528
    %v1533 = vadd.f32 %v1473, %v1529
    %v1534 = vadd.f32 %v1474, %v1530
    %v1535 = vadd.f32 %v1475, %v1531
    %s1536 = scalar_lea.vmem [#allocation7], 88
    %v1537 = vld [vmem:[%s1536] sm:$0xf]
    %v1540 = vunpack.c.l.s4 1966171168
    %v1541 = vunpack.c.0.s8 %v1540
    %v1542 = vlaneseq
    %v1543 = vshrl.u32 %v1542, 7
    %v1544 = vsub.s32 %v1541, %v1543
    %v1545 = vrot.slane %v1537, %v1544
    %v1546 = vcombine.high %v1545, %v1545
    %v1547 = vlaneseq
    %v1548 = vshrl.u32 %v1547, 7
    %v1549 = vsub.s32 0, %v1548
    %v1550 = vrot.slane %v1545, %v1549
    %v1551 = vlaneseq
    %v1552 = vshrl.u32 %v1551, 7
    %v1553 = vsub.s32 1, %v1552
    %v1554 = vrot.slane %v1545, %v1553
    %v1555 = vlaneseq
    %v1556 = vshrl.u32 %v1555, 7
    %v1557 = vsub.s32 0, %v1556
    %v1558 = vrot.slane %v1546, %v1557
    %v1559 = vlaneseq
    %v1560 = vshrl.u32 %v1559, 7
    %v1561 = vsub.s32 1, %v1560
    %v1562 = vrot.slane %v1546, %v1561
    %1567 = vrot.lane.b32.xlu0 %v222, 2
    %v1568 = vpop.permute.xlu0 %1567
    %1569 = vrot.lane.b32.xlu0 %v230, 2
    %v1570 = vpop.permute.xlu0 %1569
    %1571 = vrot.lane.b32.xlu0 %v229, 2
    %v1572 = vpop.permute.xlu0 %1571
    %1573 = vrot.lane.b32.xlu0 %v238, 2
    %v1574 = vpop.permute.xlu0 %1573
    %1575 = vrot.lane.b32.xlu0 %v246, 2
    %v1576 = vpop.permute.xlu0 %1575
    %1577 = vrot.lane.b32.xlu0 %v245, 2
    %v1578 = vpop.permute.xlu0 %1577
    %vm1579 = vcmask 15360
    %v1580 = vsel %vm1579, %v1568, %v1570
    %v1581 = vsel %vm1579, %v1570, %v1572
    %v1582 = vsel %vm1579, %v1574, %v1576
    %v1583 = vsel %vm1579, %v1576, %v1578
    %v1588 = vmul.f32 %v1550, %v1580
    %v1589 = vmul.f32 %v1554, %v1581
    %v1590 = vmul.f32 %v1558, %v1582
    %v1591 = vmul.f32 %v1562, %v1583
    %v1592 = vadd.f32 %v1532, %v1588
    %v1593 = vadd.f32 %v1533, %v1589
    %v1594 = vadd.f32 %v1534, %v1590
    %v1595 = vadd.f32 %v1535, %v1591
    %s1596 = scalar_lea.vmem [#allocation7], 92
    %v1597 = vld [vmem:[%s1596] sm:$0xf]
    %v1600 = vunpack.c.l.s4 1966171168
    %v1601 = vunpack.c.0.s8 %v1600
    %v1602 = vlaneseq
    %v1603 = vshrl.u32 %v1602, 7
    %v1604 = vsub.s32 %v1601, %v1603
    %v1605 = vrot.slane %v1597, %v1604
    %v1606 = vcombine.high %v1605, %v1605
    %v1607 = vlaneseq
    %v1608 = vshrl.u32 %v1607, 7
    %v1609 = vsub.s32 0, %v1608
    %v1610 = vrot.slane %v1605, %v1609
    %v1611 = vlaneseq
    %v1612 = vshrl.u32 %v1611, 7
    %v1613 = vsub.s32 1, %v1612
    %v1614 = vrot.slane %v1605, %v1613
    %v1615 = vlaneseq
    %v1616 = vshrl.u32 %v1615, 7
    %v1617 = vsub.s32 0, %v1616
    %v1618 = vrot.slane %v1606, %v1617
    %v1619 = vlaneseq
    %v1620 = vshrl.u32 %v1619, 7
    %v1621 = vsub.s32 1, %v1620
    %v1622 = vrot.slane %v1606, %v1621
    %1627 = vrot.lane.b32.xlu0 %v222, 1
    %v1628 = vpop.permute.xlu0 %1627
    %1629 = vrot.lane.b32.xlu0 %v230, 1
    %v1630 = vpop.permute.xlu0 %1629
    %1631 = vrot.lane.b32.xlu0 %v229, 1
    %v1632 = vpop.permute.xlu0 %1631
    %1633 = vrot.lane.b32.xlu0 %v238, 1
    %v1634 = vpop.permute.xlu0 %1633
    %1635 = vrot.lane.b32.xlu0 %v246, 1
    %v1636 = vpop.permute.xlu0 %1635
    %1637 = vrot.lane.b32.xlu0 %v245, 1
    %v1638 = vpop.permute.xlu0 %1637
    %vm1639 = vcmask 7168
    %v1640 = vsel %vm1639, %v1628, %v1630
    %v1641 = vsel %vm1639, %v1630, %v1632
    %v1642 = vsel %vm1639, %v1634, %v1636
    %v1643 = vsel %vm1639, %v1636, %v1638
    %v1648 = vmul.f32 %v1610, %v1640
    %v1649 = vmul.f32 %v1614, %v1641
    %v1650 = vmul.f32 %v1618, %v1642
    %v1651 = vmul.f32 %v1622, %v1643
    %v1652 = vadd.f32 %v1592, %v1648
    %v1653 = vadd.f32 %v1593, %v1649
    %v1654 = vadd.f32 %v1594, %v1650
    %v1655 = vadd.f32 %v1595, %v1651
    %v1656 = vld [vmem:[#allocation2 + $0x2] sm:$0xf]
    %v1657 = vld [vmem:[#allocation2 + $0xa] sm:$0xf]
    %s1658 = scalar_lea.vmem [#allocation7], 96
    %v1659 = vld [vmem:[%s1658] sm:$0xf]
    %v1662 = vunpack.c.l.s4 1966171168
    %v1663 = vunpack.c.0.s8 %v1662
    %v1664 = vlaneseq
    %v1665 = vshrl.u32 %v1664, 7
    %v1666 = vsub.s32 %v1663, %v1665
    %v1667 = vrot.slane %v1659, %v1666
    %v1668 = vcombine.high %v1667, %v1667
    %v1669 = vlaneseq
    %v1670 = vshrl.u32 %v1669, 7
    %v1671 = vsub.s32 0, %v1670
    %v1672 = vrot.slane %v1667, %v1671
    %v1673 = vlaneseq
    %v1674 = vshrl.u32 %v1673, 7
    %v1675 = vsub.s32 1, %v1674
    %v1676 = vrot.slane %v1667, %v1675
    %v1677 = vlaneseq
    %v1678 = vshrl.u32 %v1677, 7
    %v1679 = vsub.s32 0, %v1678
    %v1680 = vrot.slane %v1668, %v1679
    %v1681 = vlaneseq
    %v1682 = vshrl.u32 %v1681, 7
    %v1683 = vsub.s32 1, %v1682
    %v1684 = vrot.slane %v1668, %v1683
    %v1692 = vunpack.c.l.s4 1983009808
    %v1693 = vunpack.c.0.s8 %v1692
    %v1694 = vlaneseq
    %v1695 = vshrl.u32 %v1694, 7
    %v1696 = vsub.s32 %v1693, %v1695
    %v1697 = vrot.slane %v1656, %v1696
    %v1698 = vcombine.high %v1697, %v1697
    %v1700 = vunpack.c.l.s4 1983009808
    %v1701 = vunpack.c.0.s8 %v1700
    %v1702 = vlaneseq
    %v1703 = vshrl.u32 %v1702, 7
    %v1704 = vsub.s32 %v1701, %v1703
    %v1705 = vrot.slane %v1657, %v1704
    %v1706 = vcombine.high %v1705, %v1705
    %v1711 = vmul.f32 %v1672, %v1697
    %v1712 = vmul.f32 %v1676, %v1698
    %v1713 = vmul.f32 %v1680, %v1705
    %v1714 = vmul.f32 %v1684, %v1706
    %v1715 = vadd.f32 %v1652, %v1711
    %v1716 = vadd.f32 %v1653, %v1712
    %v1717 = vadd.f32 %v1654, %v1713
    %v1718 = vadd.f32 %v1655, %v1714
    %v1719 = vld [vmem:[#allocation2 + $0x2] sm:$0x3f]
    %v1720 = vld [vmem:[#allocation2 + $0xa] sm:$0x3f]
    %s1721 = scalar_lea.vmem [#allocation7], 100
    %v1722 = vld [vmem:[%s1721] sm:$0xf]
    %v1725 = vunpack.c.l.s4 1966171168
    %v1726 = vunpack.c.0.s8 %v1725
    %v1727 = vlaneseq
    %v1728 = vshrl.u32 %v1727, 7
    %v1729 = vsub.s32 %v1726, %v1728
    %v1730 = vrot.slane %v1722, %v1729
    %v1731 = vcombine.high %v1730, %v1730
    %v1732 = vlaneseq
    %v1733 = vshrl.u32 %v1732, 7
    %v1734 = vsub.s32 0, %v1733
    %v1735 = vrot.slane %v1730, %v1734
    %v1736 = vlaneseq
    %v1737 = vshrl.u32 %v1736, 7
    %v1738 = vsub.s32 1, %v1737
    %v1739 = vrot.slane %v1730, %v1738
    %v1740 = vlaneseq
    %v1741 = vshrl.u32 %v1740, 7
    %v1742 = vsub.s32 0, %v1741
    %v1743 = vrot.slane %v1731, %v1742
    %v1744 = vlaneseq
    %v1745 = vshrl.u32 %v1744, 7
    %v1746 = vsub.s32 1, %v1745
    %v1747 = vrot.slane %v1731, %v1746
    %v1754 = vcombine.high %v1719, %v1719
    %v1756 = vunpack.c.l.s4 1983009808
    %v1757 = vunpack.c.0.s8 %v1756
    %v1758 = vlaneseq
    %v1759 = vshrl.u32 %v1758, 7
    %v1760 = vsub.s32 %v1757, %v1759
    %v1761 = vrot.slane %v1719, %v1760
    %v1763 = vunpack.c.l.s4 1983009808
    %v1764 = vunpack.c.0.s8 %v1763
    %v1765 = vlaneseq
    %v1766 = vshrl.u32 %v1765, 7
    %v1767 = vsub.s32 %v1764, %v1766
    %v1768 = vrot.slane %v1754, %v1767
    %v1769 = vcombine.high %v1761, %v1761
    %v1770 = vcombine.high %v1720, %v1720
    %v1772 = vunpack.c.l.s4 1983009808
    %v1773 = vunpack.c.0.s8 %v1772
    %v1774 = vlaneseq
    %v1775 = vshrl.u32 %v1774, 7
    %v1776 = vsub.s32 %v1773, %v1775
    %v1777 = vrot.slane %v1720, %v1776
    %v1779 = vunpack.c.l.s4 1983009808
    %v1780 = vunpack.c.0.s8 %v1779
    %v1781 = vlaneseq
    %v1782 = vshrl.u32 %v1781, 7
    %v1783 = vsub.s32 %v1780, %v1782
    %v1784 = vrot.slane %v1770, %v1783
    %v1785 = vcombine.high %v1777, %v1777
    %1786 = vrot.lane.b32.xlu0 %v1761, 127
    %v1787 = vpop.permute.xlu0 %1786
    %1788 = vrot.lane.b32.xlu0 %v1769, 127
    %v1789 = vpop.permute.xlu0 %1788
    %1790 = vrot.lane.b32.xlu0 %v1768, 127
    %v1791 = vpop.permute.xlu0 %1790
    %1792 = vrot.lane.b32.xlu0 %v1777, 127
    %v1793 = vpop.permute.xlu0 %1792
    %1794 = vrot.lane.b32.xlu0 %v1785, 127
    %v1795 = vpop.permute.xlu0 %1794
    %1796 = vrot.lane.b32.xlu0 %v1784, 127
    %v1797 = vpop.permute.xlu0 %1796
    %vm1798 = vcmask 1039360
    %v1799 = vsel %vm1798, %v1787, %v1789
    %v1800 = vsel %vm1798, %v1789, %v1791
    %v1801 = vsel %vm1798, %v1793, %v1795
    %v1802 = vsel %vm1798, %v1795, %v1797
    %v1807 = vmul.f32 %v1735, %v1799
    %v1808 = vmul.f32 %v1739, %v1800
    %v1809 = vmul.f32 %v1743, %v1801
    %v1810 = vmul.f32 %v1747, %v1802
    %v1811 = vadd.f32 %v1715, %v1807
    %v1812 = vadd.f32 %v1716, %v1808
    %v1813 = vadd.f32 %v1717, %v1809
    %v1814 = vadd.f32 %v1718, %v1810
    %s1815 = scalar_lea.vmem [#allocation7], 104
    %v1816 = vld [vmem:[%s1815] sm:$0xf]
    %v1819 = vunpack.c.l.s4 1966171168
    %v1820 = vunpack.c.0.s8 %v1819
    %v1821 = vlaneseq
    %v1822 = vshrl.u32 %v1821, 7
    %v1823 = vsub.s32 %v1820, %v1822
    %v1824 = vrot.slane %v1816, %v1823
    %v1825 = vcombine.high %v1824, %v1824
    %v1826 = vlaneseq
    %v1827 = vshrl.u32 %v1826, 7
    %v1828 = vsub.s32 0, %v1827
    %v1829 = vrot.slane %v1824, %v1828
    %v1830 = vlaneseq
    %v1831 = vshrl.u32 %v1830, 7
    %v1832 = vsub.s32 1, %v1831
    %v1833 = vrot.slane %v1824, %v1832
    %v1834 = vlaneseq
    %v1835 = vshrl.u32 %v1834, 7
    %v1836 = vsub.s32 0, %v1835
    %v1837 = vrot.slane %v1825, %v1836
    %v1838 = vlaneseq
    %v1839 = vshrl.u32 %v1838, 7
    %v1840 = vsub.s32 1, %v1839
    %v1841 = vrot.slane %v1825, %v1840
    %1846 = vrot.lane.b32.xlu0 %v1761, 126
    %v1847 = vpop.permute.xlu0 %1846
    %1848 = vrot.lane.b32.xlu0 %v1769, 126
    %v1849 = vpop.permute.xlu0 %1848
    %1850 = vrot.lane.b32.xlu0 %v1768, 126
    %v1851 = vpop.permute.xlu0 %1850
    %1852 = vrot.lane.b32.xlu0 %v1777, 126
    %v1853 = vpop.permute.xlu0 %1852
    %1854 = vrot.lane.b32.xlu0 %v1785, 126
    %v1855 = vpop.permute.xlu0 %1854
    %1856 = vrot.lane.b32.xlu0 %v1784, 126
    %v1857 = vpop.permute.xlu0 %1856
    %vm1858 = vcmask 1031168
    %v1859 = vsel %vm1858, %v1847, %v1849
    %v1860 = vsel %vm1858, %v1849, %v1851
    %v1861 = vsel %vm1858, %v1853, %v1855
    %v1862 = vsel %vm1858, %v1855, %v1857
    %v1867 = vmul.f32 %v1829, %v1859
    %v1868 = vmul.f32 %v1833, %v1860
    %v1869 = vmul.f32 %v1837, %v1861
    %v1870 = vmul.f32 %v1841, %v1862
    %v1871 = vadd.f32 %v1811, %v1867
    %v1872 = vadd.f32 %v1812, %v1868
    %v1873 = vadd.f32 %v1813, %v1869
    %v1874 = vadd.f32 %v1814, %v1870
    %s1875 = scalar_lea.vmem [#allocation7], 108
    %v1876 = vld [vmem:[%s1875] sm:$0xf]
    %v1879 = vunpack.c.l.s4 1966171168
    %v1880 = vunpack.c.0.s8 %v1879
    %v1881 = vlaneseq
    %v1882 = vshrl.u32 %v1881, 7
    %v1883 = vsub.s32 %v1880, %v1882
    %v1884 = vrot.slane %v1876, %v1883
    %v1885 = vcombine.high %v1884, %v1884
    %v1886 = vlaneseq
    %v1887 = vshrl.u32 %v1886, 7
    %v1888 = vsub.s32 0, %v1887
    %v1889 = vrot.slane %v1884, %v1888
    %v1890 = vlaneseq
    %v1891 = vshrl.u32 %v1890, 7
    %v1892 = vsub.s32 1, %v1891
    %v1893 = vrot.slane %v1884, %v1892
    %v1894 = vlaneseq
    %v1895 = vshrl.u32 %v1894, 7
    %v1896 = vsub.s32 0, %v1895
    %v1897 = vrot.slane %v1885, %v1896
    %v1898 = vlaneseq
    %v1899 = vshrl.u32 %v1898, 7
    %v1900 = vsub.s32 1, %v1899
    %v1901 = vrot.slane %v1885, %v1900
    %1906 = vrot.lane.b32.xlu0 %v1761, 125
    %v1907 = vpop.permute.xlu0 %1906
    %1908 = vrot.lane.b32.xlu0 %v1769, 125
    %v1909 = vpop.permute.xlu0 %1908
    %1910 = vrot.lane.b32.xlu0 %v1768, 125
    %v1911 = vpop.permute.xlu0 %1910
    %1912 = vrot.lane.b32.xlu0 %v1777, 125
    %v1913 = vpop.permute.xlu0 %1912
    %1914 = vrot.lane.b32.xlu0 %v1785, 125
    %v1915 = vpop.permute.xlu0 %1914
    %1916 = vrot.lane.b32.xlu0 %v1784, 125
    %v1917 = vpop.permute.xlu0 %1916
    %vm1918 = vcmask 1022976
    %v1919 = vsel %vm1918, %v1907, %v1909
    %v1920 = vsel %vm1918, %v1909, %v1911
    %v1921 = vsel %vm1918, %v1913, %v1915
    %v1922 = vsel %vm1918, %v1915, %v1917
    %v1927 = vmul.f32 %v1889, %v1919
    %v1928 = vmul.f32 %v1893, %v1920
    %v1929 = vmul.f32 %v1897, %v1921
    %v1930 = vmul.f32 %v1901, %v1922
    %v1931 = vadd.f32 %v1871, %v1927
    %v1932 = vadd.f32 %v1872, %v1928
    %v1933 = vadd.f32 %v1873, %v1929
    %v1934 = vadd.f32 %v1874, %v1930
    %s1935 = scalar_lea.vmem [#allocation7], 112
    %v1936 = vld [vmem:[%s1935] sm:$0xf]
    %v1939 = vunpack.c.l.s4 1966171168
    %v1940 = vunpack.c.0.s8 %v1939
    %v1941 = vlaneseq
    %v1942 = vshrl.u32 %v1941, 7
    %v1943 = vsub.s32 %v1940, %v1942
    %v1944 = vrot.slane %v1936, %v1943
    %v1945 = vcombine.high %v1944, %v1944
    %v1946 = vlaneseq
    %v1947 = vshrl.u32 %v1946, 7
    %v1948 = vsub.s32 0, %v1947
    %v1949 = vrot.slane %v1944, %v1948
    %v1950 = vlaneseq
    %v1951 = vshrl.u32 %v1950, 7
    %v1952 = vsub.s32 1, %v1951
    %v1953 = vrot.slane %v1944, %v1952
    %v1954 = vlaneseq
    %v1955 = vshrl.u32 %v1954, 7
    %v1956 = vsub.s32 0, %v1955
    %v1957 = vrot.slane %v1945, %v1956
    %v1958 = vlaneseq
    %v1959 = vshrl.u32 %v1958, 7
    %v1960 = vsub.s32 1, %v1959
    %v1961 = vrot.slane %v1945, %v1960
    %1966 = vrot.lane.b32.xlu0 %v1761, 115
    %v1967 = vpop.permute.xlu0 %1966
    %1968 = vrot.lane.b32.xlu0 %v1769, 115
    %v1969 = vpop.permute.xlu0 %1968
    %1970 = vrot.lane.b32.xlu0 %v1768, 115
    %v1971 = vpop.permute.xlu0 %1970
    %1972 = vrot.lane.b32.xlu0 %v1777, 115
    %v1973 = vpop.permute.xlu0 %1972
    %1974 = vrot.lane.b32.xlu0 %v1785, 115
    %v1975 = vpop.permute.xlu0 %1974
    %1976 = vrot.lane.b32.xlu0 %v1784, 115
    %v1977 = vpop.permute.xlu0 %1976
    %vm1978 = vcmask 941056
    %v1979 = vsel %vm1978, %v1967, %v1969
    %v1980 = vsel %vm1978, %v1969, %v1971
    %v1981 = vsel %vm1978, %v1973, %v1975
    %v1982 = vsel %vm1978, %v1975, %v1977
    %v1987 = vmul.f32 %v1949, %v1979
    %v1988 = vmul.f32 %v1953, %v1980
    %v1989 = vmul.f32 %v1957, %v1981
    %v1990 = vmul.f32 %v1961, %v1982
    %v1991 = vadd.f32 %v1931, %v1987
    %v1992 = vadd.f32 %v1932, %v1988
    %v1993 = vadd.f32 %v1933, %v1989
    %v1994 = vadd.f32 %v1934, %v1990
    %s1995 = scalar_lea.vmem [#allocation7], 116
    %v1996 = vld [vmem:[%s1995] sm:$0xf]
    %v1999 = vunpack.c.l.s4 1966171168
    %v2000 = vunpack.c.0.s8 %v1999
    %v2001 = vlaneseq
    %v2002 = vshrl.u32 %v2001, 7
    %v2003 = vsub.s32 %v2000, %v2002
    %v2004 = vrot.slane %v1996, %v2003
    %v2005 = vcombine.high %v2004, %v2004
    %v2006 = vlaneseq
    %v2007 = vshrl.u32 %v2006, 7
    %v2008 = vsub.s32 0, %v2007
    %v2009 = vrot.slane %v2004, %v2008
    %v2010 = vlaneseq
    %v2011 = vshrl.u32 %v2010, 7
    %v2012 = vsub.s32 1, %v2011
    %v2013 = vrot.slane %v2004, %v2012
    %v2014 = vlaneseq
    %v2015 = vshrl.u32 %v2014, 7
    %v2016 = vsub.s32 0, %v2015
    %v2017 = vrot.slane %v2005, %v2016
    %v2018 = vlaneseq
    %v2019 = vshrl.u32 %v2018, 7
    %v2020 = vsub.s32 1, %v2019
    %v2021 = vrot.slane %v2005, %v2020
    %2026 = vrot.lane.b32.xlu0 %v1761, 114
    %v2027 = vpop.permute.xlu0 %2026
    %2028 = vrot.lane.b32.xlu0 %v1769, 114
    %v2029 = vpop.permute.xlu0 %2028
    %2030 = vrot.lane.b32.xlu0 %v1768, 114
    %v2031 = vpop.permute.xlu0 %2030
    %2032 = vrot.lane.b32.xlu0 %v1777, 114
    %v2033 = vpop.permute.xlu0 %2032
    %2034 = vrot.lane.b32.xlu0 %v1785, 114
    %v2035 = vpop.permute.xlu0 %2034
    %2036 = vrot.lane.b32.xlu0 %v1784, 114
    %v2037 = vpop.permute.xlu0 %2036
    %vm2038 = vcmask 932864
    %v2039 = vsel %vm2038, %v2027, %v2029
    %v2040 = vsel %vm2038, %v2029, %v2031
    %v2041 = vsel %vm2038, %v2033, %v2035
    %v2042 = vsel %vm2038, %v2035, %v2037
    %v2047 = vmul.f32 %v2009, %v2039
    %v2048 = vmul.f32 %v2013, %v2040
    %v2049 = vmul.f32 %v2017, %v2041
    %v2050 = vmul.f32 %v2021, %v2042
    %v2051 = vadd.f32 %v1991, %v2047
    %v2052 = vadd.f32 %v1992, %v2048
    %v2053 = vadd.f32 %v1993, %v2049
    %v2054 = vadd.f32 %v1994, %v2050
    %s2055 = scalar_lea.vmem [#allocation7], 120
    %v2056 = vld [vmem:[%s2055] sm:$0xf]
    %v2059 = vunpack.c.l.s4 1966171168
    %v2060 = vunpack.c.0.s8 %v2059
    %v2061 = vlaneseq
    %v2062 = vshrl.u32 %v2061, 7
    %v2063 = vsub.s32 %v2060, %v2062
    %v2064 = vrot.slane %v2056, %v2063
    %v2065 = vcombine.high %v2064, %v2064
    %v2066 = vlaneseq
    %v2067 = vshrl.u32 %v2066, 7
    %v2068 = vsub.s32 0, %v2067
    %v2069 = vrot.slane %v2064, %v2068
    %v2070 = vlaneseq
    %v2071 = vshrl.u32 %v2070, 7
    %v2072 = vsub.s32 1, %v2071
    %v2073 = vrot.slane %v2064, %v2072
    %v2074 = vlaneseq
    %v2075 = vshrl.u32 %v2074, 7
    %v2076 = vsub.s32 0, %v2075
    %v2077 = vrot.slane %v2065, %v2076
    %v2078 = vlaneseq
    %v2079 = vshrl.u32 %v2078, 7
    %v2080 = vsub.s32 1, %v2079
    %v2081 = vrot.slane %v2065, %v2080
    %2086 = vrot.lane.b32.xlu0 %v1761, 113
    %v2087 = vpop.permute.xlu0 %2086
    %2088 = vrot.lane.b32.xlu0 %v1769, 113
    %v2089 = vpop.permute.xlu0 %2088
    %2090 = vrot.lane.b32.xlu0 %v1768, 113
    %v2091 = vpop.permute.xlu0 %2090
    %2092 = vrot.lane.b32.xlu0 %v1777, 113
    %v2093 = vpop.permute.xlu0 %2092
    %2094 = vrot.lane.b32.xlu0 %v1785, 113
    %v2095 = vpop.permute.xlu0 %2094
    %2096 = vrot.lane.b32.xlu0 %v1784, 113
    %v2097 = vpop.permute.xlu0 %2096
    %vm2098 = vcmask 924672
    %v2099 = vsel %vm2098, %v2087, %v2089
    %v2100 = vsel %vm2098, %v2089, %v2091
    %v2101 = vsel %vm2098, %v2093, %v2095
    %v2102 = vsel %vm2098, %v2095, %v2097
    %v2107 = vmul.f32 %v2069, %v2099
    %v2108 = vmul.f32 %v2073, %v2100
    %v2109 = vmul.f32 %v2077, %v2101
    %v2110 = vmul.f32 %v2081, %v2102
    %v2111 = vadd.f32 %v2051, %v2107
    %v2112 = vadd.f32 %v2052, %v2108
    %v2113 = vadd.f32 %v2053, %v2109
    %v2114 = vadd.f32 %v2054, %v2110
    %s2115 = scalar_lea.vmem [#allocation7], 124
    %v2116 = vld [vmem:[%s2115] sm:$0xf]
    %v2119 = vunpack.c.l.s4 1966171168
    %v2120 = vunpack.c.0.s8 %v2119
    %v2121 = vlaneseq
    %v2122 = vshrl.u32 %v2121, 7
    %v2123 = vsub.s32 %v2120, %v2122
    %v2124 = vrot.slane %v2116, %v2123
    %v2125 = vcombine.high %v2124, %v2124
    %v2126 = vlaneseq
    %v2127 = vshrl.u32 %v2126, 7
    %v2128 = vsub.s32 0, %v2127
    %v2129 = vrot.slane %v2124, %v2128
    %v2130 = vlaneseq
    %v2131 = vshrl.u32 %v2130, 7
    %v2132 = vsub.s32 1, %v2131
    %v2133 = vrot.slane %v2124, %v2132
    %v2134 = vlaneseq
    %v2135 = vshrl.u32 %v2134, 7
    %v2136 = vsub.s32 0, %v2135
    %v2137 = vrot.slane %v2125, %v2136
    %v2138 = vlaneseq
    %v2139 = vshrl.u32 %v2138, 7
    %v2140 = vsub.s32 1, %v2139
    %v2141 = vrot.slane %v2125, %v2140
    %2146 = vrot.lane.b32.xlu0 %v1761, 112
    %v2147 = vpop.permute.xlu0 %2146
    %2148 = vrot.lane.b32.xlu0 %v1769, 112
    %v2149 = vpop.permute.xlu0 %2148
    %2150 = vrot.lane.b32.xlu0 %v1768, 112
    %v2151 = vpop.permute.xlu0 %2150
    %2152 = vrot.lane.b32.xlu0 %v1777, 112
    %v2153 = vpop.permute.xlu0 %2152
    %2154 = vrot.lane.b32.xlu0 %v1785, 112
    %v2155 = vpop.permute.xlu0 %2154
    %2156 = vrot.lane.b32.xlu0 %v1784, 112
    %v2157 = vpop.permute.xlu0 %2156
    %vm2158 = vcmask 916480
    %v2159 = vsel %vm2158, %v2147, %v2149
    %v2160 = vsel %vm2158, %v2149, %v2151
    %v2161 = vsel %vm2158, %v2153, %v2155
    %v2162 = vsel %vm2158, %v2155, %v2157
    %v2167 = vmul.f32 %v2129, %v2159
    %v2168 = vmul.f32 %v2133, %v2160
    %v2169 = vmul.f32 %v2137, %v2161
    %v2170 = vmul.f32 %v2141, %v2162
    %v2171 = vadd.f32 %v2111, %v2167
    %v2172 = vadd.f32 %v2112, %v2168
    %v2173 = vadd.f32 %v2113, %v2169
    %v2174 = vadd.f32 %v2114, %v2170
    %s2175 = scalar_lea.vmem [#allocation7], 128
    %v2176 = vld [vmem:[%s2175] sm:$0xf]
    %v2179 = vunpack.c.l.s4 1966171168
    %v2180 = vunpack.c.0.s8 %v2179
    %v2181 = vlaneseq
    %v2182 = vshrl.u32 %v2181, 7
    %v2183 = vsub.s32 %v2180, %v2182
    %v2184 = vrot.slane %v2176, %v2183
    %v2185 = vcombine.high %v2184, %v2184
    %v2186 = vlaneseq
    %v2187 = vshrl.u32 %v2186, 7
    %v2188 = vsub.s32 0, %v2187
    %v2189 = vrot.slane %v2184, %v2188
    %v2190 = vlaneseq
    %v2191 = vshrl.u32 %v2190, 7
    %v2192 = vsub.s32 1, %v2191
    %v2193 = vrot.slane %v2184, %v2192
    %v2194 = vlaneseq
    %v2195 = vshrl.u32 %v2194, 7
    %v2196 = vsub.s32 0, %v2195
    %v2197 = vrot.slane %v2185, %v2196
    %v2198 = vlaneseq
    %v2199 = vshrl.u32 %v2198, 7
    %v2200 = vsub.s32 1, %v2199
    %v2201 = vrot.slane %v2185, %v2200
    %2206 = vrot.lane.b32.xlu0 %v1761, 111
    %v2207 = vpop.permute.xlu0 %2206
    %2208 = vrot.lane.b32.xlu0 %v1769, 111
    %v2209 = vpop.permute.xlu0 %2208
    %2210 = vrot.lane.b32.xlu0 %v1768, 111
    %v2211 = vpop.permute.xlu0 %2210
    %2212 = vrot.lane.b32.xlu0 %v1777, 111
    %v2213 = vpop.permute.xlu0 %2212
    %2214 = vrot.lane.b32.xlu0 %v1785, 111
    %v2215 = vpop.permute.xlu0 %2214
    %2216 = vrot.lane.b32.xlu0 %v1784, 111
    %v2217 = vpop.permute.xlu0 %2216
    %vm2218 = vcmask 908288
    %v2219 = vsel %vm2218, %v2207, %v2209
    %v2220 = vsel %vm2218, %v2209, %v2211
    %v2221 = vsel %vm2218, %v2213, %v2215
    %v2222 = vsel %vm2218, %v2215, %v2217
    %v2227 = vmul.f32 %v2189, %v2219
    %v2228 = vmul.f32 %v2193, %v2220
    %v2229 = vmul.f32 %v2197, %v2221
    %v2230 = vmul.f32 %v2201, %v2222
    %v2231 = vadd.f32 %v2171, %v2227
    %v2232 = vadd.f32 %v2172, %v2228
    %v2233 = vadd.f32 %v2173, %v2229
    %v2234 = vadd.f32 %v2174, %v2230
    %s2235 = scalar_lea.vmem [#allocation7], 132
    %v2236 = vld [vmem:[%s2235] sm:$0xf]
    %v2239 = vunpack.c.l.s4 1966171168
    %v2240 = vunpack.c.0.s8 %v2239
    %v2241 = vlaneseq
    %v2242 = vshrl.u32 %v2241, 7
    %v2243 = vsub.s32 %v2240, %v2242
    %v2244 = vrot.slane %v2236, %v2243
    %v2245 = vcombine.high %v2244, %v2244
    %v2246 = vlaneseq
    %v2247 = vshrl.u32 %v2246, 7
    %v2248 = vsub.s32 0, %v2247
    %v2249 = vrot.slane %v2244, %v2248
    %v2250 = vlaneseq
    %v2251 = vshrl.u32 %v2250, 7
    %v2252 = vsub.s32 1, %v2251
    %v2253 = vrot.slane %v2244, %v2252
    %v2254 = vlaneseq
    %v2255 = vshrl.u32 %v2254, 7
    %v2256 = vsub.s32 0, %v2255
    %v2257 = vrot.slane %v2245, %v2256
    %v2258 = vlaneseq
    %v2259 = vshrl.u32 %v2258, 7
    %v2260 = vsub.s32 1, %v2259
    %v2261 = vrot.slane %v2245, %v2260
    %2266 = vrot.lane.b32.xlu0 %v1761, 110
    %v2267 = vpop.permute.xlu0 %2266
    %2268 = vrot.lane.b32.xlu0 %v1769, 110
    %v2269 = vpop.permute.xlu0 %2268
    %2270 = vrot.lane.b32.xlu0 %v1768, 110
    %v2271 = vpop.permute.xlu0 %2270
    %2272 = vrot.lane.b32.xlu0 %v1777, 110
    %v2273 = vpop.permute.xlu0 %2272
    %2274 = vrot.lane.b32.xlu0 %v1785, 110
    %v2275 = vpop.permute.xlu0 %2274
    %2276 = vrot.lane.b32.xlu0 %v1784, 110
    %v2277 = vpop.permute.xlu0 %2276
    %vm2278 = vcmask 900096
    %v2279 = vsel %vm2278, %v2267, %v2269
    %v2280 = vsel %vm2278, %v2269, %v2271
    %v2281 = vsel %vm2278, %v2273, %v2275
    %v2282 = vsel %vm2278, %v2275, %v2277
    %v2287 = vmul.f32 %v2249, %v2279
    %v2288 = vmul.f32 %v2253, %v2280
    %v2289 = vmul.f32 %v2257, %v2281
    %v2290 = vmul.f32 %v2261, %v2282
    %v2291 = vadd.f32 %v2231, %v2287
    %v2292 = vadd.f32 %v2232, %v2288
    %v2293 = vadd.f32 %v2233, %v2289
    %v2294 = vadd.f32 %v2234, %v2290
    %s2295 = scalar_lea.vmem [#allocation7], 136
    %v2296 = vld [vmem:[%s2295] sm:$0xf]
    %v2299 = vunpack.c.l.s4 1966171168
    %v2300 = vunpack.c.0.s8 %v2299
    %v2301 = vlaneseq
    %v2302 = vshrl.u32 %v2301, 7
    %v2303 = vsub.s32 %v2300, %v2302
    %v2304 = vrot.slane %v2296, %v2303
    %v2305 = vcombine.high %v2304, %v2304
    %v2306 = vlaneseq
    %v2307 = vshrl.u32 %v2306, 7
    %v2308 = vsub.s32 0, %v2307
    %v2309 = vrot.slane %v2304, %v2308
    %v2310 = vlaneseq
    %v2311 = vshrl.u32 %v2310, 7
    %v2312 = vsub.s32 1, %v2311
    %v2313 = vrot.slane %v2304, %v2312
    %v2314 = vlaneseq
    %v2315 = vshrl.u32 %v2314, 7
    %v2316 = vsub.s32 0, %v2315
    %v2317 = vrot.slane %v2305, %v2316
    %v2318 = vlaneseq
    %v2319 = vshrl.u32 %v2318, 7
    %v2320 = vsub.s32 1, %v2319
    %v2321 = vrot.slane %v2305, %v2320
    %2326 = vrot.lane.b32.xlu0 %v1761, 109
    %v2327 = vpop.permute.xlu0 %2326
    %2328 = vrot.lane.b32.xlu0 %v1769, 109
    %v2329 = vpop.permute.xlu0 %2328
    %2330 = vrot.lane.b32.xlu0 %v1768, 109
    %v2331 = vpop.permute.xlu0 %2330
    %2332 = vrot.lane.b32.xlu0 %v1777, 109
    %v2333 = vpop.permute.xlu0 %2332
    %2334 = vrot.lane.b32.xlu0 %v1785, 109
    %v2335 = vpop.permute.xlu0 %2334
    %2336 = vrot.lane.b32.xlu0 %v1784, 109
    %v2337 = vpop.permute.xlu0 %2336
    %vm2338 = vcmask 891904
    %v2339 = vsel %vm2338, %v2327, %v2329
    %v2340 = vsel %vm2338, %v2329, %v2331
    %v2341 = vsel %vm2338, %v2333, %v2335
    %v2342 = vsel %vm2338, %v2335, %v2337
    %v2347 = vmul.f32 %v2309, %v2339
    %v2348 = vmul.f32 %v2313, %v2340
    %v2349 = vmul.f32 %v2317, %v2341
    %v2350 = vmul.f32 %v2321, %v2342
    %v2351 = vadd.f32 %v2291, %v2347
    %v2352 = vadd.f32 %v2292, %v2348
    %v2353 = vadd.f32 %v2293, %v2349
    %v2354 = vadd.f32 %v2294, %v2350
    %s2355 = scalar_lea.vmem [#allocation7], 140
    %v2356 = vld [vmem:[%s2355] sm:$0xf]
    %v2359 = vunpack.c.l.s4 1966171168
    %v2360 = vunpack.c.0.s8 %v2359
    %v2361 = vlaneseq
    %v2362 = vshrl.u32 %v2361, 7
    %v2363 = vsub.s32 %v2360, %v2362
    %v2364 = vrot.slane %v2356, %v2363
    %v2365 = vcombine.high %v2364, %v2364
    %v2366 = vlaneseq
    %v2367 = vshrl.u32 %v2366, 7
    %v2368 = vsub.s32 0, %v2367
    %v2369 = vrot.slane %v2364, %v2368
    %v2370 = vlaneseq
    %v2371 = vshrl.u32 %v2370, 7
    %v2372 = vsub.s32 1, %v2371
    %v2373 = vrot.slane %v2364, %v2372
    %v2374 = vlaneseq
    %v2375 = vshrl.u32 %v2374, 7
    %v2376 = vsub.s32 0, %v2375
    %v2377 = vrot.slane %v2365, %v2376
    %v2378 = vlaneseq
    %v2379 = vshrl.u32 %v2378, 7
    %v2380 = vsub.s32 1, %v2379
    %v2381 = vrot.slane %v2365, %v2380
    %2386 = vrot.lane.b32.xlu0 %v1761, 99
    %v2387 = vpop.permute.xlu0 %2386
    %2388 = vrot.lane.b32.xlu0 %v1769, 99
    %v2389 = vpop.permute.xlu0 %2388
    %2390 = vrot.lane.b32.xlu0 %v1768, 99
    %v2391 = vpop.permute.xlu0 %2390
    %2392 = vrot.lane.b32.xlu0 %v1777, 99
    %v2393 = vpop.permute.xlu0 %2392
    %2394 = vrot.lane.b32.xlu0 %v1785, 99
    %v2395 = vpop.permute.xlu0 %2394
    %2396 = vrot.lane.b32.xlu0 %v1784, 99
    %v2397 = vpop.permute.xlu0 %2396
    %vm2398 = vcmask 809984
    %v2399 = vsel %vm2398, %v2387, %v2389
    %v2400 = vsel %vm2398, %v2389, %v2391
    %v2401 = vsel %vm2398, %v2393, %v2395
    %v2402 = vsel %vm2398, %v2395, %v2397
    %v2407 = vmul.f32 %v2369, %v2399
    %v2408 = vmul.f32 %v2373, %v2400
    %v2409 = vmul.f32 %v2377, %v2401
    %v2410 = vmul.f32 %v2381, %v2402
    %v2411 = vadd.f32 %v2351, %v2407
    %v2412 = vadd.f32 %v2352, %v2408
    %v2413 = vadd.f32 %v2353, %v2409
    %v2414 = vadd.f32 %v2354, %v2410
    %s2415 = scalar_lea.vmem [#allocation7], 144
    %v2416 = vld [vmem:[%s2415] sm:$0xf]
    %v2419 = vunpack.c.l.s4 1966171168
    %v2420 = vunpack.c.0.s8 %v2419
    %v2421 = vlaneseq
    %v2422 = vshrl.u32 %v2421, 7
    %v2423 = vsub.s32 %v2420, %v2422
    %v2424 = vrot.slane %v2416, %v2423
    %v2425 = vcombine.high %v2424, %v2424
    %v2426 = vlaneseq
    %v2427 = vshrl.u32 %v2426, 7
    %v2428 = vsub.s32 0, %v2427
    %v2429 = vrot.slane %v2424, %v2428
    %v2430 = vlaneseq
    %v2431 = vshrl.u32 %v2430, 7
    %v2432 = vsub.s32 1, %v2431
    %v2433 = vrot.slane %v2424, %v2432
    %v2434 = vlaneseq
    %v2435 = vshrl.u32 %v2434, 7
    %v2436 = vsub.s32 0, %v2435
    %v2437 = vrot.slane %v2425, %v2436
    %v2438 = vlaneseq
    %v2439 = vshrl.u32 %v2438, 7
    %v2440 = vsub.s32 1, %v2439
    %v2441 = vrot.slane %v2425, %v2440
    %2446 = vrot.lane.b32.xlu0 %v1761, 98
    %v2447 = vpop.permute.xlu0 %2446
    %2448 = vrot.lane.b32.xlu0 %v1769, 98
    %v2449 = vpop.permute.xlu0 %2448
    %2450 = vrot.lane.b32.xlu0 %v1768, 98
    %v2451 = vpop.permute.xlu0 %2450
    %2452 = vrot.lane.b32.xlu0 %v1777, 98
    %v2453 = vpop.permute.xlu0 %2452
    %2454 = vrot.lane.b32.xlu0 %v1785, 98
    %v2455 = vpop.permute.xlu0 %2454
    %2456 = vrot.lane.b32.xlu0 %v1784, 98
    %v2457 = vpop.permute.xlu0 %2456
    %vm2458 = vcmask 801792
    %v2459 = vsel %vm2458, %v2447, %v2449
    %v2460 = vsel %vm2458, %v2449, %v2451
    %v2461 = vsel %vm2458, %v2453, %v2455
    %v2462 = vsel %vm2458, %v2455, %v2457
    %v2467 = vmul.f32 %v2429, %v2459
    %v2468 = vmul.f32 %v2433, %v2460
    %v2469 = vmul.f32 %v2437, %v2461
    %v2470 = vmul.f32 %v2441, %v2462
    %v2471 = vadd.f32 %v2411, %v2467
    %v2472 = vadd.f32 %v2412, %v2468
    %v2473 = vadd.f32 %v2413, %v2469
    %v2474 = vadd.f32 %v2414, %v2470
    %s2475 = scalar_lea.vmem [#allocation7], 148
    %v2476 = vld [vmem:[%s2475] sm:$0xf]
    %v2479 = vunpack.c.l.s4 1966171168
    %v2480 = vunpack.c.0.s8 %v2479
    %v2481 = vlaneseq
    %v2482 = vshrl.u32 %v2481, 7
    %v2483 = vsub.s32 %v2480, %v2482
    %v2484 = vrot.slane %v2476, %v2483
    %v2485 = vcombine.high %v2484, %v2484
    %v2486 = vlaneseq
    %v2487 = vshrl.u32 %v2486, 7
    %v2488 = vsub.s32 0, %v2487
    %v2489 = vrot.slane %v2484, %v2488
    %v2490 = vlaneseq
    %v2491 = vshrl.u32 %v2490, 7
    %v2492 = vsub.s32 1, %v2491
    %v2493 = vrot.slane %v2484, %v2492
    %v2494 = vlaneseq
    %v2495 = vshrl.u32 %v2494, 7
    %v2496 = vsub.s32 0, %v2495
    %v2497 = vrot.slane %v2485, %v2496
    %v2498 = vlaneseq
    %v2499 = vshrl.u32 %v2498, 7
    %v2500 = vsub.s32 1, %v2499
    %v2501 = vrot.slane %v2485, %v2500
    %2506 = vrot.lane.b32.xlu0 %v1761, 97
    %v2507 = vpop.permute.xlu0 %2506
    %2508 = vrot.lane.b32.xlu0 %v1769, 97
    %v2509 = vpop.permute.xlu0 %2508
    %2510 = vrot.lane.b32.xlu0 %v1768, 97
    %v2511 = vpop.permute.xlu0 %2510
    %2512 = vrot.lane.b32.xlu0 %v1777, 97
    %v2513 = vpop.permute.xlu0 %2512
    %2514 = vrot.lane.b32.xlu0 %v1785, 97
    %v2515 = vpop.permute.xlu0 %2514
    %2516 = vrot.lane.b32.xlu0 %v1784, 97
    %v2517 = vpop.permute.xlu0 %2516
    %vm2518 = vcmask 793600
    %v2519 = vsel %vm2518, %v2507, %v2509
    %v2520 = vsel %vm2518, %v2509, %v2511
    %v2521 = vsel %vm2518, %v2513, %v2515
    %v2522 = vsel %vm2518, %v2515, %v2517
    %v2527 = vmul.f32 %v2489, %v2519
    %v2528 = vmul.f32 %v2493, %v2520
    %v2529 = vmul.f32 %v2497, %v2521
    %v2530 = vmul.f32 %v2501, %v2522
    %v2531 = vadd.f32 %v2471, %v2527
    %v2532 = vadd.f32 %v2472, %v2528
    %v2533 = vadd.f32 %v2473, %v2529
    %v2534 = vadd.f32 %v2474, %v2530
    %s2535 = scalar_lea.vmem [#allocation7], 152
    %v2536 = vld [vmem:[%s2535] sm:$0xf]
    %v2539 = vunpack.c.l.s4 1966171168
    %v2540 = vunpack.c.0.s8 %v2539
    %v2541 = vlaneseq
    %v2542 = vshrl.u32 %v2541, 7
    %v2543 = vsub.s32 %v2540, %v2542
    %v2544 = vrot.slane %v2536, %v2543
    %v2545 = vcombine.high %v2544, %v2544
    %v2546 = vlaneseq
    %v2547 = vshrl.u32 %v2546, 7
    %v2548 = vsub.s32 0, %v2547
    %v2549 = vrot.slane %v2544, %v2548
    %v2550 = vlaneseq
    %v2551 = vshrl.u32 %v2550, 7
    %v2552 = vsub.s32 1, %v2551
    %v2553 = vrot.slane %v2544, %v2552
    %v2554 = vlaneseq
    %v2555 = vshrl.u32 %v2554, 7
    %v2556 = vsub.s32 0, %v2555
    %v2557 = vrot.slane %v2545, %v2556
    %v2558 = vlaneseq
    %v2559 = vshrl.u32 %v2558, 7
    %v2560 = vsub.s32 1, %v2559
    %v2561 = vrot.slane %v2545, %v2560
    %2566 = vrot.lane.b32.xlu0 %v1761, 96
    %v2567 = vpop.permute.xlu0 %2566
    %2568 = vrot.lane.b32.xlu0 %v1769, 96
    %v2569 = vpop.permute.xlu0 %2568
    %2570 = vrot.lane.b32.xlu0 %v1768, 96
    %v2571 = vpop.permute.xlu0 %2570
    %2572 = vrot.lane.b32.xlu0 %v1777, 96
    %v2573 = vpop.permute.xlu0 %2572
    %2574 = vrot.lane.b32.xlu0 %v1785, 96
    %v2575 = vpop.permute.xlu0 %2574
    %2576 = vrot.lane.b32.xlu0 %v1784, 96
    %v2577 = vpop.permute.xlu0 %2576
    %vm2578 = vcmask 785408
    %v2579 = vsel %vm2578, %v2567, %v2569
    %v2580 = vsel %vm2578, %v2569, %v2571
    %v2581 = vsel %vm2578, %v2573, %v2575
    %v2582 = vsel %vm2578, %v2575, %v2577
    %v2587 = vmul.f32 %v2549, %v2579
    %v2588 = vmul.f32 %v2553, %v2580
    %v2589 = vmul.f32 %v2557, %v2581
    %v2590 = vmul.f32 %v2561, %v2582
    %v2591 = vadd.f32 %v2531, %v2587
    %v2592 = vadd.f32 %v2532, %v2588
    %v2593 = vadd.f32 %v2533, %v2589
    %v2594 = vadd.f32 %v2534, %v2590
    %s2595 = scalar_lea.vmem [#allocation7], 156
    %v2596 = vld [vmem:[%s2595] sm:$0xf]
    %v2599 = vunpack.c.l.s4 1966171168
    %v2600 = vunpack.c.0.s8 %v2599
    %v2601 = vlaneseq
    %v2602 = vshrl.u32 %v2601, 7
    %v2603 = vsub.s32 %v2600, %v2602
    %v2604 = vrot.slane %v2596, %v2603
    %v2605 = vcombine.high %v2604, %v2604
    %v2606 = vlaneseq
    %v2607 = vshrl.u32 %v2606, 7
    %v2608 = vsub.s32 0, %v2607
    %v2609 = vrot.slane %v2604, %v2608
    %v2610 = vlaneseq
    %v2611 = vshrl.u32 %v2610, 7
    %v2612 = vsub.s32 1, %v2611
    %v2613 = vrot.slane %v2604, %v2612
    %v2614 = vlaneseq
    %v2615 = vshrl.u32 %v2614, 7
    %v2616 = vsub.s32 0, %v2615
    %v2617 = vrot.slane %v2605, %v2616
    %v2618 = vlaneseq
    %v2619 = vshrl.u32 %v2618, 7
    %v2620 = vsub.s32 1, %v2619
    %v2621 = vrot.slane %v2605, %v2620
    %2626 = vrot.lane.b32.xlu0 %v1761, 95
    %v2627 = vpop.permute.xlu0 %2626
    %2628 = vrot.lane.b32.xlu0 %v1769, 95
    %v2629 = vpop.permute.xlu0 %2628
    %2630 = vrot.lane.b32.xlu0 %v1768, 95
    %v2631 = vpop.permute.xlu0 %2630
    %2632 = vrot.lane.b32.xlu0 %v1777, 95
    %v2633 = vpop.permute.xlu0 %2632
    %2634 = vrot.lane.b32.xlu0 %v1785, 95
    %v2635 = vpop.permute.xlu0 %2634
    %2636 = vrot.lane.b32.xlu0 %v1784, 95
    %v2637 = vpop.permute.xlu0 %2636
    %vm2638 = vcmask 777216
    %v2639 = vsel %vm2638, %v2627, %v2629
    %v2640 = vsel %vm2638, %v2629, %v2631
    %v2641 = vsel %vm2638, %v2633, %v2635
    %v2642 = vsel %vm2638, %v2635, %v2637
    %v2647 = vmul.f32 %v2609, %v2639
    %v2648 = vmul.f32 %v2613, %v2640
    %v2649 = vmul.f32 %v2617, %v2641
    %v2650 = vmul.f32 %v2621, %v2642
    %v2651 = vadd.f32 %v2591, %v2647
    %v2652 = vadd.f32 %v2592, %v2648
    %v2653 = vadd.f32 %v2593, %v2649
    %v2654 = vadd.f32 %v2594, %v2650
    %s2655 = scalar_lea.vmem [#allocation7], 160
    %v2656 = vld [vmem:[%s2655] sm:$0xf]
    %v2659 = vunpack.c.l.s4 1966171168
    %v2660 = vunpack.c.0.s8 %v2659
    %v2661 = vlaneseq
    %v2662 = vshrl.u32 %v2661, 7
    %v2663 = vsub.s32 %v2660, %v2662
    %v2664 = vrot.slane %v2656, %v2663
    %v2665 = vcombine.high %v2664, %v2664
    %v2666 = vlaneseq
    %v2667 = vshrl.u32 %v2666, 7
    %v2668 = vsub.s32 0, %v2667
    %v2669 = vrot.slane %v2664, %v2668
    %v2670 = vlaneseq
    %v2671 = vshrl.u32 %v2670, 7
    %v2672 = vsub.s32 1, %v2671
    %v2673 = vrot.slane %v2664, %v2672
    %v2674 = vlaneseq
    %v2675 = vshrl.u32 %v2674, 7
    %v2676 = vsub.s32 0, %v2675
    %v2677 = vrot.slane %v2665, %v2676
    %v2678 = vlaneseq
    %v2679 = vshrl.u32 %v2678, 7
    %v2680 = vsub.s32 1, %v2679
    %v2681 = vrot.slane %v2665, %v2680
    %2686 = vrot.lane.b32.xlu0 %v1761, 94
    %v2687 = vpop.permute.xlu0 %2686
    %2688 = vrot.lane.b32.xlu0 %v1769, 94
    %v2689 = vpop.permute.xlu0 %2688
    %2690 = vrot.lane.b32.xlu0 %v1768, 94
    %v2691 = vpop.permute.xlu0 %2690
    %2692 = vrot.lane.b32.xlu0 %v1777, 94
    %v2693 = vpop.permute.xlu0 %2692
    %2694 = vrot.lane.b32.xlu0 %v1785, 94
    %v2695 = vpop.permute.xlu0 %2694
    %2696 = vrot.lane.b32.xlu0 %v1784, 94
    %v2697 = vpop.permute.xlu0 %2696
    %vm2698 = vcmask 769024
    %v2699 = vsel %vm2698, %v2687, %v2689
    %v2700 = vsel %vm2698, %v2689, %v2691
    %v2701 = vsel %vm2698, %v2693, %v2695
    %v2702 = vsel %vm2698, %v2695, %v2697
    %v2707 = vmul.f32 %v2669, %v2699
    %v2708 = vmul.f32 %v2673, %v2700
    %v2709 = vmul.f32 %v2677, %v2701
    %v2710 = vmul.f32 %v2681, %v2702
    %v2711 = vadd.f32 %v2651, %v2707
    %v2712 = vadd.f32 %v2652, %v2708
    %v2713 = vadd.f32 %v2653, %v2709
    %v2714 = vadd.f32 %v2654, %v2710
    %s2715 = scalar_lea.vmem [#allocation7], 164
    %v2716 = vld [vmem:[%s2715] sm:$0xf]
    %v2719 = vunpack.c.l.s4 1966171168
    %v2720 = vunpack.c.0.s8 %v2719
    %v2721 = vlaneseq
    %v2722 = vshrl.u32 %v2721, 7
    %v2723 = vsub.s32 %v2720, %v2722
    %v2724 = vrot.slane %v2716, %v2723
    %v2725 = vcombine.high %v2724, %v2724
    %v2726 = vlaneseq
    %v2727 = vshrl.u32 %v2726, 7
    %v2728 = vsub.s32 0, %v2727
    %v2729 = vrot.slane %v2724, %v2728
    %v2730 = vlaneseq
    %v2731 = vshrl.u32 %v2730, 7
    %v2732 = vsub.s32 1, %v2731
    %v2733 = vrot.slane %v2724, %v2732
    %v2734 = vlaneseq
    %v2735 = vshrl.u32 %v2734, 7
    %v2736 = vsub.s32 0, %v2735
    %v2737 = vrot.slane %v2725, %v2736
    %v2738 = vlaneseq
    %v2739 = vshrl.u32 %v2738, 7
    %v2740 = vsub.s32 1, %v2739
    %v2741 = vrot.slane %v2725, %v2740
    %2746 = vrot.lane.b32.xlu0 %v1761, 93
    %v2747 = vpop.permute.xlu0 %2746
    %2748 = vrot.lane.b32.xlu0 %v1769, 93
    %v2749 = vpop.permute.xlu0 %2748
    %2750 = vrot.lane.b32.xlu0 %v1768, 93
    %v2751 = vpop.permute.xlu0 %2750
    %2752 = vrot.lane.b32.xlu0 %v1777, 93
    %v2753 = vpop.permute.xlu0 %2752
    %2754 = vrot.lane.b32.xlu0 %v1785, 93
    %v2755 = vpop.permute.xlu0 %2754
    %2756 = vrot.lane.b32.xlu0 %v1784, 93
    %v2757 = vpop.permute.xlu0 %2756
    %vm2758 = vcmask 760832
    %v2759 = vsel %vm2758, %v2747, %v2749
    %v2760 = vsel %vm2758, %v2749, %v2751
    %v2761 = vsel %vm2758, %v2753, %v2755
    %v2762 = vsel %vm2758, %v2755, %v2757
    %v2767 = vmul.f32 %v2729, %v2759
    %v2768 = vmul.f32 %v2733, %v2760
    %v2769 = vmul.f32 %v2737, %v2761
    %v2770 = vmul.f32 %v2741, %v2762
    %v2771 = vadd.f32 %v2711, %v2767
    %v2772 = vadd.f32 %v2712, %v2768
    %v2773 = vadd.f32 %v2713, %v2769
    %v2774 = vadd.f32 %v2714, %v2770
    %s2775 = scalar_lea.vmem [#allocation7], 168
    %v2776 = vld [vmem:[%s2775] sm:$0xf]
    %v2779 = vunpack.c.l.s4 1966171168
    %v2780 = vunpack.c.0.s8 %v2779
    %v2781 = vlaneseq
    %v2782 = vshrl.u32 %v2781, 7
    %v2783 = vsub.s32 %v2780, %v2782
    %v2784 = vrot.slane %v2776, %v2783
    %v2785 = vcombine.high %v2784, %v2784
    %v2786 = vlaneseq
    %v2787 = vshrl.u32 %v2786, 7
    %v2788 = vsub.s32 0, %v2787
    %v2789 = vrot.slane %v2784, %v2788
    %v2790 = vlaneseq
    %v2791 = vshrl.u32 %v2790, 7
    %v2792 = vsub.s32 1, %v2791
    %v2793 = vrot.slane %v2784, %v2792
    %v2794 = vlaneseq
    %v2795 = vshrl.u32 %v2794, 7
    %v2796 = vsub.s32 0, %v2795
    %v2797 = vrot.slane %v2785, %v2796
    %v2798 = vlaneseq
    %v2799 = vshrl.u32 %v2798, 7
    %v2800 = vsub.s32 1, %v2799
    %v2801 = vrot.slane %v2785, %v2800
    %2806 = vrot.lane.b32.xlu0 %v1761, 83
    %v2807 = vpop.permute.xlu0 %2806
    %2808 = vrot.lane.b32.xlu0 %v1769, 83
    %v2809 = vpop.permute.xlu0 %2808
    %2810 = vrot.lane.b32.xlu0 %v1768, 83
    %v2811 = vpop.permute.xlu0 %2810
    %2812 = vrot.lane.b32.xlu0 %v1777, 83
    %v2813 = vpop.permute.xlu0 %2812
    %2814 = vrot.lane.b32.xlu0 %v1785, 83
    %v2815 = vpop.permute.xlu0 %2814
    %2816 = vrot.lane.b32.xlu0 %v1784, 83
    %v2817 = vpop.permute.xlu0 %2816
    %vm2818 = vcmask 678912
    %v2819 = vsel %vm2818, %v2807, %v2809
    %v2820 = vsel %vm2818, %v2809, %v2811
    %v2821 = vsel %vm2818, %v2813, %v2815
    %v2822 = vsel %vm2818, %v2815, %v2817
    %v2827 = vmul.f32 %v2789, %v2819
    %v2828 = vmul.f32 %v2793, %v2820
    %v2829 = vmul.f32 %v2797, %v2821
    %v2830 = vmul.f32 %v2801, %v2822
    %v2831 = vadd.f32 %v2771, %v2827
    %v2832 = vadd.f32 %v2772, %v2828
    %v2833 = vadd.f32 %v2773, %v2829
    %v2834 = vadd.f32 %v2774, %v2830
    %s2835 = scalar_lea.vmem [#allocation7], 172
    %v2836 = vld [vmem:[%s2835] sm:$0xf]
    %v2839 = vunpack.c.l.s4 1966171168
    %v2840 = vunpack.c.0.s8 %v2839
    %v2841 = vlaneseq
    %v2842 = vshrl.u32 %v2841, 7
    %v2843 = vsub.s32 %v2840, %v2842
    %v2844 = vrot.slane %v2836, %v2843
    %v2845 = vcombine.high %v2844, %v2844
    %v2846 = vlaneseq
    %v2847 = vshrl.u32 %v2846, 7
    %v2848 = vsub.s32 0, %v2847
    %v2849 = vrot.slane %v2844, %v2848
    %v2850 = vlaneseq
    %v2851 = vshrl.u32 %v2850, 7
    %v2852 = vsub.s32 1, %v2851
    %v2853 = vrot.slane %v2844, %v2852
    %v2854 = vlaneseq
    %v2855 = vshrl.u32 %v2854, 7
    %v2856 = vsub.s32 0, %v2855
    %v2857 = vrot.slane %v2845, %v2856
    %v2858 = vlaneseq
    %v2859 = vshrl.u32 %v2858, 7
    %v2860 = vsub.s32 1, %v2859
    %v2861 = vrot.slane %v2845, %v2860
    %2866 = vrot.lane.b32.xlu0 %v1761, 82
    %v2867 = vpop.permute.xlu0 %2866
    %2868 = vrot.lane.b32.xlu0 %v1769, 82
    %v2869 = vpop.permute.xlu0 %2868
    %2870 = vrot.lane.b32.xlu0 %v1768, 82
    %v2871 = vpop.permute.xlu0 %2870
    %2872 = vrot.lane.b32.xlu0 %v1777, 82
    %v2873 = vpop.permute.xlu0 %2872
    %2874 = vrot.lane.b32.xlu0 %v1785, 82
    %v2875 = vpop.permute.xlu0 %2874
    %2876 = vrot.lane.b32.xlu0 %v1784, 82
    %v2877 = vpop.permute.xlu0 %2876
    %vm2878 = vcmask 670720
    %v2879 = vsel %vm2878, %v2867, %v2869
    %v2880 = vsel %vm2878, %v2869, %v2871
    %v2881 = vsel %vm2878, %v2873, %v2875
    %v2882 = vsel %vm2878, %v2875, %v2877
    %v2887 = vmul.f32 %v2849, %v2879
    %v2888 = vmul.f32 %v2853, %v2880
    %v2889 = vmul.f32 %v2857, %v2881
    %v2890 = vmul.f32 %v2861, %v2882
    %v2891 = vadd.f32 %v2831, %v2887
    %v2892 = vadd.f32 %v2832, %v2888
    %v2893 = vadd.f32 %v2833, %v2889
    %v2894 = vadd.f32 %v2834, %v2890
    %s2895 = scalar_lea.vmem [#allocation7], 176
    %v2896 = vld [vmem:[%s2895] sm:$0xf]
    %v2899 = vunpack.c.l.s4 1966171168
    %v2900 = vunpack.c.0.s8 %v2899
    %v2901 = vlaneseq
    %v2902 = vshrl.u32 %v2901, 7
    %v2903 = vsub.s32 %v2900, %v2902
    %v2904 = vrot.slane %v2896, %v2903
    %v2905 = vcombine.high %v2904, %v2904
    %v2906 = vlaneseq
    %v2907 = vshrl.u32 %v2906, 7
    %v2908 = vsub.s32 0, %v2907
    %v2909 = vrot.slane %v2904, %v2908
    %v2910 = vlaneseq
    %v2911 = vshrl.u32 %v2910, 7
    %v2912 = vsub.s32 1, %v2911
    %v2913 = vrot.slane %v2904, %v2912
    %v2914 = vlaneseq
    %v2915 = vshrl.u32 %v2914, 7
    %v2916 = vsub.s32 0, %v2915
    %v2917 = vrot.slane %v2905, %v2916
    %v2918 = vlaneseq
    %v2919 = vshrl.u32 %v2918, 7
    %v2920 = vsub.s32 1, %v2919
    %v2921 = vrot.slane %v2905, %v2920
    %2926 = vrot.lane.b32.xlu0 %v1761, 81
    %v2927 = vpop.permute.xlu0 %2926
    %2928 = vrot.lane.b32.xlu0 %v1769, 81
    %v2929 = vpop.permute.xlu0 %2928
    %2930 = vrot.lane.b32.xlu0 %v1768, 81
    %v2931 = vpop.permute.xlu0 %2930
    %2932 = vrot.lane.b32.xlu0 %v1777, 81
    %v2933 = vpop.permute.xlu0 %2932
    %2934 = vrot.lane.b32.xlu0 %v1785, 81
    %v2935 = vpop.permute.xlu0 %2934
    %2936 = vrot.lane.b32.xlu0 %v1784, 81
    %v2937 = vpop.permute.xlu0 %2936
    %vm2938 = vcmask 662528
    %v2939 = vsel %vm2938, %v2927, %v2929
    %v2940 = vsel %vm2938, %v2929, %v2931
    %v2941 = vsel %vm2938, %v2933, %v2935
    %v2942 = vsel %vm2938, %v2935, %v2937
    %v2947 = vmul.f32 %v2909, %v2939
    %v2948 = vmul.f32 %v2913, %v2940
    %v2949 = vmul.f32 %v2917, %v2941
    %v2950 = vmul.f32 %v2921, %v2942
    %v2951 = vadd.f32 %v2891, %v2947
    %v2952 = vadd.f32 %v2892, %v2948
    %v2953 = vadd.f32 %v2893, %v2949
    %v2954 = vadd.f32 %v2894, %v2950
    %s2955 = scalar_lea.vmem [#allocation7], 180
    %v2956 = vld [vmem:[%s2955] sm:$0xf]
    %v2959 = vunpack.c.l.s4 1966171168
    %v2960 = vunpack.c.0.s8 %v2959
    %v2961 = vlaneseq
    %v2962 = vshrl.u32 %v2961, 7
    %v2963 = vsub.s32 %v2960, %v2962
    %v2964 = vrot.slane %v2956, %v2963
    %v2965 = vcombine.high %v2964, %v2964
    %v2966 = vlaneseq
    %v2967 = vshrl.u32 %v2966, 7
    %v2968 = vsub.s32 0, %v2967
    %v2969 = vrot.slane %v2964, %v2968
    %v2970 = vlaneseq
    %v2971 = vshrl.u32 %v2970, 7
    %v2972 = vsub.s32 1, %v2971
    %v2973 = vrot.slane %v2964, %v2972
    %v2974 = vlaneseq
    %v2975 = vshrl.u32 %v2974, 7
    %v2976 = vsub.s32 0, %v2975
    %v2977 = vrot.slane %v2965, %v2976
    %v2978 = vlaneseq
    %v2979 = vshrl.u32 %v2978, 7
    %v2980 = vsub.s32 1, %v2979
    %v2981 = vrot.slane %v2965, %v2980
    %2986 = vrot.lane.b32.xlu0 %v1761, 80
    %v2987 = vpop.permute.xlu0 %2986
    %2988 = vrot.lane.b32.xlu0 %v1769, 80
    %v2989 = vpop.permute.xlu0 %2988
    %2990 = vrot.lane.b32.xlu0 %v1768, 80
    %v2991 = vpop.permute.xlu0 %2990
    %2992 = vrot.lane.b32.xlu0 %v1777, 80
    %v2993 = vpop.permute.xlu0 %2992
    %2994 = vrot.lane.b32.xlu0 %v1785, 80
    %v2995 = vpop.permute.xlu0 %2994
    %2996 = vrot.lane.b32.xlu0 %v1784, 80
    %v2997 = vpop.permute.xlu0 %2996
    %vm2998 = vcmask 654336
    %v2999 = vsel %vm2998, %v2987, %v2989
    %v3000 = vsel %vm2998, %v2989, %v2991
    %v3001 = vsel %vm2998, %v2993, %v2995
    %v3002 = vsel %vm2998, %v2995, %v2997
    %v3007 = vmul.f32 %v2969, %v2999
    %v3008 = vmul.f32 %v2973, %v3000
    %v3009 = vmul.f32 %v2977, %v3001
    %v3010 = vmul.f32 %v2981, %v3002
    %v3011 = vadd.f32 %v2951, %v3007
    %v3012 = vadd.f32 %v2952, %v3008
    %v3013 = vadd.f32 %v2953, %v3009
    %v3014 = vadd.f32 %v2954, %v3010
    %s3015 = scalar_lea.vmem [#allocation7], 184
    %v3016 = vld [vmem:[%s3015] sm:$0xf]
    %v3019 = vunpack.c.l.s4 1966171168
    %v3020 = vunpack.c.0.s8 %v3019
    %v3021 = vlaneseq
    %v3022 = vshrl.u32 %v3021, 7
    %v3023 = vsub.s32 %v3020, %v3022
    %v3024 = vrot.slane %v3016, %v3023
    %v3025 = vcombine.high %v3024, %v3024
    %v3026 = vlaneseq
    %v3027 = vshrl.u32 %v3026, 7
    %v3028 = vsub.s32 0, %v3027
    %v3029 = vrot.slane %v3024, %v3028
    %v3030 = vlaneseq
    %v3031 = vshrl.u32 %v3030, 7
    %v3032 = vsub.s32 1, %v3031
    %v3033 = vrot.slane %v3024, %v3032
    %v3034 = vlaneseq
    %v3035 = vshrl.u32 %v3034, 7
    %v3036 = vsub.s32 0, %v3035
    %v3037 = vrot.slane %v3025, %v3036
    %v3038 = vlaneseq
    %v3039 = vshrl.u32 %v3038, 7
    %v3040 = vsub.s32 1, %v3039
    %v3041 = vrot.slane %v3025, %v3040
    %3046 = vrot.lane.b32.xlu0 %v1761, 79
    %v3047 = vpop.permute.xlu0 %3046
    %3048 = vrot.lane.b32.xlu0 %v1769, 79
    %v3049 = vpop.permute.xlu0 %3048
    %3050 = vrot.lane.b32.xlu0 %v1768, 79
    %v3051 = vpop.permute.xlu0 %3050
    %3052 = vrot.lane.b32.xlu0 %v1777, 79
    %v3053 = vpop.permute.xlu0 %3052
    %3054 = vrot.lane.b32.xlu0 %v1785, 79
    %v3055 = vpop.permute.xlu0 %3054
    %3056 = vrot.lane.b32.xlu0 %v1784, 79
    %v3057 = vpop.permute.xlu0 %3056
    %vm3058 = vcmask 646144
    %v3059 = vsel %vm3058, %v3047, %v3049
    %v3060 = vsel %vm3058, %v3049, %v3051
    %v3061 = vsel %vm3058, %v3053, %v3055
    %v3062 = vsel %vm3058, %v3055, %v3057
    %v3067 = vmul.f32 %v3029, %v3059
    %v3068 = vmul.f32 %v3033, %v3060
    %v3069 = vmul.f32 %v3037, %v3061
    %v3070 = vmul.f32 %v3041, %v3062
    %v3071 = vadd.f32 %v3011, %v3067
    %v3072 = vadd.f32 %v3012, %v3068
    %v3073 = vadd.f32 %v3013, %v3069
    %v3074 = vadd.f32 %v3014, %v3070
    %s3075 = scalar_lea.vmem [#allocation7], 188
    %v3076 = vld [vmem:[%s3075] sm:$0xf]
    %v3079 = vunpack.c.l.s4 1966171168
    %v3080 = vunpack.c.0.s8 %v3079
    %v3081 = vlaneseq
    %v3082 = vshrl.u32 %v3081, 7
    %v3083 = vsub.s32 %v3080, %v3082
    %v3084 = vrot.slane %v3076, %v3083
    %v3085 = vcombine.high %v3084, %v3084
    %v3086 = vlaneseq
    %v3087 = vshrl.u32 %v3086, 7
    %v3088 = vsub.s32 0, %v3087
    %v3089 = vrot.slane %v3084, %v3088
    %v3090 = vlaneseq
    %v3091 = vshrl.u32 %v3090, 7
    %v3092 = vsub.s32 1, %v3091
    %v3093 = vrot.slane %v3084, %v3092
    %v3094 = vlaneseq
    %v3095 = vshrl.u32 %v3094, 7
    %v3096 = vsub.s32 0, %v3095
    %v3097 = vrot.slane %v3085, %v3096
    %v3098 = vlaneseq
    %v3099 = vshrl.u32 %v3098, 7
    %v3100 = vsub.s32 1, %v3099
    %v3101 = vrot.slane %v3085, %v3100
    %3106 = vrot.lane.b32.xlu0 %v1761, 78
    %v3107 = vpop.permute.xlu0 %3106
    %3108 = vrot.lane.b32.xlu0 %v1769, 78
    %v3109 = vpop.permute.xlu0 %3108
    %3110 = vrot.lane.b32.xlu0 %v1768, 78
    %v3111 = vpop.permute.xlu0 %3110
    %3112 = vrot.lane.b32.xlu0 %v1777, 78
    %v3113 = vpop.permute.xlu0 %3112
    %3114 = vrot.lane.b32.xlu0 %v1785, 78
    %v3115 = vpop.permute.xlu0 %3114
    %3116 = vrot.lane.b32.xlu0 %v1784, 78
    %v3117 = vpop.permute.xlu0 %3116
    %vm3118 = vcmask 637952
    %v3119 = vsel %vm3118, %v3107, %v3109
    %v3120 = vsel %vm3118, %v3109, %v3111
    %v3121 = vsel %vm3118, %v3113, %v3115
    %v3122 = vsel %vm3118, %v3115, %v3117
    %v3127 = vmul.f32 %v3089, %v3119
    %v3128 = vmul.f32 %v3093, %v3120
    %v3129 = vmul.f32 %v3097, %v3121
    %v3130 = vmul.f32 %v3101, %v3122
    %v3131 = vadd.f32 %v3071, %v3127
    %v3132 = vadd.f32 %v3072, %v3128
    %v3133 = vadd.f32 %v3073, %v3129
    %v3134 = vadd.f32 %v3074, %v3130
    %s3135 = scalar_lea.vmem [#allocation7], 192
    %v3136 = vld [vmem:[%s3135] sm:$0xf]
    %v3139 = vunpack.c.l.s4 1966171168
    %v3140 = vunpack.c.0.s8 %v3139
    %v3141 = vlaneseq
    %v3142 = vshrl.u32 %v3141, 7
    %v3143 = vsub.s32 %v3140, %v3142
    %v3144 = vrot.slane %v3136, %v3143
    %v3145 = vcombine.high %v3144, %v3144
    %v3146 = vlaneseq
    %v3147 = vshrl.u32 %v3146, 7
    %v3148 = vsub.s32 0, %v3147
    %v3149 = vrot.slane %v3144, %v3148
    %v3150 = vlaneseq
    %v3151 = vshrl.u32 %v3150, 7
    %v3152 = vsub.s32 1, %v3151
    %v3153 = vrot.slane %v3144, %v3152
    %v3154 = vlaneseq
    %v3155 = vshrl.u32 %v3154, 7
    %v3156 = vsub.s32 0, %v3155
    %v3157 = vrot.slane %v3145, %v3156
    %v3158 = vlaneseq
    %v3159 = vshrl.u32 %v3158, 7
    %v3160 = vsub.s32 1, %v3159
    %v3161 = vrot.slane %v3145, %v3160
    %3166 = vrot.lane.b32.xlu0 %v1761, 77
    %v3167 = vpop.permute.xlu0 %3166
    %3168 = vrot.lane.b32.xlu0 %v1769, 77
    %v3169 = vpop.permute.xlu0 %3168
    %3170 = vrot.lane.b32.xlu0 %v1768, 77
    %v3171 = vpop.permute.xlu0 %3170
    %3172 = vrot.lane.b32.xlu0 %v1777, 77
    %v3173 = vpop.permute.xlu0 %3172
    %3174 = vrot.lane.b32.xlu0 %v1785, 77
    %v3175 = vpop.permute.xlu0 %3174
    %3176 = vrot.lane.b32.xlu0 %v1784, 77
    %v3177 = vpop.permute.xlu0 %3176
    %vm3178 = vcmask 629760
    %v3179 = vsel %vm3178, %v3167, %v3169
    %v3180 = vsel %vm3178, %v3169, %v3171
    %v3181 = vsel %vm3178, %v3173, %v3175
    %v3182 = vsel %vm3178, %v3175, %v3177
    %v3187 = vmul.f32 %v3149, %v3179
    %v3188 = vmul.f32 %v3153, %v3180
    %v3189 = vmul.f32 %v3157, %v3181
    %v3190 = vmul.f32 %v3161, %v3182
    %v3191 = vadd.f32 %v3131, %v3187
    %v3192 = vadd.f32 %v3132, %v3188
    %v3193 = vadd.f32 %v3133, %v3189
    %v3194 = vadd.f32 %v3134, %v3190
    %v3195 = vadd.f32 %v3191, %v3193
    %v3196 = vadd.f32 %v3192, %v3194
    %s3197 = sld [smem:[#allocation3]]
    %v3198 = vstv %s3197
    %v3199 = vadd.f32 %v3195, %v3198
    %v3200 = vadd.f32 %v3196, %v3198
    %v3201 = vxor.u32 %v3199, 2147483648
    %v3202 = vxor.u32 %v3200, 2147483648
    %v3203 = vmul.f32 %v3201, 1.442695
    %v3204 = vpow.pop %v3203
    %v3205 = vmul.f32 %v3202, 1.442695
    %v3206 = vpow.pop %v3205
    %v3207 = vadd.f32 %v3204, 1.0
    %v3208 = vadd.f32 %v3206, 1.0
    %v3209 = vrcp.pop %v3207
    %v3210 = vmul.f32 1.0, %v3209
    %v3211 = vrcp.pop %v3208
    %v3212 = vmul.f32 1.0, %v3211
    %v3213 = vld [vmem:[#allocation4] sm:$0xff]
    %v3214 = vld [vmem:[#allocation4 + $0x8] sm:$0xff]
    %v3217 = vcombine.low %v3210, %v3212
    %v3219 = vunpack.c.l.s4 1966171168
    %v3220 = vunpack.c.0.s8 %v3219
    %v3221 = vlaneseq
    %v3222 = vshrl.u32 %v3221, 7
    %v3223 = vsub.s32 %v3220, %v3222
    %v3224 = vrot.slane %v3217, %v3223
    %v3225 = vcombine.high %v3224, %v3224
    %v3227 = vunpack.c.l.s4 1966171168
    %v3228 = vunpack.c.0.s8 %v3227
    %v3229 = vlaneseq
    %v3230 = vshrl.u32 %v3229, 7
    %v3231 = vsub.s32 %v3228, %v3230
    %v3232 = vrot.slane %v3224, %v3231
    %v3234 = vunpack.c.l.s4 1966171168
    %v3235 = vunpack.c.0.s8 %v3234
    %v3236 = vlaneseq
    %v3237 = vshrl.u32 %v3236, 7
    %v3238 = vsub.s32 %v3235, %v3237
    %v3239 = vrot.slane %v3225, %v3238
    %v3240 = vlaneseq
    %v3241 = vshrl.u32 %v3240, 7
    %v3242 = vsub.s32 0, %v3241
    %v3243 = vrot.slane %v3232, %v3242
    %v3244 = vlaneseq
    %v3245 = vshrl.u32 %v3244, 7
    %v3246 = vsub.s32 1, %v3245
    %v3247 = vrot.slane %v3232, %v3246
    %v3248 = vlaneseq
    %v3249 = vshrl.u32 %v3248, 7
    %v3250 = vsub.s32 0, %v3249
    %v3251 = vrot.slane %v3239, %v3250
    %v3252 = vlaneseq
    %v3253 = vshrl.u32 %v3252, 7
    %v3254 = vsub.s32 1, %v3253
    %v3255 = vrot.slane %v3239, %v3254
    %v3256 = vcombine.low %v3243, %v3247
    %v3257 = vcombine.low %v3251, %v3255
    %v3260 = vmul.f32 %v3213, %v3256
    %v3261 = vmul.f32 %v3214, %v3257
    %3262 = vst [vmem:[#allocation9] sm:$0xff] %v3260
    %3263 = vst [vmem:[#allocation9 + $0x8] sm:$0xff] %v3261
    // Predicated region
    $region22: #{tpu_custom_call.1} parent=1 // pred_check
      _
    $region23: #{tpu_custom_call.1} parent=1 // pred_check_branch
      %3265 = sbr.rel (0) target = $region25
    $region24: #{tpu_custom_call.1} parent=1 // pred_region
      %s3267 = ssub.s32 256, 256
      %3268 = vsyncadd [#allocation6], %s3267
      %s3269 = sshll.u32 [#allocation9], 4
      %s3270 = int_to_ptr.vmem [resolvable:$true] %s3269
      %3275 = dma.vmem_to_hbm [thread:$0]  %s3270, 256, %s3, [#allocation6], 128, 128, 8
    $region25: #{tpu_custom_call.1} parent=1 // pred_fallthru
      _
    // Predicated region
    $region26: #{tpu_custom_call.1} parent=1 // pred_check
      _
    $region27: #{tpu_custom_call.1} parent=1 // pred_check_branch
      %3277 = sbr.rel (0) target = $region29
    $region28: #{tpu_custom_call.1} parent=1 // pred_region
      %3278 = dma.done [#allocation6], 256
    $region29: #{tpu_custom_call.1} parent=1 // pred_fallthru
      _
    %3279 = vsyncpa [#allocation5], 1
    %3280 = vsyncpa [#allocation8], 1
    %3281 = vsyncpa [#allocation6], 1

</llo_original>
